<compile_context>
chip_gen: v5e
topology: v5e:2x2
jax: 0.10.0
libtpu: 0.0.40
codegen_flags: <defaults>
</compile_context>

<pallas_src>
import functools

import jax
import jax.numpy as jnp
from jax.experimental import pallas as pl
from jax.experimental.pallas import tpu as pltpu

N_CLASSES = 10
LATENT_DIM = 100
IMAGE_W = 28
IMAGE_H = 28
OUT_DIM = IMAGE_W * IMAGE_H          # 784
IN_DIM = LATENT_DIM + N_CLASSES      # 110
H1, H2, H3 = 256, 512, 1024
LEAKY_SLOPE = 0.01                   # PyTorch nn.LeakyReLU() default
OUT_PAD = 896                        # 784 -> 7*128 (lane-dense output stores)


def _round_up(x, m):
    return (x + m - 1) // m * m


def _leaky_relu(x):
    return jnp.where(x > 0, x, LEAKY_SLOPE * x)


def generator_mlp_kernel(z_ref, t_ref,
                         w1_ref,
                         w2_ref, b2_ref,
                         w3_ref, b3_ref,
                         w4_ref, b4_ref,
                         o_ref):
    """Fused 4-layer MLP: 3x (Linear + LeakyReLU) + (Linear + Tanh).

    Layer 1 is split: z @ W1[:100] runs on the MXU (bf16 weights, f32 acc),
    and t = embedding[y] @ W1[100:] + b1 (folded outside, exact f32) is the
    additive per-row term.  All other layers: bf16 matmul, f32 epilogue.
    """
    z = z_ref[...].astype(jnp.bfloat16)                                 # [bb, 100]

    h = jnp.dot(z, w1_ref[...], preferred_element_type=jnp.float32) + t_ref[...]
    h = _leaky_relu(h)

    h = jnp.dot(h.astype(jnp.bfloat16), w2_ref[...],
                preferred_element_type=jnp.float32) + b2_ref[...]
    h = _leaky_relu(h)

    h = jnp.dot(h.astype(jnp.bfloat16), w3_ref[...],
                preferred_element_type=jnp.float32) + b3_ref[...]
    h = _leaky_relu(h)

    h = jnp.dot(h.astype(jnp.bfloat16), w4_ref[...],
                preferred_element_type=jnp.float32) + b4_ref[...]
    o_ref[...] = jnp.tanh(h).astype(o_ref.dtype)                        # [bb, 896]


def prepare_params(params):
    """One-time conversion of PyTorch-layout params into kernel-ready form.

    Do this once (or cache it); `generator_forward` then touches only these
    small, already-cast/padded arrays per call.
    """
    w1 = params["w1"]                                     # [110, 256] f32
    # Exact fold of embedding + layer-1 bias into a [10, 256] f32 table.
    fold_table = params["embedding"] @ w1[LATENT_DIM:, :] + params["b1"]
    return {
        "fold_table": fold_table.astype(jnp.float32),                    # [10, 256]
        "w1z": w1[:LATENT_DIM, :].astype(jnp.bfloat16),                  # [100, 256]
        "w2": params["w2"].astype(jnp.bfloat16),                         # [256, 512]
        "b2": params["b2"].astype(jnp.float32),                          # [1, 512]
        "w3": params["w3"].astype(jnp.bfloat16),                         # [512, 1024]
        "b3": params["b3"].astype(jnp.float32),                          # [1, 1024]
        "w4": jnp.pad(params["w4"],
                      ((0, 0), (0, OUT_PAD - OUT_DIM))).astype(jnp.bfloat16),  # [1024, 896]
        "b4": jnp.pad(params["b4"],
                      ((0, 0), (0, OUT_PAD - OUT_DIM))).astype(jnp.float32),   # [1, 896]
    }


@functools.partial(jax.jit, static_argnames=("block_b",))
def generator_forward(z, y, prepared, block_b=512):
    """z: [B, 100] float32, y: [B] int32 labels. Returns [B, 784] float32."""
    B = z.shape[0]

    # Folded layer-1 term: tiny [10, 256] table gather (replaces embedding
    # lookup + concat + pad-to-128 of the old input path).
    t = jnp.take(prepared["fold_table"], y, axis=0)       # [B, 256] f32

    # Batch tile: as large as the batch allows (single grid step for small B,
    # 512-row tiles for large B).  No tile-halving — regression on 1-TC chips.
    bb = min(block_b, _round_up(B, 8))
    Bp = _round_up(B, bb)
    grid = (Bp // bb,)

    if Bp != B:                                            # zero-pad ragged batch
        z = jnp.pad(z, ((0, Bp - B), (0, 0)))
        t = jnp.pad(t, ((0, Bp - B), (0, 0)))

    w1z = prepared["w1z"]
    w2, b2 = prepared["w2"], prepared["b2"]
    w3, b3 = prepared["w3"], prepared["b3"]
    w4, b4 = prepared["w4"], prepared["b4"]

    # Full-array (un-tiled) specs for weights/biases: resident in VMEM,
    # constant index_map -> no per-step re-DMA.
    def full_spec(shape):
        return pl.BlockSpec(shape, lambda i: (0, 0))

    flops = 2 * Bp * (LATENT_DIM * H1 + H1 * H2 + H2 * H3 + H3 * OUT_PAD)
    bytes_accessed = (
        z.size * 4 + t.size * 4
        + (w1z.size + w2.size + w3.size + w4.size) * 2
        + (b2.size + b3.size + b4.size) * 4
        + Bp * OUT_PAD * 4)
    cost = pl.CostEstimate(flops=flops,
                           transcendentals=Bp * OUT_PAD,
                           bytes_accessed=bytes_accessed)

    out = pl.pallas_call(
        generator_mlp_kernel,
        out_shape=jax.ShapeDtypeStruct((Bp, OUT_PAD), jnp.float32),
        grid_spec=pltpu.PrefetchScalarGridSpec(
            num_scalar_prefetch=0,
            grid=grid,
            in_specs=[
                pl.BlockSpec((bb, LATENT_DIM), lambda i: (i, 0)),  # z tile
                pl.BlockSpec((bb, H1), lambda i: (i, 0)),          # folded L1 term tile
                full_spec(w1z.shape),
                full_spec(w2.shape), full_spec(b2.shape),
                full_spec(w3.shape), full_spec(b3.shape),
                full_spec(w4.shape), full_spec(b4.shape),
            ],
            out_specs=pl.BlockSpec((bb, OUT_PAD), lambda i: (i, 0)),
        ),
        compiler_params=pltpu.CompilerParams(
            dimension_semantics=("parallel",),
            vmem_limit_bytes=48 << 20,       # ~10 MiB actually used; safe on v7x too
        ),
        cost_estimate=cost,
    )(z, t, w1z, w2, b2, w3, b3, w4, b4)

    return out[:B, :OUT_DIM]


def init_params(key):
    """Deterministic synthetic parameter init (shapes match the PyTorch module)."""
    keys = jax.random.split(key, 9)

    def linear(kw, fan_in, fan_out):
        # Uniform(-1/sqrt(fan_in), 1/sqrt(fan_in)) like PyTorch's default.
        bound = 1.0 / jnp.sqrt(fan_in)
        kw_w, kw_b = jax.random.split(kw)
        w = jax.random.uniform(kw_w, (fan_in, fan_out), jnp.float32, -bound, bound)
        b = jax.random.uniform(kw_b, (1, fan_out), jnp.float32, -bound, bound)
        return w, b

    emb = jax.random.normal(keys[0], (N_CLASSES, N_CLASSES), jnp.float32)
    w1, b1 = linear(keys[1], IN_DIM, H1)
    w2, b2 = linear(keys[2], H1, H2)
    w3, b3 = linear(keys[3], H2, H3)
    w4, b4 = linear(keys[4], H3, OUT_DIM)
    return {"embedding": emb,
            "w1": w1, "b1": b1, "w2": w2, "b2": b2,
            "w3": w3, "b3": b3, "w4": w4, "b4": b4}


def _reference_forward_f32(z, y, params):
    """Pure-JAX f32 reference (matches PyTorch semantics exactly)."""
    x = jnp.concatenate([z, jnp.take(params["embedding"], y, axis=0)], axis=-1)
    h = jax.nn.leaky_relu(x @ params["w1"] + params["b1"], LEAKY_SLOPE)
    h = jax.nn.leaky_relu(h @ params["w2"] + params["b2"], LEAKY_SLOPE)
    h = jax.nn.leaky_relu(h @ params["w3"] + params["b3"], LEAKY_SLOPE)
    return jnp.tanh(h @ params["w4"] + params["b4"])


def _reference_forward_kernel_recipe(z, y, params):
    """Pure-JAX reference mirroring the kernel numerics exactly:
    folded f32 embedding term + bf16-weight / f32-accumulate matmuls."""
    t = jnp.take(params["embedding"] @ params["w1"][LATENT_DIM:, :] + params["b1"],
                 y, axis=0)

    def mm(a, w):
        return jnp.dot(a.astype(jnp.bfloat16), w.astype(jnp.bfloat16),
                       preferred_element_type=jnp.float32)

    h = jax.nn.leaky_relu(mm(z, params["w1"][:LATENT_DIM, :]) + t, LEAKY_SLOPE)
    h = jax.nn.leaky_relu(mm(h, params["w2"]) + params["b2"], LEAKY_SLOPE)
    h = jax.nn.leaky_relu(mm(h, params["w3"]) + params["b3"], LEAKY_SLOPE)
    return jnp.tanh(mm(h, params["w4"]) + params["b4"])


if __name__ == "__main__":
    key = jax.random.PRNGKey(0)
    k_params, k_z, k_y = jax.random.split(key, 3)

    batch = 8
    params = init_params(k_params)
    prepared = prepare_params(params)          # one-time weight prep (cached)

    z = jax.random.normal(k_z, (batch, LATENT_DIM), jnp.float32)
    y = jax.random.randint(k_y, (batch,), 0, N_CLASSES, jnp.int32)

    out = generator_forward(z, y, prepared)
    out = jax.block_until_ready(out)
    assert out.shape == (batch, OUT_DIM), out.shape

    # Tight check against a reference that uses the identical numeric recipe.
    ref_k = _reference_forward_kernel_recipe(z, y, params)
    err_k = float(jnp.max(jnp.abs(out - ref_k)))
    assert jnp.allclose(out, ref_k, atol=2e-3, rtol=2e-3), err_k

    # Loose sanity check against the full-f32 PyTorch-equivalent math.
    ref_f32 = _reference_forward_f32(z, y, params)
    err_f32 = float(jnp.max(jnp.abs(out - ref_f32)))
    assert jnp.allclose(out, ref_f32, atol=1e-1, rtol=1e-1), err_f32

    print("KERNEL_OK")
</pallas_src>

<mosaic_0001>
module attributes {stable_mosaic.version = 11 : i64} {
  func.func @generator_mlp_kernel(%arg0: i32, %arg1: memref<8x100xf32, #tpu.memory_space<vmem>>, %arg2: memref<8x256xf32, #tpu.memory_space<vmem>>, %arg3: memref<100x256xbf16, #tpu.memory_space<vmem>>, %arg4: memref<256x512xbf16, #tpu.memory_space<vmem>>, %arg5: memref<1x512xf32, #tpu.memory_space<vmem>>, %arg6: memref<512x1024xbf16, #tpu.memory_space<vmem>>, %arg7: memref<1x1024xf32, #tpu.memory_space<vmem>>, %arg8: memref<1024x896xbf16, #tpu.memory_space<vmem>>, %arg9: memref<1x896xf32, #tpu.memory_space<vmem>>, %arg10: memref<8x896xf32, #tpu.memory_space<vmem>>) attributes {dimension_semantics = [#tpu.dimension_semantics<parallel>], iteration_bounds = array<i64: 1>, scalar_prefetch = 0 : i64, scratch_operands = 0 : i64, tpu.core_type = #tpu.core_type<tc>, window_params = [{transform_indices = @transform_0, window_bounds = array<i64: 8, 100>}, {transform_indices = @transform_1, window_bounds = array<i64: 8, 256>}, {pipeline_mode = #tpu.pipeline_mode<synchronous>, transform_indices = @transform_2, window_bounds = array<i64: 100, 256>}, {pipeline_mode = #tpu.pipeline_mode<synchronous>, transform_indices = @transform_3, window_bounds = array<i64: 256, 512>}, {pipeline_mode = #tpu.pipeline_mode<synchronous>, transform_indices = @transform_4, window_bounds = array<i64: 1, 512>}, {pipeline_mode = #tpu.pipeline_mode<synchronous>, transform_indices = @transform_5, window_bounds = array<i64: 512, 1024>}, {pipeline_mode = #tpu.pipeline_mode<synchronous>, transform_indices = @transform_6, window_bounds = array<i64: 1, 1024>}, {pipeline_mode = #tpu.pipeline_mode<synchronous>, transform_indices = @transform_7, window_bounds = array<i64: 1024, 896>}, {pipeline_mode = #tpu.pipeline_mode<synchronous>, transform_indices = @transform_8, window_bounds = array<i64: 1, 896>}, {transform_indices = @transform_9, window_bounds = array<i64: 8, 896>}]} {
    %c0 = arith.constant 0 : index
    %c0_0 = arith.constant 0 : index
    %0 = vector.load %arg1[%c0, %c0_0] : memref<8x100xf32, #tpu.memory_space<vmem>>, vector<8x100xf32>
    %1 = arith.truncf %0 : vector<8x100xf32> to vector<8x100xbf16>
    %c0_1 = arith.constant 0 : index
    %c0_2 = arith.constant 0 : index
    %2 = vector.load %arg3[%c0_1, %c0_2] : memref<100x256xbf16, #tpu.memory_space<vmem>>, vector<100x256xbf16>
    %cst = arith.constant dense<0.000000e+00> : vector<8x256xf32>
    %3 = tpu.matmul %1, %2, %cst {dimension_numbers = #tpu.dot_dimension_numbers<[1], [0], [0], [1], [0, 0, 1, 1], [], []>} : vector<8x100xbf16>, vector<100x256xbf16>, vector<8x256xf32> -> vector<8x256xf32>
    %c0_3 = arith.constant 0 : index
    %c0_4 = arith.constant 0 : index
    %4 = vector.load %arg2[%c0_3, %c0_4] : memref<8x256xf32, #tpu.memory_space<vmem>>, vector<8x256xf32>
    %5 = arith.addf %3, %4 : vector<8x256xf32>
    %cst_5 = arith.constant 0.000000e+00 : f32
    %6 = vector.broadcast %cst_5 : f32 to vector<8x256xf32>
    %7 = arith.cmpf ogt, %5, %6 : vector<8x256xf32>
    %cst_6 = arith.constant 0.00999999977 : f32
    %8 = vector.broadcast %cst_6 : f32 to vector<8x256xf32>
    %9 = arith.mulf %8, %5 : vector<8x256xf32>
    %10 = arith.select %7, %5, %9 : vector<8x256xi1>, vector<8x256xf32>
    %11 = arith.truncf %10 : vector<8x256xf32> to vector<8x256xbf16>
    %c0_7 = arith.constant 0 : index
    %c0_8 = arith.constant 0 : index
    %12 = vector.load %arg4[%c0_7, %c0_8] : memref<256x512xbf16, #tpu.memory_space<vmem>>, vector<256x512xbf16>
    %cst_9 = arith.constant dense<0.000000e+00> : vector<8x512xf32>
    %13 = tpu.matmul %11, %12, %cst_9 {dimension_numbers = #tpu.dot_dimension_numbers<[1], [0], [0], [1], [0, 0, 1, 1], [], []>} : vector<8x256xbf16>, vector<256x512xbf16>, vector<8x512xf32> -> vector<8x512xf32>
    %c0_10 = arith.constant 0 : index
    %c0_11 = arith.constant 0 : index
    %14 = vector.load %arg5[%c0_10, %c0_11] : memref<1x512xf32, #tpu.memory_space<vmem>>, vector<1x512xf32>
    %15 = vector.broadcast %14 : vector<1x512xf32> to vector<8x512xf32>
    %16 = arith.addf %13, %15 : vector<8x512xf32>
    %cst_12 = arith.constant 0.000000e+00 : f32
    %17 = vector.broadcast %cst_12 : f32 to vector<8x512xf32>
    %18 = arith.cmpf ogt, %16, %17 : vector<8x512xf32>
    %cst_13 = arith.constant 0.00999999977 : f32
    %19 = vector.broadcast %cst_13 : f32 to vector<8x512xf32>
    %20 = arith.mulf %19, %16 : vector<8x512xf32>
    %21 = arith.select %18, %16, %20 : vector<8x512xi1>, vector<8x512xf32>
    %22 = arith.truncf %21 : vector<8x512xf32> to vector<8x512xbf16>
    %c0_14 = arith.constant 0 : index
    %c0_15 = arith.constant 0 : index
    %23 = vector.load %arg6[%c0_14, %c0_15] : memref<512x1024xbf16, #tpu.memory_space<vmem>>, vector<512x1024xbf16>
    %cst_16 = arith.constant dense<0.000000e+00> : vector<8x1024xf32>
    %24 = tpu.matmul %22, %23, %cst_16 {dimension_numbers = #tpu.dot_dimension_numbers<[1], [0], [0], [1], [0, 0, 1, 1], [], []>} : vector<8x512xbf16>, vector<512x1024xbf16>, vector<8x1024xf32> -> vector<8x1024xf32>
    %c0_17 = arith.constant 0 : index
    %c0_18 = arith.constant 0 : index
    %25 = vector.load %arg7[%c0_17, %c0_18] : memref<1x1024xf32, #tpu.memory_space<vmem>>, vector<1x1024xf32>
    %26 = vector.broadcast %25 : vector<1x1024xf32> to vector<8x1024xf32>
    %27 = arith.addf %24, %26 : vector<8x1024xf32>
    %cst_19 = arith.constant 0.000000e+00 : f32
    %28 = vector.broadcast %cst_19 : f32 to vector<8x1024xf32>
    %29 = arith.cmpf ogt, %27, %28 : vector<8x1024xf32>
    %cst_20 = arith.constant 0.00999999977 : f32
    %30 = vector.broadcast %cst_20 : f32 to vector<8x1024xf32>
    %31 = arith.mulf %30, %27 : vector<8x1024xf32>
    %32 = arith.select %29, %27, %31 : vector<8x1024xi1>, vector<8x1024xf32>
    %33 = arith.truncf %32 : vector<8x1024xf32> to vector<8x1024xbf16>
    %c0_21 = arith.constant 0 : index
    %c0_22 = arith.constant 0 : index
    %34 = vector.load %arg8[%c0_21, %c0_22] : memref<1024x896xbf16, #tpu.memory_space<vmem>>, vector<1024x896xbf16>
    %cst_23 = arith.constant dense<0.000000e+00> : vector<8x896xf32>
    %35 = tpu.matmul %33, %34, %cst_23 {dimension_numbers = #tpu.dot_dimension_numbers<[1], [0], [0], [1], [0, 0, 1, 1], [], []>} : vector<8x1024xbf16>, vector<1024x896xbf16>, vector<8x896xf32> -> vector<8x896xf32>
    %c0_24 = arith.constant 0 : index
    %c0_25 = arith.constant 0 : index
    %36 = vector.load %arg9[%c0_24, %c0_25] : memref<1x896xf32, #tpu.memory_space<vmem>>, vector<1x896xf32>
    %37 = vector.broadcast %36 : vector<1x896xf32> to vector<8x896xf32>
    %38 = arith.addf %35, %37 : vector<8x896xf32>
    %39 = math.tanh %38 : vector<8x896xf32>
    %c0_26 = arith.constant 0 : index
    %c0_27 = arith.constant 0 : index
    %40 = vector.load %arg10[%c0_26, %c0_27] : memref<8x896xf32, #tpu.memory_space<vmem>>, vector<8x896xf32>
    tpu.vector_store %arg10[%c0_26, %c0_27], %39 {strides = array<i32>} : memref<8x896xf32, #tpu.memory_space<vmem>>, vector<8x896xf32>,
    return
  }
  func.func @transform_0(%arg0: i32) -> (i32, i32) {
    %c0_i32 = arith.constant 0 : i32
    %c0_i32_0 = arith.constant 0 : i32
    return %arg0, %c0_i32 : i32, i32
  }
  func.func @transform_1(%arg0: i32) -> (i32, i32) {
    %c0_i32 = arith.constant 0 : i32
    %c0_i32_0 = arith.constant 0 : i32
    return %arg0, %c0_i32 : i32, i32
  }
  func.func @transform_2(%arg0: i32) -> (i32, i32) {
    %c0_i32 = arith.constant 0 : i32
    %c0_i32_0 = arith.constant 0 : i32
    %c0_i32_1 = arith.constant 0 : i32
    return %c0_i32, %c0_i32_0 : i32, i32
  }
  func.func @transform_3(%arg0: i32) -> (i32, i32) {
    %c0_i32 = arith.constant 0 : i32
    %c0_i32_0 = arith.constant 0 : i32
    %c0_i32_1 = arith.constant 0 : i32
    return %c0_i32, %c0_i32_0 : i32, i32
  }
  func.func @transform_4(%arg0: i32) -> (i32, i32) {
    %c0_i32 = arith.constant 0 : i32
    %c0_i32_0 = arith.constant 0 : i32
    %c0_i32_1 = arith.constant 0 : i32
    return %c0_i32, %c0_i32_0 : i32, i32
  }
  func.func @transform_5(%arg0: i32) -> (i32, i32) {
    %c0_i32 = arith.constant 0 : i32
    %c0_i32_0 = arith.constant 0 : i32
    %c0_i32_1 = arith.constant 0 : i32
    return %c0_i32, %c0_i32_0 : i32, i32
  }
  func.func @transform_6(%arg0: i32) -> (i32, i32) {
    %c0_i32 = arith.constant 0 : i32
    %c0_i32_0 = arith.constant 0 : i32
    %c0_i32_1 = arith.constant 0 : i32
    return %c0_i32, %c0_i32_0 : i32, i32
  }
  func.func @transform_7(%arg0: i32) -> (i32, i32) {
    %c0_i32 = arith.constant 0 : i32
    %c0_i32_0 = arith.constant 0 : i32
    %c0_i32_1 = arith.constant 0 : i32
    return %c0_i32, %c0_i32_0 : i32, i32
  }
  func.func @transform_8(%arg0: i32) -> (i32, i32) {
    %c0_i32 = arith.constant 0 : i32
    %c0_i32_0 = arith.constant 0 : i32
    %c0_i32_1 = arith.constant 0 : i32
    return %c0_i32, %c0_i32_0 : i32, i32
  }
  func.func @transform_9(%arg0: i32) -> (i32, i32) {
    %c0_i32 = arith.constant 0 : i32
    %c0_i32_0 = arith.constant 0 : i32
    return %arg0, %c0_i32 : i32, i32
  }
}

</mosaic_0001>

<llo_original>
// kernel: generator_forward.1
$region0: #{generator_forward.1}
  #allocation0 [shape = 'u32[]', space=smem, size = 0x4, offset = 0x4, fixed_abs, tag = 'smem constant byte address 0x4 - core index']
  #allocation1 [shape = 'u32[72,128]{1,0:T(1,128)}', space=vmem, size = 0x9000, scoped, tag = 'internal scratch']
  %s0 = inlined_call_operand.hbm [shape: f32[8,100], index: 0, kind: input, shape index: {}]
  %s1 = inlined_call_operand.vmem [shape: f32[8,256], index: 1, kind: input, shape index: {}]
  %s2 = inlined_call_operand.hbm [shape: bf16[100,256], index: 2, kind: input, shape index: {}]
  %s3 = inlined_call_operand.hbm [shape: bf16[256,512], index: 3, kind: input, shape index: {}]
  %s4 = inlined_call_operand.hbm [shape: f32[1,512], index: 4, kind: input, shape index: {}]
  %s5 = inlined_call_operand.hbm [shape: bf16[512,1024], index: 5, kind: input, shape index: {}]
  %s6 = inlined_call_operand.hbm [shape: f32[1,1024], index: 6, kind: input, shape index: {}]
  %s7 = inlined_call_operand.hbm [shape: bf16[1024,896], index: 7, kind: input, shape index: {}]
  %s8 = inlined_call_operand.hbm [shape: f32[1,896], index: 8, kind: input, shape index: {}]
  %s9 = inlined_call_operand.hbm [shape: f32[8,896], index: 9, kind: output, shape index: {}]
  %s10 = sld [smem:[#allocation0]]
  $region78: #{generator_forward.1} parent=0
    _
  %s12 = ssub.s32 1, %s10
  %s13 = scalar_select 0, %s12, %s10
  $region1: #{generator_forward.1} parent=0
    #allocation2 [shape = 'u8[4096]{0}', space=vmem, size = 0x1000, scoped, tag = 'input window, operand 0, single buffered']
    #allocation3 [shape = 's32[1]{0}', space=sflag, size = 0x4, scoped, tag = 'scoped memory for generator_forward.1']
    #allocation4 [shape = 's32[1]{0}', space=sflag, size = 0x4, scoped, tag = 'scoped memory for generator_forward.1']
    #allocation5 [shape = 'u8[53248]{0}', space=vmem, size = 0xd000, scoped, tag = 'input window, operand 2, single buffered']
    #allocation6 [shape = 's32[1]{0}', space=sflag, size = 0x4, scoped, tag = 'scoped memory for generator_forward.1']
    #allocation7 [shape = 'u8[262144]{0}', space=vmem, size = 0x40000, scoped, tag = 'input window, operand 3, single buffered']
    #allocation8 [shape = 'u8[2048]{0}', space=vmem, size = 0x800, scoped, tag = 'input window, operand 4, single buffered']
    #allocation9 [shape = 's32[1]{0}', space=sflag, size = 0x4, scoped, tag = 'scoped memory for generator_forward.1']
    #allocation10 [shape = 'u8[1048576]{0}', space=vmem, size = 0x100000, scoped, tag = 'input window, operand 5, single buffered']
    #allocation11 [shape = 'u8[4096]{0}', space=vmem, size = 0x1000, scoped, tag = 'input window, operand 6, single buffered']
    #allocation12 [shape = 's32[1]{0}', space=sflag, size = 0x4, scoped, tag = 'scoped memory for generator_forward.1']
    #allocation13 [shape = 'u8[1835008]{0}', space=vmem, size = 0x1c0000, scoped, tag = 'input window, operand 7, single buffered']
    #allocation14 [shape = 'u8[3584]{0}', space=vmem, size = 0x1000, scoped, tag = 'input window, operand 8, single buffered']
    #allocation15 [shape = 's32[1]{0}', space=sflag, size = 0x4, scoped, tag = 'scoped memory for generator_forward.1']
    #allocation16 [shape = 'u8[28672]{0}', space=vmem, size = 0x7000, scoped, tag = 'output window, operand 0, single buffered']
    %14 = vsyncpa [#allocation3], 0
    %15 = vsyncpa [#allocation6], 0
    %16 = vsyncpa [#allocation9], 0
    %17 = vsyncpa [#allocation12], 0
    %18 = vsyncpa [#allocation15], 0
    %19 = vsyncpa [#allocation4], 0
    // Predicated region
    $region2: #{generator_forward.1} parent=1 // pred_check
      _
    $region3: #{generator_forward.1} parent=1 // pred_check_branch
      %21 = sbr.rel (0) target = $region5
    $region4: #{generator_forward.1} parent=1 // pred_region
      %23 = vsyncadd [#allocation3], 0
      %s25 = sshll.u32 %s0, 4
      %s26 = int_to_ptr.hbm [resolvable:$true] %s25
      %s27 = sshll.u32 [#allocation2], 4
      %s28 = int_to_ptr.vmem [resolvable:$true] %s27
      %30 = dma.hbm_to_vmem [thread:$0]  %s26, 128, %s28, [#allocation3]
    $region5: #{generator_forward.1} parent=1 // pred_fallthru
      _
    // Predicated region
    $region6: #{generator_forward.1} parent=1 // pred_check
      _
    $region7: #{generator_forward.1} parent=1 // pred_check_branch
      %32 = sbr.rel (0) target = $region9
    $region8: #{generator_forward.1} parent=1 // pred_region
      _
    $region9: #{generator_forward.1} parent=1 // pred_fallthru
      _
    // Predicated region
    $region10: #{generator_forward.1} parent=1 // pred_check
      _
    $region11: #{generator_forward.1} parent=1 // pred_check_branch
      %34 = sbr.rel (0) target = $region13
    $region12: #{generator_forward.1} parent=1 // pred_region
      %36 = vsyncadd [#allocation6], 0
      %s37 = sshll.u32 %s2, 4
      %s38 = int_to_ptr.hbm [resolvable:$true] %s37
      %s39 = sshll.u32 [#allocation5], 4
      %s40 = int_to_ptr.vmem [resolvable:$true] %s39
      %45 = dma.hbm_to_vmem [thread:$0]  %s38, 1664, %s40, [#allocation6], 128, 128, 8
    $region13: #{generator_forward.1} parent=1 // pred_fallthru
      _
    // Predicated region
    $region14: #{generator_forward.1} parent=1 // pred_check
      _
    $region15: #{generator_forward.1} parent=1 // pred_check_branch
      %47 = sbr.rel (0) target = $region17
    $region16: #{generator_forward.1} parent=1 // pred_region
      %49 = vsyncadd [#allocation6], 0
      %s50 = sshll.u32 %s3, 4
      %s51 = int_to_ptr.hbm [resolvable:$true] %s50
      %s52 = sshll.u32 [#allocation7], 4
      %s53 = int_to_ptr.vmem [resolvable:$true] %s52
      %58 = dma.hbm_to_vmem [thread:$0]  %s51, 8192, %s53, [#allocation6], 256, 256, 16
    $region17: #{generator_forward.1} parent=1 // pred_fallthru
      _
    // Predicated region
    $region18: #{generator_forward.1} parent=1 // pred_check
      _
    $region19: #{generator_forward.1} parent=1 // pred_check_branch
      %60 = sbr.rel (0) target = $region21
    $region20: #{generator_forward.1} parent=1 // pred_region
      %62 = vsyncadd [#allocation9], 0
      %s64 = sshll.u32 %s4, 4
      %s65 = int_to_ptr.hbm [resolvable:$true] %s64
      %s66 = sshll.u32 [#allocation8], 4
      %s67 = int_to_ptr.vmem [resolvable:$true] %s66
      %69 = dma.hbm_to_vmem [thread:$0]  %s65, 64, %s67, [#allocation9]
    $region21: #{generator_forward.1} parent=1 // pred_fallthru
      _
    // Predicated region
    $region22: #{generator_forward.1} parent=1 // pred_check
      _
    $region23: #{generator_forward.1} parent=1 // pred_check_branch
      %71 = sbr.rel (0) target = $region25
    $region24: #{generator_forward.1} parent=1 // pred_region
      %73 = vsyncadd [#allocation9], 0
      %s74 = sshll.u32 %s5, 4
      %s75 = int_to_ptr.hbm [resolvable:$true] %s74
      %s76 = sshll.u32 [#allocation10], 4
      %s77 = int_to_ptr.vmem [resolvable:$true] %s76
      %82 = dma.hbm_to_vmem [thread:$0]  %s75, 32768, %s77, [#allocation9], 512, 512, 32
    $region25: #{generator_forward.1} parent=1 // pred_fallthru
      _
    // Predicated region
    $region26: #{generator_forward.1} parent=1 // pred_check
      _
    $region27: #{generator_forward.1} parent=1 // pred_check_branch
      %84 = sbr.rel (0) target = $region29
    $region28: #{generator_forward.1} parent=1 // pred_region
      %86 = vsyncadd [#allocation12], 0
      %s88 = sshll.u32 %s6, 4
      %s89 = int_to_ptr.hbm [resolvable:$true] %s88
      %s90 = sshll.u32 [#allocation11], 4
      %s91 = int_to_ptr.vmem [resolvable:$true] %s90
      %93 = dma.hbm_to_vmem [thread:$0]  %s89, 128, %s91, [#allocation12]
    $region29: #{generator_forward.1} parent=1 // pred_fallthru
      _
    // Predicated region
    $region30: #{generator_forward.1} parent=1 // pred_check
      _
    $region31: #{generator_forward.1} parent=1 // pred_check_branch
      %95 = sbr.rel (0) target = $region33
    $region32: #{generator_forward.1} parent=1 // pred_region
      %97 = vsyncadd [#allocation12], 0
      %s98 = sshll.u32 %s7, 4
      %s99 = int_to_ptr.hbm [resolvable:$true] %s98
      %s100 = sshll.u32 [#allocation13], 4
      %s101 = int_to_ptr.vmem [resolvable:$true] %s100
      %106 = dma.hbm_to_vmem [thread:$0]  %s99, 57344, %s101, [#allocation12], 448, 448, 28
    $region33: #{generator_forward.1} parent=1 // pred_fallthru
      _
    // Predicated region
    $region34: #{generator_forward.1} parent=1 // pred_check
      _
    $region35: #{generator_forward.1} parent=1 // pred_check_branch
      %108 = sbr.rel (0) target = $region37
    $region36: #{generator_forward.1} parent=1 // pred_region
      %110 = vsyncadd [#allocation15], 0
      %s112 = sshll.u32 %s8, 4
      %s113 = int_to_ptr.hbm [resolvable:$true] %s112
      %s114 = sshll.u32 [#allocation14], 4
      %s115 = int_to_ptr.vmem [resolvable:$true] %s114
      %117 = dma.hbm_to_vmem [thread:$0]  %s113, 112, %s115, [#allocation15]
    $region37: #{generator_forward.1} parent=1 // pred_fallthru
      _
    // Predicated region
    $region38: #{generator_forward.1} parent=1 // pred_check
      _
    $region39: #{generator_forward.1} parent=1 // pred_check_branch
      %119 = sbr.rel (0) target = $region41
    $region40: #{generator_forward.1} parent=1 // pred_region
      %121 = dma.done [#allocation3], 128
    $region41: #{generator_forward.1} parent=1 // pred_fallthru
      _
    // Predicated region
    $region42: #{generator_forward.1} parent=1 // pred_check
      _
    $region43: #{generator_forward.1} parent=1 // pred_check_branch
      %123 = sbr.rel (0) target = $region45
    $region44: #{generator_forward.1} parent=1 // pred_region
      %125 = dma.done [#allocation6], 1664
    $region45: #{generator_forward.1} parent=1 // pred_fallthru
      _
    // Predicated region
    $region46: #{generator_forward.1} parent=1 // pred_check
      _
    $region47: #{generator_forward.1} parent=1 // pred_check_branch
      %127 = sbr.rel (0) target = $region49
    $region48: #{generator_forward.1} parent=1 // pred_region
      %129 = dma.done [#allocation6], 8192
    $region49: #{generator_forward.1} parent=1 // pred_fallthru
      _
    // Predicated region
    $region50: #{generator_forward.1} parent=1 // pred_check
      _
    $region51: #{generator_forward.1} parent=1 // pred_check_branch
      %131 = sbr.rel (0) target = $region53
    $region52: #{generator_forward.1} parent=1 // pred_region
      %133 = dma.done [#allocation9], 64
    $region53: #{generator_forward.1} parent=1 // pred_fallthru
      _
    // Predicated region
    $region54: #{generator_forward.1} parent=1 // pred_check
      _
    $region55: #{generator_forward.1} parent=1 // pred_check_branch
      %135 = sbr.rel (0) target = $region57
    $region56: #{generator_forward.1} parent=1 // pred_region
      %137 = dma.done [#allocation9], 32768
    $region57: #{generator_forward.1} parent=1 // pred_fallthru
      _
    // Predicated region
    $region58: #{generator_forward.1} parent=1 // pred_check
      _
    $region59: #{generator_forward.1} parent=1 // pred_check_branch
      %139 = sbr.rel (0) target = $region61
    $region60: #{generator_forward.1} parent=1 // pred_region
      %141 = dma.done [#allocation12], 128
    $region61: #{generator_forward.1} parent=1 // pred_fallthru
      _
    // Predicated region
    $region62: #{generator_forward.1} parent=1 // pred_check
      _
    $region63: #{generator_forward.1} parent=1 // pred_check_branch
      %143 = sbr.rel (0) target = $region65
    $region64: #{generator_forward.1} parent=1 // pred_region
      %145 = dma.done [#allocation12], 57344
    $region65: #{generator_forward.1} parent=1 // pred_fallthru
      _
    // Predicated region
    $region66: #{generator_forward.1} parent=1 // pred_check
      _
    $region67: #{generator_forward.1} parent=1 // pred_check_branch
      %147 = sbr.rel (0) target = $region69
    $region68: #{generator_forward.1} parent=1 // pred_region
      %149 = dma.done [#allocation15], 112
    $region69: #{generator_forward.1} parent=1 // pred_fallthru
      _
    %v151 = vld [vmem:[#allocation2] sm:$0xff]
    %v152 = vpack.c.bf16 %v151, %v151
    %v153 = vld [vmem:[#allocation5] sm:$0xff]
    %v154 = vld [vmem:[#allocation5 + $0x8] sm:$0xff]
    %v155 = vld [vmem:[#allocation5 + $0x10] sm:$0xff]
    %v156 = vld [vmem:[#allocation5 + $0x18] sm:$0xff]
    %v157 = vld [vmem:[#allocation5 + $0x20] sm:$0xff]
    %v158 = vld [vmem:[#allocation5 + $0x28] sm:$0xff]
    %v159 = vld [vmem:[#allocation5 + $0x30] sm:$0xff]
    %v160 = vld [vmem:[#allocation5 + $0x38] sm:$0xff]
    %v161 = vld [vmem:[#allocation5 + $0x40] sm:$0xff]
    %v162 = vld [vmem:[#allocation5 + $0x48] sm:$0xff]
    %v163 = vld [vmem:[#allocation5 + $0x50] sm:$0xff]
    %v164 = vld [vmem:[#allocation5 + $0x58] sm:$0xff]
    %v165 = vld [vmem:[#allocation5 + $0x60] sm:$0x33]
    %v166 = vld [vmem:[%s1] sm:$0xff]
    %v167 = vld [vmem:[%s1 + $0x8] sm:$0xff]
    %v181 = vunpack.c.l.b16 %v153
    %v182 = vunpack.c.h.b16 %v153
    %v183 = vunpack.c.l.b16 %v154
    %v184 = vunpack.c.h.b16 %v154
    %v185 = vunpack.c.l.b16 %v155
    %v186 = vunpack.c.h.b16 %v155
    %v187 = vunpack.c.l.b16 %v156
    %v188 = vunpack.c.h.b16 %v156
    %v189 = vunpack.c.l.b16 %v157
    %v190 = vunpack.c.h.b16 %v157
    %v191 = vunpack.c.l.b16 %v158
    %v192 = vunpack.c.h.b16 %v158
    %v193 = vunpack.c.l.b16 %v159
    %v194 = vunpack.c.h.b16 %v159
    %v195 = vunpack.c.l.b16 %v160
    %v196 = vunpack.c.h.b16 %v160
    %v197 = vunpack.c.l.b16 %v161
    %v198 = vunpack.c.h.b16 %v161
    %v199 = vunpack.c.l.b16 %v162
    %v200 = vunpack.c.h.b16 %v162
    %v201 = vunpack.c.l.b16 %v163
    %v202 = vunpack.c.h.b16 %v163
    %v203 = vunpack.c.l.b16 %v164
    %v204 = vunpack.c.h.b16 %v164
    %v205 = vunpack.c.l.b16 %v165
    %v206 = vunpack.c.h.b16 %v165
    %v207 = vpack.c.b16 %v183, %v181
    %v208 = vpack.c.b16 %v184, %v182
    %v209 = vpack.c.b16 %v187, %v185
    %v210 = vpack.c.b16 %v188, %v186
    %v211 = vpack.c.b16 %v191, %v189
    %v212 = vpack.c.b16 %v192, %v190
    %v213 = vpack.c.b16 %v195, %v193
    %v214 = vpack.c.b16 %v196, %v194
    %v215 = vpack.c.b16 %v199, %v197
    %v216 = vpack.c.b16 %v200, %v198
    %v217 = vpack.c.b16 %v203, %v201
    %v218 = vpack.c.b16 %v204, %v202
    %v219 = vpack.c.b16 %v205, %v205
    %v220 = vpack.c.b16 %v206, %v206
    %vm233 = vcmask 818176
    %v235 = vsel %vm233, %v152, 0
    %vm237 = vcmask 1041408
    %v239 = vsel %vm237, %v219, 0
    %v242 = vsel %vm237, %v220, 0
    %244 = vmatpush.bf16.msra.mxu0 0
    %245 = vmatpush.bf16.msra.mxu0 %v239
    %246 = vmatpush.bf16.msra.mxu0 %v217
    %247 = vmatpush.bf16.msra.mxu0 %v215
    %248 = vmatpush.bf16.msra.mxu0 %v213
    %249 = vmatpush.bf16.msra.mxu0 %v211
    %250 = vmatpush.bf16.msra.mxu0 %v209
    %251 = vmatpush.bf16.msra.mxu0 %v207
    %252 = vmatmul.bf16.gmra.mxu0 %v235
    %v253 = vpop.f32.mrf.mxu0
    %v254 = vadd.f32 %v166, %v253
    %v255 = vpop.f32.mrf.mxu0
    %256 = vdwg.mxu0
    %257 = vmatpush.bf16.msra.mxu0 0
    %258 = vmatpush.bf16.msra.mxu0 %v242
    %259 = vmatpush.bf16.msra.mxu0 %v218
    %260 = vmatpush.bf16.msra.mxu0 %v216
    %261 = vmatpush.bf16.msra.mxu0 %v214
    %262 = vmatpush.bf16.msra.mxu0 %v212
    %263 = vmatpush.bf16.msra.mxu0 %v210
    %264 = vmatpush.bf16.msra.mxu0 %v208
    %265 = vmatmul.bf16.gmra.mxu0 %v235
    %v266 = vpop.f32.mrf.mxu0
    %v267 = vadd.f32 %v167, %v266
    %v268 = vpop.f32.mrf.mxu0
    %269 = vdwg.mxu0
    %vm270 = vcmp.gt.f32.partialorder %v254, 0.0
    %vm271 = vcmp.gt.f32.partialorder %v267, 0.0
    %v272 = vmul.f32 %v254, 0.01
    %v273 = vmul.f32 %v267, 0.01
    %v274 = vsel %vm270, %v254, %v272
    %v275 = vsel %vm271, %v267, %v273
    %v276 = vpack.c.bf16 %v274, %v274
    %v277 = vpack.c.bf16 %v275, %v275
    %v278 = vld [vmem:[#allocation7] sm:$0xff]
    %v279 = vld [vmem:[#allocation7 + $0x8] sm:$0xff]
    %v280 = vld [vmem:[#allocation7 + $0x10] sm:$0xff]
    %v281 = vld [vmem:[#allocation7 + $0x18] sm:$0xff]
    %v282 = vld [vmem:[#allocation7 + $0x20] sm:$0xff]
    %v283 = vld [vmem:[#allocation7 + $0x28] sm:$0xff]
    %v284 = vld [vmem:[#allocation7 + $0x30] sm:$0xff]
    %v285 = vld [vmem:[#allocation7 + $0x38] sm:$0xff]
    %v286 = vld [vmem:[#allocation7 + $0x40] sm:$0xff]
    %v287 = vld [vmem:[#allocation7 + $0x48] sm:$0xff]
    %v288 = vld [vmem:[#allocation7 + $0x50] sm:$0xff]
    %v289 = vld [vmem:[#allocation7 + $0x58] sm:$0xff]
    %v290 = vld [vmem:[#allocation7 + $0x60] sm:$0xff]
    %v291 = vld [vmem:[#allocation7 + $0x68] sm:$0xff]
    %v292 = vld [vmem:[#allocation7 + $0x70] sm:$0xff]
    %v293 = vld [vmem:[#allocation7 + $0x78] sm:$0xff]
    %v294 = vld [vmem:[#allocation7 + $0x80] sm:$0xff]
    %v295 = vld [vmem:[#allocation7 + $0x88] sm:$0xff]
    %v296 = vld [vmem:[#allocation7 + $0x90] sm:$0xff]
    %v297 = vld [vmem:[#allocation7 + $0x98] sm:$0xff]
    %v298 = vld [vmem:[#allocation7 + $0xa0] sm:$0xff]
    %v299 = vld [vmem:[#allocation7 + $0xa8] sm:$0xff]
    %v300 = vld [vmem:[#allocation7 + $0xb0] sm:$0xff]
    %v301 = vld [vmem:[#allocation7 + $0xb8] sm:$0xff]
    %v302 = vld [vmem:[#allocation7 + $0xc0] sm:$0xff]
    %v303 = vld [vmem:[#allocation7 + $0xc8] sm:$0xff]
    %v304 = vld [vmem:[#allocation7 + $0xd0] sm:$0xff]
    %v305 = vld [vmem:[#allocation7 + $0xd8] sm:$0xff]
    %v306 = vld [vmem:[#allocation7 + $0xe0] sm:$0xff]
    %v307 = vld [vmem:[#allocation7 + $0xe8] sm:$0xff]
    %v308 = vld [vmem:[#allocation7 + $0xf0] sm:$0xff]
    %v309 = vld [vmem:[#allocation7 + $0xf8] sm:$0xff]
    %v310 = vld [vmem:[#allocation7 + $0x100] sm:$0xff]
    %v311 = vld [vmem:[#allocation7 + $0x108] sm:$0xff]
    %v312 = vld [vmem:[#allocation7 + $0x110] sm:$0xff]
    %v313 = vld [vmem:[#allocation7 + $0x118] sm:$0xff]
    %v314 = vld [vmem:[#allocation7 + $0x120] sm:$0xff]
    %v315 = vld [vmem:[#allocation7 + $0x128] sm:$0xff]
    %v316 = vld [vmem:[#allocation7 + $0x130] sm:$0xff]
    %v317 = vld [vmem:[#allocation7 + $0x138] sm:$0xff]
    %v318 = vld [vmem:[#allocation7 + $0x140] sm:$0xff]
    %v319 = vld [vmem:[#allocation7 + $0x148] sm:$0xff]
    %v320 = vld [vmem:[#allocation7 + $0x150] sm:$0xff]
    %v321 = vld [vmem:[#allocation7 + $0x158] sm:$0xff]
    %v322 = vld [vmem:[#allocation7 + $0x160] sm:$0xff]
    %v323 = vld [vmem:[#allocation7 + $0x168] sm:$0xff]
    %v324 = vld [vmem:[#allocation7 + $0x170] sm:$0xff]
    %v325 = vld [vmem:[#allocation7 + $0x178] sm:$0xff]
    %v326 = vld [vmem:[#allocation7 + $0x180] sm:$0xff]
    %v327 = vld [vmem:[#allocation7 + $0x188] sm:$0xff]
    %v328 = vld [vmem:[#allocation7 + $0x190] sm:$0xff]
    %v329 = vld [vmem:[#allocation7 + $0x198] sm:$0xff]
    %v330 = vld [vmem:[#allocation7 + $0x1a0] sm:$0xff]
    %v331 = vld [vmem:[#allocation7 + $0x1a8] sm:$0xff]
    %v332 = vld [vmem:[#allocation7 + $0x1b0] sm:$0xff]
    %v333 = vld [vmem:[#allocation7 + $0x1b8] sm:$0xff]
    %v334 = vld [vmem:[#allocation7 + $0x1c0] sm:$0xff]
    %v335 = vld [vmem:[#allocation7 + $0x1c8] sm:$0xff]
    %v336 = vld [vmem:[#allocation7 + $0x1d0] sm:$0xff]
    %v337 = vld [vmem:[#allocation7 + $0x1d8] sm:$0xff]
    %v338 = vld [vmem:[#allocation7 + $0x1e0] sm:$0xff]
    %v339 = vld [vmem:[#allocation7 + $0x1e8] sm:$0xff]
    %v340 = vld [vmem:[#allocation7 + $0x1f0] sm:$0xff]
    %v341 = vld [vmem:[#allocation7 + $0x1f8] sm:$0xff]
    %v342 = vld [vmem:[#allocation8] sm:$0xf]
    %v344 = vperm.slane %v342, 0
    %v345 = vperm.slane %v342, 1
    %v346 = vperm.slane %v342, 2
    %v347 = vperm.slane %v342, 3
    %v416 = vunpack.c.l.b16 %v278
    %v417 = vunpack.c.h.b16 %v278
    %v418 = vunpack.c.l.b16 %v279
    %v419 = vunpack.c.h.b16 %v279
    %v420 = vunpack.c.l.b16 %v280
    %v421 = vunpack.c.h.b16 %v280
    %v422 = vunpack.c.l.b16 %v281
    %v423 = vunpack.c.h.b16 %v281
    %v424 = vunpack.c.l.b16 %v282
    %v425 = vunpack.c.h.b16 %v282
    %v426 = vunpack.c.l.b16 %v283
    %v427 = vunpack.c.h.b16 %v283
    %v428 = vunpack.c.l.b16 %v284
    %v429 = vunpack.c.h.b16 %v284
    %v430 = vunpack.c.l.b16 %v285
    %v431 = vunpack.c.h.b16 %v285
    %v432 = vunpack.c.l.b16 %v286
    %v433 = vunpack.c.h.b16 %v286
    %v434 = vunpack.c.l.b16 %v287
    %v435 = vunpack.c.h.b16 %v287
    %v436 = vunpack.c.l.b16 %v288
    %v437 = vunpack.c.h.b16 %v288
    %v438 = vunpack.c.l.b16 %v289
    %v439 = vunpack.c.h.b16 %v289
    %v440 = vunpack.c.l.b16 %v290
    %v441 = vunpack.c.h.b16 %v290
    %v442 = vunpack.c.l.b16 %v291
    %v443 = vunpack.c.h.b16 %v291
    %v444 = vunpack.c.l.b16 %v292
    %v445 = vunpack.c.h.b16 %v292
    %v446 = vunpack.c.l.b16 %v293
    %v447 = vunpack.c.h.b16 %v293
    %v448 = vunpack.c.l.b16 %v294
    %v449 = vunpack.c.h.b16 %v294
    %v450 = vunpack.c.l.b16 %v295
    %v451 = vunpack.c.h.b16 %v295
    %v452 = vunpack.c.l.b16 %v296
    %v453 = vunpack.c.h.b16 %v296
    %v454 = vunpack.c.l.b16 %v297
    %v455 = vunpack.c.h.b16 %v297
    %v456 = vunpack.c.l.b16 %v298
    %v457 = vunpack.c.h.b16 %v298
    %v458 = vunpack.c.l.b16 %v299
    %v459 = vunpack.c.h.b16 %v299
    %v460 = vunpack.c.l.b16 %v300
    %v461 = vunpack.c.h.b16 %v300
    %v462 = vunpack.c.l.b16 %v301
    %v463 = vunpack.c.h.b16 %v301
    %v464 = vunpack.c.l.b16 %v302
    %v465 = vunpack.c.h.b16 %v302
    %v466 = vunpack.c.l.b16 %v303
    %v467 = vunpack.c.h.b16 %v303
    %v468 = vunpack.c.l.b16 %v304
    %v469 = vunpack.c.h.b16 %v304
    %v470 = vunpack.c.l.b16 %v305
    %v471 = vunpack.c.h.b16 %v305
    %v472 = vunpack.c.l.b16 %v306
    %v473 = vunpack.c.h.b16 %v306
    %v474 = vunpack.c.l.b16 %v307
    %v475 = vunpack.c.h.b16 %v307
    %v476 = vunpack.c.l.b16 %v308
    %v477 = vunpack.c.h.b16 %v308
    %v478 = vunpack.c.l.b16 %v309
    %v479 = vunpack.c.h.b16 %v309
    %v480 = vunpack.c.l.b16 %v310
    %v481 = vunpack.c.h.b16 %v310
    %v482 = vunpack.c.l.b16 %v311
    %v483 = vunpack.c.h.b16 %v311
    %v484 = vunpack.c.l.b16 %v312
    %v485 = vunpack.c.h.b16 %v312
    %v486 = vunpack.c.l.b16 %v313
    %v487 = vunpack.c.h.b16 %v313
    %v488 = vunpack.c.l.b16 %v314
    %v489 = vunpack.c.h.b16 %v314
    %v490 = vunpack.c.l.b16 %v315
    %v491 = vunpack.c.h.b16 %v315
    %v492 = vunpack.c.l.b16 %v316
    %v493 = vunpack.c.h.b16 %v316
    %v494 = vunpack.c.l.b16 %v317
    %v495 = vunpack.c.h.b16 %v317
    %v496 = vunpack.c.l.b16 %v318
    %v497 = vunpack.c.h.b16 %v318
    %v498 = vunpack.c.l.b16 %v319
    %v499 = vunpack.c.h.b16 %v319
    %v500 = vunpack.c.l.b16 %v320
    %v501 = vunpack.c.h.b16 %v320
    %v502 = vunpack.c.l.b16 %v321
    %v503 = vunpack.c.h.b16 %v321
    %v504 = vunpack.c.l.b16 %v322
    %v505 = vunpack.c.h.b16 %v322
    %v506 = vunpack.c.l.b16 %v323
    %v507 = vunpack.c.h.b16 %v323
    %v508 = vunpack.c.l.b16 %v324
    %v509 = vunpack.c.h.b16 %v324
    %v510 = vunpack.c.l.b16 %v325
    %v511 = vunpack.c.h.b16 %v325
    %v512 = vunpack.c.l.b16 %v326
    %v513 = vunpack.c.h.b16 %v326
    %v514 = vunpack.c.l.b16 %v327
    %v515 = vunpack.c.h.b16 %v327
    %v516 = vunpack.c.l.b16 %v328
    %v517 = vunpack.c.h.b16 %v328
    %v518 = vunpack.c.l.b16 %v329
    %v519 = vunpack.c.h.b16 %v329
    %v520 = vunpack.c.l.b16 %v330
    %v521 = vunpack.c.h.b16 %v330
    %v522 = vunpack.c.l.b16 %v331
    %v523 = vunpack.c.h.b16 %v331
    %v524 = vunpack.c.l.b16 %v332
    %v525 = vunpack.c.h.b16 %v332
    %v526 = vunpack.c.l.b16 %v333
    %v527 = vunpack.c.h.b16 %v333
    %v528 = vunpack.c.l.b16 %v334
    %v529 = vunpack.c.h.b16 %v334
    %v530 = vunpack.c.l.b16 %v335
    %v531 = vunpack.c.h.b16 %v335
    %v532 = vunpack.c.l.b16 %v336
    %v533 = vunpack.c.h.b16 %v336
    %v534 = vunpack.c.l.b16 %v337
    %v535 = vunpack.c.h.b16 %v337
    %v536 = vunpack.c.l.b16 %v338
    %v537 = vunpack.c.h.b16 %v338
    %v538 = vunpack.c.l.b16 %v339
    %v539 = vunpack.c.h.b16 %v339
    %v540 = vunpack.c.l.b16 %v340
    %v541 = vunpack.c.h.b16 %v340
    %v542 = vunpack.c.l.b16 %v341
    %v543 = vunpack.c.h.b16 %v341
    %v544 = vpack.c.b16 %v420, %v416
    %v545 = vpack.c.b16 %v421, %v417
    %v546 = vpack.c.b16 %v422, %v418
    %v547 = vpack.c.b16 %v423, %v419
    %v548 = vpack.c.b16 %v428, %v424
    %v549 = vpack.c.b16 %v429, %v425
    %v550 = vpack.c.b16 %v430, %v426
    %v551 = vpack.c.b16 %v431, %v427
    %v552 = vpack.c.b16 %v436, %v432
    %v553 = vpack.c.b16 %v437, %v433
    %v554 = vpack.c.b16 %v438, %v434
    %v555 = vpack.c.b16 %v439, %v435
    %v556 = vpack.c.b16 %v444, %v440
    %v557 = vpack.c.b16 %v445, %v441
    %v558 = vpack.c.b16 %v446, %v442
    %v559 = vpack.c.b16 %v447, %v443
    %v560 = vpack.c.b16 %v452, %v448
    %v561 = vpack.c.b16 %v453, %v449
    %v562 = vpack.c.b16 %v454, %v450
    %v563 = vpack.c.b16 %v455, %v451
    %v564 = vpack.c.b16 %v460, %v456
    %v565 = vpack.c.b16 %v461, %v457
    %v566 = vpack.c.b16 %v462, %v458
    %v567 = vpack.c.b16 %v463, %v459
    %v568 = vpack.c.b16 %v468, %v464
    %v569 = vpack.c.b16 %v469, %v465
    %v570 = vpack.c.b16 %v470, %v466
    %v571 = vpack.c.b16 %v471, %v467
    %v572 = vpack.c.b16 %v476, %v472
    %v573 = vpack.c.b16 %v477, %v473
    %v574 = vpack.c.b16 %v478, %v474
    %v575 = vpack.c.b16 %v479, %v475
    %v576 = vpack.c.b16 %v484, %v480
    %v577 = vpack.c.b16 %v485, %v481
    %v578 = vpack.c.b16 %v486, %v482
    %v579 = vpack.c.b16 %v487, %v483
    %v580 = vpack.c.b16 %v492, %v488
    %v581 = vpack.c.b16 %v493, %v489
    %v582 = vpack.c.b16 %v494, %v490
    %v583 = vpack.c.b16 %v495, %v491
    %v584 = vpack.c.b16 %v500, %v496
    %v585 = vpack.c.b16 %v501, %v497
    %v586 = vpack.c.b16 %v502, %v498
    %v587 = vpack.c.b16 %v503, %v499
    %v588 = vpack.c.b16 %v508, %v504
    %v589 = vpack.c.b16 %v509, %v505
    %v590 = vpack.c.b16 %v510, %v506
    %v591 = vpack.c.b16 %v511, %v507
    %v592 = vpack.c.b16 %v516, %v512
    %v593 = vpack.c.b16 %v517, %v513
    %v594 = vpack.c.b16 %v518, %v514
    %v595 = vpack.c.b16 %v519, %v515
    %v596 = vpack.c.b16 %v524, %v520
    %v597 = vpack.c.b16 %v525, %v521
    %v598 = vpack.c.b16 %v526, %v522
    %v599 = vpack.c.b16 %v527, %v523
    %v600 = vpack.c.b16 %v532, %v528
    %v601 = vpack.c.b16 %v533, %v529
    %v602 = vpack.c.b16 %v534, %v530
    %v603 = vpack.c.b16 %v535, %v531
    %v604 = vpack.c.b16 %v540, %v536
    %v605 = vpack.c.b16 %v541, %v537
    %v606 = vpack.c.b16 %v542, %v538
    %v607 = vpack.c.b16 %v543, %v539
    %672 = vmatpush.bf16.msra.mxu0 %v572
    %673 = vmatpush.bf16.msra.mxu0 %v568
    %674 = vmatpush.bf16.msra.mxu0 %v564
    %675 = vmatpush.bf16.msra.mxu0 %v560
    %676 = vmatpush.bf16.msra.mxu0 %v556
    %677 = vmatpush.bf16.msra.mxu0 %v552
    %678 = vmatpush.bf16.msra.mxu0 %v548
    %679 = vmatpush.bf16.msra.mxu0 %v544
    %680 = vmatmul.bf16.gmra.mxu0 %v276
    %v681 = vpop.f32.mrf.mxu0
    %v682 = vadd.f32 %v344, %v681
    %v683 = vpop.f32.mrf.mxu0
    %684 = vdwg.mxu0
    %685 = vmatpush.bf16.msra.mxu0 %v604
    %686 = vmatpush.bf16.msra.mxu0 %v600
    %687 = vmatpush.bf16.msra.mxu0 %v596
    %688 = vmatpush.bf16.msra.mxu0 %v592
    %689 = vmatpush.bf16.msra.mxu0 %v588
    %690 = vmatpush.bf16.msra.mxu0 %v584
    %691 = vmatpush.bf16.msra.mxu0 %v580
    %692 = vmatpush.bf16.msra.mxu0 %v576
    %693 = vmatmul.bf16.gmra.mxu0 %v277
    %v694 = vpop.f32.mrf.mxu0
    %v695 = vadd.f32 %v682, %v694
    %v696 = vpop.f32.mrf.mxu0
    %697 = vdwg.mxu0
    %698 = vmatpush.bf16.msra.mxu0 %v573
    %699 = vmatpush.bf16.msra.mxu0 %v569
    %700 = vmatpush.bf16.msra.mxu0 %v565
    %701 = vmatpush.bf16.msra.mxu0 %v561
    %702 = vmatpush.bf16.msra.mxu0 %v557
    %703 = vmatpush.bf16.msra.mxu0 %v553
    %704 = vmatpush.bf16.msra.mxu0 %v549
    %705 = vmatpush.bf16.msra.mxu0 %v545
    %706 = vmatmul.bf16.gmra.mxu0 %v276
    %v707 = vpop.f32.mrf.mxu0
    %v708 = vadd.f32 %v345, %v707
    %v709 = vpop.f32.mrf.mxu0
    %710 = vdwg.mxu0
    %711 = vmatpush.bf16.msra.mxu0 %v605
    %712 = vmatpush.bf16.msra.mxu0 %v601
    %713 = vmatpush.bf16.msra.mxu0 %v597
    %714 = vmatpush.bf16.msra.mxu0 %v593
    %715 = vmatpush.bf16.msra.mxu0 %v589
    %716 = vmatpush.bf16.msra.mxu0 %v585
    %717 = vmatpush.bf16.msra.mxu0 %v581
    %718 = vmatpush.bf16.msra.mxu0 %v577
    %719 = vmatmul.bf16.gmra.mxu0 %v277
    %v720 = vpop.f32.mrf.mxu0
    %v721 = vadd.f32 %v708, %v720
    %v722 = vpop.f32.mrf.mxu0
    %723 = vdwg.mxu0
    %724 = vmatpush.bf16.msra.mxu0 %v574
    %725 = vmatpush.bf16.msra.mxu0 %v570
    %726 = vmatpush.bf16.msra.mxu0 %v566
    %727 = vmatpush.bf16.msra.mxu0 %v562
    %728 = vmatpush.bf16.msra.mxu0 %v558
    %729 = vmatpush.bf16.msra.mxu0 %v554
    %730 = vmatpush.bf16.msra.mxu0 %v550
    %731 = vmatpush.bf16.msra.mxu0 %v546
    %732 = vmatmul.bf16.gmra.mxu0 %v276
    %v733 = vpop.f32.mrf.mxu0
    %v734 = vadd.f32 %v346, %v733
    %v735 = vpop.f32.mrf.mxu0
    %736 = vdwg.mxu0
    %737 = vmatpush.bf16.msra.mxu0 %v606
    %738 = vmatpush.bf16.msra.mxu0 %v602
    %739 = vmatpush.bf16.msra.mxu0 %v598
    %740 = vmatpush.bf16.msra.mxu0 %v594
    %741 = vmatpush.bf16.msra.mxu0 %v590
    %742 = vmatpush.bf16.msra.mxu0 %v586
    %743 = vmatpush.bf16.msra.mxu0 %v582
    %744 = vmatpush.bf16.msra.mxu0 %v578
    %745 = vmatmul.bf16.gmra.mxu0 %v277
    %v746 = vpop.f32.mrf.mxu0
    %v747 = vadd.f32 %v734, %v746
    %v748 = vpop.f32.mrf.mxu0
    %749 = vdwg.mxu0
    %750 = vmatpush.bf16.msra.mxu0 %v575
    %751 = vmatpush.bf16.msra.mxu0 %v571
    %752 = vmatpush.bf16.msra.mxu0 %v567
    %753 = vmatpush.bf16.msra.mxu0 %v563
    %754 = vmatpush.bf16.msra.mxu0 %v559
    %755 = vmatpush.bf16.msra.mxu0 %v555
    %756 = vmatpush.bf16.msra.mxu0 %v551
    %757 = vmatpush.bf16.msra.mxu0 %v547
    %758 = vmatmul.bf16.gmra.mxu0 %v276
    %v759 = vpop.f32.mrf.mxu0
    %v760 = vadd.f32 %v347, %v759
    %v761 = vpop.f32.mrf.mxu0
    %762 = vdwg.mxu0
    %763 = vmatpush.bf16.msra.mxu0 %v607
    %764 = vmatpush.bf16.msra.mxu0 %v603
    %765 = vmatpush.bf16.msra.mxu0 %v599
    %766 = vmatpush.bf16.msra.mxu0 %v595
    %767 = vmatpush.bf16.msra.mxu0 %v591
    %768 = vmatpush.bf16.msra.mxu0 %v587
    %769 = vmatpush.bf16.msra.mxu0 %v583
    %770 = vmatpush.bf16.msra.mxu0 %v579
    %771 = vmatmul.bf16.gmra.mxu0 %v277
    %v772 = vpop.f32.mrf.mxu0
    %v773 = vadd.f32 %v760, %v772
    %v774 = vpop.f32.mrf.mxu0
    %775 = vdwg.mxu0
    %vm776 = vcmp.gt.f32.partialorder %v695, 0.0
    %vm777 = vcmp.gt.f32.partialorder %v721, 0.0
    %vm778 = vcmp.gt.f32.partialorder %v747, 0.0
    %vm779 = vcmp.gt.f32.partialorder %v773, 0.0
    %v780 = vmul.f32 %v695, 0.01
    %v781 = vmul.f32 %v721, 0.01
    %v782 = vmul.f32 %v747, 0.01
    %v783 = vmul.f32 %v773, 0.01
    %v784 = vsel %vm776, %v695, %v780
    %v785 = vsel %vm777, %v721, %v781
    %v786 = vsel %vm778, %v747, %v782
    %v787 = vsel %vm779, %v773, %v783
    %v788 = vpack.c.bf16 %v784, %v784
    %v789 = vpack.c.bf16 %v785, %v785
    %v790 = vpack.c.bf16 %v786, %v786
    %v791 = vpack.c.bf16 %v787, %v787
    %v792 = vld [vmem:[#allocation10] sm:$0xff]
    %v793 = vld [vmem:[#allocation10 + $0x8] sm:$0xff]
    %v794 = vld [vmem:[#allocation10 + $0x10] sm:$0xff]
    %v795 = vld [vmem:[#allocation10 + $0x18] sm:$0xff]
    %v796 = vld [vmem:[#allocation10 + $0x20] sm:$0xff]
    %v797 = vld [vmem:[#allocation10 + $0x28] sm:$0xff]
    %v798 = vld [vmem:[#allocation10 + $0x30] sm:$0xff]
    %v799 = vld [vmem:[#allocation10 + $0x38] sm:$0xff]
    %v800 = vld [vmem:[#allocation10 + $0x40] sm:$0xff]
    %v801 = vld [vmem:[#allocation10 + $0x48] sm:$0xff]
    %v802 = vld [vmem:[#allocation10 + $0x50] sm:$0xff]
    %v803 = vld [vmem:[#allocation10 + $0x58] sm:$0xff]
    %v804 = vld [vmem:[#allocation10 + $0x60] sm:$0xff]
    %v805 = vld [vmem:[#allocation10 + $0x68] sm:$0xff]
    %v806 = vld [vmem:[#allocation10 + $0x70] sm:$0xff]
    %v807 = vld [vmem:[#allocation10 + $0x78] sm:$0xff]
    %v808 = vld [vmem:[#allocation10 + $0x80] sm:$0xff]
    %v809 = vld [vmem:[#allocation10 + $0x88] sm:$0xff]
    %v810 = vld [vmem:[#allocation10 + $0x90] sm:$0xff]
    %v811 = vld [vmem:[#allocation10 + $0x98] sm:$0xff]
    %v812 = vld [vmem:[#allocation10 + $0xa0] sm:$0xff]
    %v813 = vld [vmem:[#allocation10 + $0xa8] sm:$0xff]
    %v814 = vld [vmem:[#allocation10 + $0xb0] sm:$0xff]
    %v815 = vld [vmem:[#allocation10 + $0xb8] sm:$0xff]
    %v816 = vld [vmem:[#allocation10 + $0xc0] sm:$0xff]
    %v817 = vld [vmem:[#allocation10 + $0xc8] sm:$0xff]
    %v818 = vld [vmem:[#allocation10 + $0xd0] sm:$0xff]
    %v819 = vld [vmem:[#allocation10 + $0xd8] sm:$0xff]
    %v820 = vld [vmem:[#allocation10 + $0xe0] sm:$0xff]
    %v821 = vld [vmem:[#allocation10 + $0xe8] sm:$0xff]
    %v822 = vld [vmem:[#allocation10 + $0xf0] sm:$0xff]
    %v823 = vld [vmem:[#allocation10 + $0xf8] sm:$0xff]
    %v824 = vld [vmem:[#allocation10 + $0x100] sm:$0xff]
    %v825 = vld [vmem:[#allocation10 + $0x108] sm:$0xff]
    %v826 = vld [vmem:[#allocation10 + $0x110] sm:$0xff]
    %v827 = vld [vmem:[#allocation10 + $0x118] sm:$0xff]
    %v828 = vld [vmem:[#allocation10 + $0x120] sm:$0xff]
    %v829 = vld [vmem:[#allocation10 + $0x128] sm:$0xff]
    %v830 = vld [vmem:[#allocation10 + $0x130] sm:$0xff]
    %v831 = vld [vmem:[#allocation10 + $0x138] sm:$0xff]
    %v832 = vld [vmem:[#allocation10 + $0x140] sm:$0xff]
    %v833 = vld [vmem:[#allocation10 + $0x148] sm:$0xff]
    %v834 = vld [vmem:[#allocation10 + $0x150] sm:$0xff]
    %v835 = vld [vmem:[#allocation10 + $0x158] sm:$0xff]
    %v836 = vld [vmem:[#allocation10 + $0x160] sm:$0xff]
    %v837 = vld [vmem:[#allocation10 + $0x168] sm:$0xff]
    %v838 = vld [vmem:[#allocation10 + $0x170] sm:$0xff]
    %v839 = vld [vmem:[#allocation10 + $0x178] sm:$0xff]
    %v840 = vld [vmem:[#allocation10 + $0x180] sm:$0xff]
    %v841 = vld [vmem:[#allocation10 + $0x188] sm:$0xff]
    %v842 = vld [vmem:[#allocation10 + $0x190] sm:$0xff]
    %v843 = vld [vmem:[#allocation10 + $0x198] sm:$0xff]
    %v844 = vld [vmem:[#allocation10 + $0x1a0] sm:$0xff]
    %v845 = vld [vmem:[#allocation10 + $0x1a8] sm:$0xff]
    %v846 = vld [vmem:[#allocation10 + $0x1b0] sm:$0xff]
    %v847 = vld [vmem:[#allocation10 + $0x1b8] sm:$0xff]
    %v848 = vld [vmem:[#allocation10 + $0x1c0] sm:$0xff]
    %v849 = vld [vmem:[#allocation10 + $0x1c8] sm:$0xff]
    %v850 = vld [vmem:[#allocation10 + $0x1d0] sm:$0xff]
    %v851 = vld [vmem:[#allocation10 + $0x1d8] sm:$0xff]
    %v852 = vld [vmem:[#allocation10 + $0x1e0] sm:$0xff]
    %v853 = vld [vmem:[#allocation10 + $0x1e8] sm:$0xff]
    %v854 = vld [vmem:[#allocation10 + $0x1f0] sm:$0xff]
    %v855 = vld [vmem:[#allocation10 + $0x1f8] sm:$0xff]
    %v856 = vld [vmem:[#allocation10 + $0x200] sm:$0xff]
    %v857 = vld [vmem:[#allocation10 + $0x208] sm:$0xff]
    %v858 = vld [vmem:[#allocation10 + $0x210] sm:$0xff]
    %v859 = vld [vmem:[#allocation10 + $0x218] sm:$0xff]
    %v860 = vld [vmem:[#allocation10 + $0x220] sm:$0xff]
    %v861 = vld [vmem:[#allocation10 + $0x228] sm:$0xff]
    %v862 = vld [vmem:[#allocation10 + $0x230] sm:$0xff]
    %v863 = vld [vmem:[#allocation10 + $0x238] sm:$0xff]
    %v864 = vld [vmem:[#allocation10 + $0x240] sm:$0xff]
    %v865 = vld [vmem:[#allocation10 + $0x248] sm:$0xff]
    %v866 = vld [vmem:[#allocation10 + $0x250] sm:$0xff]
    %v867 = vld [vmem:[#allocation10 + $0x258] sm:$0xff]
    %v868 = vld [vmem:[#allocation10 + $0x260] sm:$0xff]
    %v869 = vld [vmem:[#allocation10 + $0x268] sm:$0xff]
    %v870 = vld [vmem:[#allocation10 + $0x270] sm:$0xff]
    %v871 = vld [vmem:[#allocation10 + $0x278] sm:$0xff]
    %v872 = vld [vmem:[#allocation10 + $0x280] sm:$0xff]
    %v873 = vld [vmem:[#allocation10 + $0x288] sm:$0xff]
    %v874 = vld [vmem:[#allocation10 + $0x290] sm:$0xff]
    %v875 = vld [vmem:[#allocation10 + $0x298] sm:$0xff]
    %v876 = vld [vmem:[#allocation10 + $0x2a0] sm:$0xff]
    %v877 = vld [vmem:[#allocation10 + $0x2a8] sm:$0xff]
    %v878 = vld [vmem:[#allocation10 + $0x2b0] sm:$0xff]
    %v879 = vld [vmem:[#allocation10 + $0x2b8] sm:$0xff]
    %v880 = vld [vmem:[#allocation10 + $0x2c0] sm:$0xff]
    %v881 = vld [vmem:[#allocation10 + $0x2c8] sm:$0xff]
    %v882 = vld [vmem:[#allocation10 + $0x2d0] sm:$0xff]
    %v883 = vld [vmem:[#allocation10 + $0x2d8] sm:$0xff]
    %v884 = vld [vmem:[#allocation10 + $0x2e0] sm:$0xff]
    %v885 = vld [vmem:[#allocation10 + $0x2e8] sm:$0xff]
    %v886 = vld [vmem:[#allocation10 + $0x2f0] sm:$0xff]
    %v887 = vld [vmem:[#allocation10 + $0x2f8] sm:$0xff]
    %v888 = vld [vmem:[#allocation10 + $0x300] sm:$0xff]
    %v889 = vld [vmem:[#allocation10 + $0x308] sm:$0xff]
    %v890 = vld [vmem:[#allocation10 + $0x310] sm:$0xff]
    %v891 = vld [vmem:[#allocation10 + $0x318] sm:$0xff]
    %v892 = vld [vmem:[#allocation10 + $0x320] sm:$0xff]
    %v893 = vld [vmem:[#allocation10 + $0x328] sm:$0xff]
    %v894 = vld [vmem:[#allocation10 + $0x330] sm:$0xff]
    %v895 = vld [vmem:[#allocation10 + $0x338] sm:$0xff]
    %v896 = vld [vmem:[#allocation10 + $0x340] sm:$0xff]
    %v897 = vld [vmem:[#allocation10 + $0x348] sm:$0xff]
    %v898 = vld [vmem:[#allocation10 + $0x350] sm:$0xff]
    %v899 = vld [vmem:[#allocation10 + $0x358] sm:$0xff]
    %v900 = vld [vmem:[#allocation10 + $0x360] sm:$0xff]
    %v901 = vld [vmem:[#allocation10 + $0x368] sm:$0xff]
    %v902 = vld [vmem:[#allocation10 + $0x370] sm:$0xff]
    %v903 = vld [vmem:[#allocation10 + $0x378] sm:$0xff]
    %v904 = vld [vmem:[#allocation10 + $0x380] sm:$0xff]
    %v905 = vld [vmem:[#allocation10 + $0x388] sm:$0xff]
    %v906 = vld [vmem:[#allocation10 + $0x390] sm:$0xff]
    %v907 = vld [vmem:[#allocation10 + $0x398] sm:$0xff]
    %v908 = vld [vmem:[#allocation10 + $0x3a0] sm:$0xff]
    %v909 = vld [vmem:[#allocation10 + $0x3a8] sm:$0xff]
    %v910 = vld [vmem:[#allocation10 + $0x3b0] sm:$0xff]
    %v911 = vld [vmem:[#allocation10 + $0x3b8] sm:$0xff]
    %v912 = vld [vmem:[#allocation10 + $0x3c0] sm:$0xff]
    %v913 = vld [vmem:[#allocation10 + $0x3c8] sm:$0xff]
    %v914 = vld [vmem:[#allocation10 + $0x3d0] sm:$0xff]
    %v915 = vld [vmem:[#allocation10 + $0x3d8] sm:$0xff]
    %v916 = vld [vmem:[#allocation10 + $0x3e0] sm:$0xff]
    %v917 = vld [vmem:[#allocation10 + $0x3e8] sm:$0xff]
    %v918 = vld [vmem:[#allocation10 + $0x3f0] sm:$0xff]
    %v919 = vld [vmem:[#allocation10 + $0x3f8] sm:$0xff]
    %v920 = vld [vmem:[#allocation10 + $0x400] sm:$0xff]
    %v921 = vld [vmem:[#allocation10 + $0x408] sm:$0xff]
    %v922 = vld [vmem:[#allocation10 + $0x410] sm:$0xff]
    %v923 = vld [vmem:[#allocation10 + $0x418] sm:$0xff]
    %v924 = vld [vmem:[#allocation10 + $0x420] sm:$0xff]
    %v925 = vld [vmem:[#allocation10 + $0x428] sm:$0xff]
    %v926 = vld [vmem:[#allocation10 + $0x430] sm:$0xff]
    %v927 = vld [vmem:[#allocation10 + $0x438] sm:$0xff]
    %v928 = vld [vmem:[#allocation10 + $0x440] sm:$0xff]
    %v929 = vld [vmem:[#allocation10 + $0x448] sm:$0xff]
    %v930 = vld [vmem:[#allocation10 + $0x450] sm:$0xff]
    %v931 = vld [vmem:[#allocation10 + $0x458] sm:$0xff]
    %v932 = vld [vmem:[#allocation10 + $0x460] sm:$0xff]
    %v933 = vld [vmem:[#allocation10 + $0x468] sm:$0xff]
    %v934 = vld [vmem:[#allocation10 + $0x470] sm:$0xff]
    %v935 = vld [vmem:[#allocation10 + $0x478] sm:$0xff]
    %v936 = vld [vmem:[#allocation10 + $0x480] sm:$0xff]
    %v937 = vld [vmem:[#allocation10 + $0x488] sm:$0xff]
    %v938 = vld [vmem:[#allocation10 + $0x490] sm:$0xff]
    %v939 = vld [vmem:[#allocation10 + $0x498] sm:$0xff]
    %v940 = vld [vmem:[#allocation10 + $0x4a0] sm:$0xff]
    %v941 = vld [vmem:[#allocation10 + $0x4a8] sm:$0xff]
    %v942 = vld [vmem:[#allocation10 + $0x4b0] sm:$0xff]
    %v943 = vld [vmem:[#allocation10 + $0x4b8] sm:$0xff]
    %v944 = vld [vmem:[#allocation10 + $0x4c0] sm:$0xff]
    %v945 = vld [vmem:[#allocation10 + $0x4c8] sm:$0xff]
    %v946 = vld [vmem:[#allocation10 + $0x4d0] sm:$0xff]
    %v947 = vld [vmem:[#allocation10 + $0x4d8] sm:$0xff]
    %v948 = vld [vmem:[#allocation10 + $0x4e0] sm:$0xff]
    %v949 = vld [vmem:[#allocation10 + $0x4e8] sm:$0xff]
    %v950 = vld [vmem:[#allocation10 + $0x4f0] sm:$0xff]
    %v951 = vld [vmem:[#allocation10 + $0x4f8] sm:$0xff]
    %v952 = vld [vmem:[#allocation10 + $0x500] sm:$0xff]
    %v953 = vld [vmem:[#allocation10 + $0x508] sm:$0xff]
    %v954 = vld [vmem:[#allocation10 + $0x510] sm:$0xff]
    %v955 = vld [vmem:[#allocation10 + $0x518] sm:$0xff]
    %v956 = vld [vmem:[#allocation10 + $0x520] sm:$0xff]
    %v957 = vld [vmem:[#allocation10 + $0x528] sm:$0xff]
    %v958 = vld [vmem:[#allocation10 + $0x530] sm:$0xff]
    %v959 = vld [vmem:[#allocation10 + $0x538] sm:$0xff]
    %v960 = vld [vmem:[#allocation10 + $0x540] sm:$0xff]
    %v961 = vld [vmem:[#allocation10 + $0x548] sm:$0xff]
    %v962 = vld [vmem:[#allocation10 + $0x550] sm:$0xff]
    %v963 = vld [vmem:[#allocation10 + $0x558] sm:$0xff]
    %v964 = vld [vmem:[#allocation10 + $0x560] sm:$0xff]
    %v965 = vld [vmem:[#allocation10 + $0x568] sm:$0xff]
    %v966 = vld [vmem:[#allocation10 + $0x570] sm:$0xff]
    %v967 = vld [vmem:[#allocation10 + $0x578] sm:$0xff]
    %v968 = vld [vmem:[#allocation10 + $0x580] sm:$0xff]
    %v969 = vld [vmem:[#allocation10 + $0x588] sm:$0xff]
    %v970 = vld [vmem:[#allocation10 + $0x590] sm:$0xff]
    %v971 = vld [vmem:[#allocation10 + $0x598] sm:$0xff]
    %v972 = vld [vmem:[#allocation10 + $0x5a0] sm:$0xff]
    %v973 = vld [vmem:[#allocation10 + $0x5a8] sm:$0xff]
    %v974 = vld [vmem:[#allocation10 + $0x5b0] sm:$0xff]
    %v975 = vld [vmem:[#allocation10 + $0x5b8] sm:$0xff]
    %v976 = vld [vmem:[#allocation10 + $0x5c0] sm:$0xff]
    %v977 = vld [vmem:[#allocation10 + $0x5c8] sm:$0xff]
    %v978 = vld [vmem:[#allocation10 + $0x5d0] sm:$0xff]
    %v979 = vld [vmem:[#allocation10 + $0x5d8] sm:$0xff]
    %v980 = vld [vmem:[#allocation10 + $0x5e0] sm:$0xff]
    %v981 = vld [vmem:[#allocation10 + $0x5e8] sm:$0xff]
    %v982 = vld [vmem:[#allocation10 + $0x5f0] sm:$0xff]
    %v983 = vld [vmem:[#allocation10 + $0x5f8] sm:$0xff]
    %v984 = vld [vmem:[#allocation10 + $0x600] sm:$0xff]
    %v985 = vld [vmem:[#allocation10 + $0x608] sm:$0xff]
    %v986 = vld [vmem:[#allocation10 + $0x610] sm:$0xff]
    %v987 = vld [vmem:[#allocation10 + $0x618] sm:$0xff]
    %v988 = vld [vmem:[#allocation10 + $0x620] sm:$0xff]
    %v989 = vld [vmem:[#allocation10 + $0x628] sm:$0xff]
    %v990 = vld [vmem:[#allocation10 + $0x630] sm:$0xff]
    %v991 = vld [vmem:[#allocation10 + $0x638] sm:$0xff]
    %v992 = vld [vmem:[#allocation10 + $0x640] sm:$0xff]
    %v993 = vld [vmem:[#allocation10 + $0x648] sm:$0xff]
    %v994 = vld [vmem:[#allocation10 + $0x650] sm:$0xff]
    %v995 = vld [vmem:[#allocation10 + $0x658] sm:$0xff]
    %v996 = vld [vmem:[#allocation10 + $0x660] sm:$0xff]
    %v997 = vld [vmem:[#allocation10 + $0x668] sm:$0xff]
    %v998 = vld [vmem:[#allocation10 + $0x670] sm:$0xff]
    %v999 = vld [vmem:[#allocation10 + $0x678] sm:$0xff]
    %v1000 = vld [vmem:[#allocation10 + $0x680] sm:$0xff]
    %v1001 = vld [vmem:[#allocation10 + $0x688] sm:$0xff]
    %v1002 = vld [vmem:[#allocation10 + $0x690] sm:$0xff]
    %v1003 = vld [vmem:[#allocation10 + $0x698] sm:$0xff]
    %v1004 = vld [vmem:[#allocation10 + $0x6a0] sm:$0xff]
    %v1005 = vld [vmem:[#allocation10 + $0x6a8] sm:$0xff]
    %v1006 = vld [vmem:[#allocation10 + $0x6b0] sm:$0xff]
    %v1007 = vld [vmem:[#allocation10 + $0x6b8] sm:$0xff]
    %v1008 = vld [vmem:[#allocation10 + $0x6c0] sm:$0xff]
    %v1009 = vld [vmem:[#allocation10 + $0x6c8] sm:$0xff]
    %v1010 = vld [vmem:[#allocation10 + $0x6d0] sm:$0xff]
    %v1011 = vld [vmem:[#allocation10 + $0x6d8] sm:$0xff]
    %v1012 = vld [vmem:[#allocation10 + $0x6e0] sm:$0xff]
    %v1013 = vld [vmem:[#allocation10 + $0x6e8] sm:$0xff]
    %v1014 = vld [vmem:[#allocation10 + $0x6f0] sm:$0xff]
    %v1015 = vld [vmem:[#allocation10 + $0x6f8] sm:$0xff]
    %v1016 = vld [vmem:[#allocation10 + $0x700] sm:$0xff]
    %v1017 = vld [vmem:[#allocation10 + $0x708] sm:$0xff]
    %v1018 = vld [vmem:[#allocation10 + $0x710] sm:$0xff]
    %v1019 = vld [vmem:[#allocation10 + $0x718] sm:$0xff]
    %v1020 = vld [vmem:[#allocation10 + $0x720] sm:$0xff]
    %v1021 = vld [vmem:[#allocation10 + $0x728] sm:$0xff]
    %v1022 = vld [vmem:[#allocation10 + $0x730] sm:$0xff]
    %v1023 = vld [vmem:[#allocation10 + $0x738] sm:$0xff]
    %v1024 = vld [vmem:[#allocation10 + $0x740] sm:$0xff]
    %v1025 = vld [vmem:[#allocation10 + $0x748] sm:$0xff]
    %v1026 = vld [vmem:[#allocation10 + $0x750] sm:$0xff]
    %v1027 = vld [vmem:[#allocation10 + $0x758] sm:$0xff]
    %v1028 = vld [vmem:[#allocation10 + $0x760] sm:$0xff]
    %v1029 = vld [vmem:[#allocation10 + $0x768] sm:$0xff]
    %v1030 = vld [vmem:[#allocation10 + $0x770] sm:$0xff]
    %v1031 = vld [vmem:[#allocation10 + $0x778] sm:$0xff]
    %v1032 = vld [vmem:[#allocation10 + $0x780] sm:$0xff]
    %v1033 = vld [vmem:[#allocation10 + $0x788] sm:$0xff]
    %v1034 = vld [vmem:[#allocation10 + $0x790] sm:$0xff]
    %v1035 = vld [vmem:[#allocation10 + $0x798] sm:$0xff]
    %v1036 = vld [vmem:[#allocation10 + $0x7a0] sm:$0xff]
    %v1037 = vld [vmem:[#allocation10 + $0x7a8] sm:$0xff]
    %v1038 = vld [vmem:[#allocation10 + $0x7b0] sm:$0xff]
    %v1039 = vld [vmem:[#allocation10 + $0x7b8] sm:$0xff]
    %v1040 = vld [vmem:[#allocation10 + $0x7c0] sm:$0xff]
    %v1041 = vld [vmem:[#allocation10 + $0x7c8] sm:$0xff]
    %v1042 = vld [vmem:[#allocation10 + $0x7d0] sm:$0xff]
    %v1043 = vld [vmem:[#allocation10 + $0x7d8] sm:$0xff]
    %v1044 = vld [vmem:[#allocation10 + $0x7e0] sm:$0xff]
    %v1045 = vld [vmem:[#allocation10 + $0x7e8] sm:$0xff]
    %v1046 = vld [vmem:[#allocation10 + $0x7f0] sm:$0xff]
    %v1047 = vld [vmem:[#allocation10 + $0x7f8] sm:$0xff]
    %v1048 = vld [vmem:[#allocation11] sm:$0xff]
    %v1050 = vperm.slane %v1048, 0
    %v1051 = vperm.slane %v1048, 1
    %v1052 = vperm.slane %v1048, 2
    %v1053 = vperm.slane %v1048, 3
    %v1054 = vperm.slane %v1048, 4
    %v1055 = vperm.slane %v1048, 5
    %v1056 = vperm.slane %v1048, 6
    %v1057 = vperm.slane %v1048, 7
    %v1322 = vunpack.c.l.b16 %v792
    %v1323 = vunpack.c.h.b16 %v792
    %v1324 = vunpack.c.l.b16 %v793
    %v1325 = vunpack.c.h.b16 %v793
    %v1326 = vunpack.c.l.b16 %v794
    %v1327 = vunpack.c.h.b16 %v794
    %v1328 = vunpack.c.l.b16 %v795
    %v1329 = vunpack.c.h.b16 %v795
    %v1330 = vunpack.c.l.b16 %v796
    %v1331 = vunpack.c.h.b16 %v796
    %v1332 = vunpack.c.l.b16 %v797
    %v1333 = vunpack.c.h.b16 %v797
    %v1334 = vunpack.c.l.b16 %v798
    %v1335 = vunpack.c.h.b16 %v798
    %v1336 = vunpack.c.l.b16 %v799
    %v1337 = vunpack.c.h.b16 %v799
    %v1338 = vunpack.c.l.b16 %v800
    %v1339 = vunpack.c.h.b16 %v800
    %v1340 = vunpack.c.l.b16 %v801
    %v1341 = vunpack.c.h.b16 %v801
    %v1342 = vunpack.c.l.b16 %v802
    %v1343 = vunpack.c.h.b16 %v802
    %v1344 = vunpack.c.l.b16 %v803
    %v1345 = vunpack.c.h.b16 %v803
    %v1346 = vunpack.c.l.b16 %v804
    %v1347 = vunpack.c.h.b16 %v804
    %v1348 = vunpack.c.l.b16 %v805
    %v1349 = vunpack.c.h.b16 %v805
    %v1350 = vunpack.c.l.b16 %v806
    %v1351 = vunpack.c.h.b16 %v806
    %v1352 = vunpack.c.l.b16 %v807
    %v1353 = vunpack.c.h.b16 %v807
    %v1354 = vunpack.c.l.b16 %v808
    %v1355 = vunpack.c.h.b16 %v808
    %v1356 = vunpack.c.l.b16 %v809
    %v1357 = vunpack.c.h.b16 %v809
    %v1358 = vunpack.c.l.b16 %v810
    %v1359 = vunpack.c.h.b16 %v810
    %v1360 = vunpack.c.l.b16 %v811
    %v1361 = vunpack.c.h.b16 %v811
    %v1362 = vunpack.c.l.b16 %v812
    %v1363 = vunpack.c.h.b16 %v812
    %v1364 = vunpack.c.l.b16 %v813
    %v1365 = vunpack.c.h.b16 %v813
    %v1366 = vunpack.c.l.b16 %v814
    %v1367 = vunpack.c.h.b16 %v814
    %v1368 = vunpack.c.l.b16 %v815
    %v1369 = vunpack.c.h.b16 %v815
    %v1370 = vunpack.c.l.b16 %v816
    %v1371 = vunpack.c.h.b16 %v816
    %v1372 = vunpack.c.l.b16 %v817
    %v1373 = vunpack.c.h.b16 %v817
    %v1374 = vunpack.c.l.b16 %v818
    %v1375 = vunpack.c.h.b16 %v818
    %v1376 = vunpack.c.l.b16 %v819
    %v1377 = vunpack.c.h.b16 %v819
    %v1378 = vunpack.c.l.b16 %v820
    %v1379 = vunpack.c.h.b16 %v820
    %v1380 = vunpack.c.l.b16 %v821
    %v1381 = vunpack.c.h.b16 %v821
    %v1382 = vunpack.c.l.b16 %v822
    %v1383 = vunpack.c.h.b16 %v822
    %v1384 = vunpack.c.l.b16 %v823
    %v1385 = vunpack.c.h.b16 %v823
    %v1386 = vunpack.c.l.b16 %v824
    %v1387 = vunpack.c.h.b16 %v824
    %v1388 = vunpack.c.l.b16 %v825
    %v1389 = vunpack.c.h.b16 %v825
    %v1390 = vunpack.c.l.b16 %v826
    %v1391 = vunpack.c.h.b16 %v826
    %v1392 = vunpack.c.l.b16 %v827
    %v1393 = vunpack.c.h.b16 %v827
    %v1394 = vunpack.c.l.b16 %v828
    %v1395 = vunpack.c.h.b16 %v828
    %v1396 = vunpack.c.l.b16 %v829
    %v1397 = vunpack.c.h.b16 %v829
    %v1398 = vunpack.c.l.b16 %v830
    %v1399 = vunpack.c.h.b16 %v830
    %v1400 = vunpack.c.l.b16 %v831
    %v1401 = vunpack.c.h.b16 %v831
    %v1402 = vunpack.c.l.b16 %v832
    %v1403 = vunpack.c.h.b16 %v832
    %v1404 = vunpack.c.l.b16 %v833
    %v1405 = vunpack.c.h.b16 %v833
    %v1406 = vunpack.c.l.b16 %v834
    %v1407 = vunpack.c.h.b16 %v834
    %v1408 = vunpack.c.l.b16 %v835
    %v1409 = vunpack.c.h.b16 %v835
    %v1410 = vunpack.c.l.b16 %v836
    %v1411 = vunpack.c.h.b16 %v836
    %v1412 = vunpack.c.l.b16 %v837
    %v1413 = vunpack.c.h.b16 %v837
    %v1414 = vunpack.c.l.b16 %v838
    %v1415 = vunpack.c.h.b16 %v838
    %v1416 = vunpack.c.l.b16 %v839
    %v1417 = vunpack.c.h.b16 %v839
    %v1418 = vunpack.c.l.b16 %v840
    %v1419 = vunpack.c.h.b16 %v840
    %v1420 = vunpack.c.l.b16 %v841
    %v1421 = vunpack.c.h.b16 %v841
    %v1422 = vunpack.c.l.b16 %v842
    %v1423 = vunpack.c.h.b16 %v842
    %v1424 = vunpack.c.l.b16 %v843
    %v1425 = vunpack.c.h.b16 %v843
    %v1426 = vunpack.c.l.b16 %v844
    %v1427 = vunpack.c.h.b16 %v844
    %v1428 = vunpack.c.l.b16 %v845
    %v1429 = vunpack.c.h.b16 %v845
    %v1430 = vunpack.c.l.b16 %v846
    %v1431 = vunpack.c.h.b16 %v846
    %v1432 = vunpack.c.l.b16 %v847
    %v1433 = vunpack.c.h.b16 %v847
    %v1434 = vunpack.c.l.b16 %v848
    %v1435 = vunpack.c.h.b16 %v848
    %v1436 = vunpack.c.l.b16 %v849
    %v1437 = vunpack.c.h.b16 %v849
    %v1438 = vunpack.c.l.b16 %v850
    %v1439 = vunpack.c.h.b16 %v850
    %v1440 = vunpack.c.l.b16 %v851
    %v1441 = vunpack.c.h.b16 %v851
    %v1442 = vunpack.c.l.b16 %v852
    %v1443 = vunpack.c.h.b16 %v852
    %v1444 = vunpack.c.l.b16 %v853
    %v1445 = vunpack.c.h.b16 %v853
    %v1446 = vunpack.c.l.b16 %v854
    %v1447 = vunpack.c.h.b16 %v854
    %v1448 = vunpack.c.l.b16 %v855
    %v1449 = vunpack.c.h.b16 %v855
    %v1450 = vunpack.c.l.b16 %v856
    %v1451 = vunpack.c.h.b16 %v856
    %v1452 = vunpack.c.l.b16 %v857
    %v1453 = vunpack.c.h.b16 %v857
    %v1454 = vunpack.c.l.b16 %v858
    %v1455 = vunpack.c.h.b16 %v858
    %v1456 = vunpack.c.l.b16 %v859
    %v1457 = vunpack.c.h.b16 %v859
    %v1458 = vunpack.c.l.b16 %v860
    %v1459 = vunpack.c.h.b16 %v860
    %v1460 = vunpack.c.l.b16 %v861
    %v1461 = vunpack.c.h.b16 %v861
    %v1462 = vunpack.c.l.b16 %v862
    %v1463 = vunpack.c.h.b16 %v862
    %v1464 = vunpack.c.l.b16 %v863
    %v1465 = vunpack.c.h.b16 %v863
    %v1466 = vunpack.c.l.b16 %v864
    %v1467 = vunpack.c.h.b16 %v864
    %v1468 = vunpack.c.l.b16 %v865
    %v1469 = vunpack.c.h.b16 %v865
    %v1470 = vunpack.c.l.b16 %v866
    %v1471 = vunpack.c.h.b16 %v866
    %v1472 = vunpack.c.l.b16 %v867
    %v1473 = vunpack.c.h.b16 %v867
    %v1474 = vunpack.c.l.b16 %v868
    %v1475 = vunpack.c.h.b16 %v868
    %v1476 = vunpack.c.l.b16 %v869
    %v1477 = vunpack.c.h.b16 %v869
    %v1478 = vunpack.c.l.b16 %v870
    %v1479 = vunpack.c.h.b16 %v870
    %v1480 = vunpack.c.l.b16 %v871
    %v1481 = vunpack.c.h.b16 %v871
    %v1482 = vunpack.c.l.b16 %v872
    %v1483 = vunpack.c.h.b16 %v872
    %v1484 = vunpack.c.l.b16 %v873
    %v1485 = vunpack.c.h.b16 %v873
    %v1486 = vunpack.c.l.b16 %v874
    %v1487 = vunpack.c.h.b16 %v874
    %v1488 = vunpack.c.l.b16 %v875
    %v1489 = vunpack.c.h.b16 %v875
    %v1490 = vunpack.c.l.b16 %v876
    %v1491 = vunpack.c.h.b16 %v876
    %v1492 = vunpack.c.l.b16 %v877
    %v1493 = vunpack.c.h.b16 %v877
    %v1494 = vunpack.c.l.b16 %v878
    %v1495 = vunpack.c.h.b16 %v878
    %v1496 = vunpack.c.l.b16 %v879
    %v1497 = vunpack.c.h.b16 %v879
    %v1498 = vunpack.c.l.b16 %v880
    %v1499 = vunpack.c.h.b16 %v880
    %v1500 = vunpack.c.l.b16 %v881
    %v1501 = vunpack.c.h.b16 %v881
    %v1502 = vunpack.c.l.b16 %v882
    %v1503 = vunpack.c.h.b16 %v882
    %v1504 = vunpack.c.l.b16 %v883
    %v1505 = vunpack.c.h.b16 %v883
    %v1506 = vunpack.c.l.b16 %v884
    %v1507 = vunpack.c.h.b16 %v884
    %v1508 = vunpack.c.l.b16 %v885
    %v1509 = vunpack.c.h.b16 %v885
    %v1510 = vunpack.c.l.b16 %v886
    %v1511 = vunpack.c.h.b16 %v886
    %v1512 = vunpack.c.l.b16 %v887
    %v1513 = vunpack.c.h.b16 %v887
    %v1514 = vunpack.c.l.b16 %v888
    %v1515 = vunpack.c.h.b16 %v888
    %v1516 = vunpack.c.l.b16 %v889
    %v1517 = vunpack.c.h.b16 %v889
    %v1518 = vunpack.c.l.b16 %v890
    %v1519 = vunpack.c.h.b16 %v890
    %v1520 = vunpack.c.l.b16 %v891
    %v1521 = vunpack.c.h.b16 %v891
    %v1522 = vunpack.c.l.b16 %v892
    %v1523 = vunpack.c.h.b16 %v892
    %v1524 = vunpack.c.l.b16 %v893
    %v1525 = vunpack.c.h.b16 %v893
    %v1526 = vunpack.c.l.b16 %v894
    %v1527 = vunpack.c.h.b16 %v894
    %v1528 = vunpack.c.l.b16 %v895
    %v1529 = vunpack.c.h.b16 %v895
    %v1530 = vunpack.c.l.b16 %v896
    %v1531 = vunpack.c.h.b16 %v896
    %v1532 = vunpack.c.l.b16 %v897
    %v1533 = vunpack.c.h.b16 %v897
    %v1534 = vunpack.c.l.b16 %v898
    %v1535 = vunpack.c.h.b16 %v898
    %v1536 = vunpack.c.l.b16 %v899
    %v1537 = vunpack.c.h.b16 %v899
    %v1538 = vunpack.c.l.b16 %v900
    %v1539 = vunpack.c.h.b16 %v900
    %v1540 = vunpack.c.l.b16 %v901
    %v1541 = vunpack.c.h.b16 %v901
    %v1542 = vunpack.c.l.b16 %v902
    %v1543 = vunpack.c.h.b16 %v902
    %v1544 = vunpack.c.l.b16 %v903
    %v1545 = vunpack.c.h.b16 %v903
    %v1546 = vunpack.c.l.b16 %v904
    %v1547 = vunpack.c.h.b16 %v904
    %v1548 = vunpack.c.l.b16 %v905
    %v1549 = vunpack.c.h.b16 %v905
    %v1550 = vunpack.c.l.b16 %v906
    %v1551 = vunpack.c.h.b16 %v906
    %v1552 = vunpack.c.l.b16 %v907
    %v1553 = vunpack.c.h.b16 %v907
    %v1554 = vunpack.c.l.b16 %v908
    %v1555 = vunpack.c.h.b16 %v908
    %v1556 = vunpack.c.l.b16 %v909
    %v1557 = vunpack.c.h.b16 %v909
    %v1558 = vunpack.c.l.b16 %v910
    %v1559 = vunpack.c.h.b16 %v910
    %v1560 = vunpack.c.l.b16 %v911
    %v1561 = vunpack.c.h.b16 %v911
    %v1562 = vunpack.c.l.b16 %v912
    %v1563 = vunpack.c.h.b16 %v912
    %v1564 = vunpack.c.l.b16 %v913
    %v1565 = vunpack.c.h.b16 %v913
    %v1566 = vunpack.c.l.b16 %v914
    %v1567 = vunpack.c.h.b16 %v914
    %v1568 = vunpack.c.l.b16 %v915
    %v1569 = vunpack.c.h.b16 %v915
    %v1570 = vunpack.c.l.b16 %v916
    %v1571 = vunpack.c.h.b16 %v916
    %v1572 = vunpack.c.l.b16 %v917
    %v1573 = vunpack.c.h.b16 %v917
    %v1574 = vunpack.c.l.b16 %v918
    %v1575 = vunpack.c.h.b16 %v918
    %v1576 = vunpack.c.l.b16 %v919
    %v1577 = vunpack.c.h.b16 %v919
    %v1578 = vunpack.c.l.b16 %v920
    %v1579 = vunpack.c.h.b16 %v920
    %v1580 = vunpack.c.l.b16 %v921
    %v1581 = vunpack.c.h.b16 %v921
    %v1582 = vunpack.c.l.b16 %v922
    %v1583 = vunpack.c.h.b16 %v922
    %v1584 = vunpack.c.l.b16 %v923
    %v1585 = vunpack.c.h.b16 %v923
    %v1586 = vunpack.c.l.b16 %v924
    %v1587 = vunpack.c.h.b16 %v924
    %v1588 = vunpack.c.l.b16 %v925
    %v1589 = vunpack.c.h.b16 %v925
    %v1590 = vunpack.c.l.b16 %v926
    %v1591 = vunpack.c.h.b16 %v926
    %v1592 = vunpack.c.l.b16 %v927
    %v1593 = vunpack.c.h.b16 %v927
    %v1594 = vunpack.c.l.b16 %v928
    %v1595 = vunpack.c.h.b16 %v928
    %v1596 = vunpack.c.l.b16 %v929
    %v1597 = vunpack.c.h.b16 %v929
    %v1598 = vunpack.c.l.b16 %v930
    %v1599 = vunpack.c.h.b16 %v930
    %v1600 = vunpack.c.l.b16 %v931
    %v1601 = vunpack.c.h.b16 %v931
    %v1602 = vunpack.c.l.b16 %v932
    %v1603 = vunpack.c.h.b16 %v932
    %v1604 = vunpack.c.l.b16 %v933
    %v1605 = vunpack.c.h.b16 %v933
    %v1606 = vunpack.c.l.b16 %v934
    %v1607 = vunpack.c.h.b16 %v934
    %v1608 = vunpack.c.l.b16 %v935
    %v1609 = vunpack.c.h.b16 %v935
    %v1610 = vunpack.c.l.b16 %v936
    %v1611 = vunpack.c.h.b16 %v936
    %v1612 = vunpack.c.l.b16 %v937
    %v1613 = vunpack.c.h.b16 %v937
    %v1614 = vunpack.c.l.b16 %v938
    %v1615 = vunpack.c.h.b16 %v938
    %v1616 = vunpack.c.l.b16 %v939
    %v1617 = vunpack.c.h.b16 %v939
    %v1618 = vunpack.c.l.b16 %v940
    %v1619 = vunpack.c.h.b16 %v940
    %v1620 = vunpack.c.l.b16 %v941
    %v1621 = vunpack.c.h.b16 %v941
    %v1622 = vunpack.c.l.b16 %v942
    %v1623 = vunpack.c.h.b16 %v942
    %v1624 = vunpack.c.l.b16 %v943
    %v1625 = vunpack.c.h.b16 %v943
    %v1626 = vunpack.c.l.b16 %v944
    %v1627 = vunpack.c.h.b16 %v944
    %v1628 = vunpack.c.l.b16 %v945
    %v1629 = vunpack.c.h.b16 %v945
    %v1630 = vunpack.c.l.b16 %v946
    %v1631 = vunpack.c.h.b16 %v946
    %v1632 = vunpack.c.l.b16 %v947
    %v1633 = vunpack.c.h.b16 %v947
    %v1634 = vunpack.c.l.b16 %v948
    %v1635 = vunpack.c.h.b16 %v948
    %v1636 = vunpack.c.l.b16 %v949
    %v1637 = vunpack.c.h.b16 %v949
    %v1638 = vunpack.c.l.b16 %v950
    %v1639 = vunpack.c.h.b16 %v950
    %v1640 = vunpack.c.l.b16 %v951
    %v1641 = vunpack.c.h.b16 %v951
    %v1642 = vunpack.c.l.b16 %v952
    %v1643 = vunpack.c.h.b16 %v952
    %v1644 = vunpack.c.l.b16 %v953
    %v1645 = vunpack.c.h.b16 %v953
    %v1646 = vunpack.c.l.b16 %v954
    %v1647 = vunpack.c.h.b16 %v954
    %v1648 = vunpack.c.l.b16 %v955
    %v1649 = vunpack.c.h.b16 %v955
    %v1650 = vunpack.c.l.b16 %v956
    %v1651 = vunpack.c.h.b16 %v956
    %v1652 = vunpack.c.l.b16 %v957
    %v1653 = vunpack.c.h.b16 %v957
    %v1654 = vunpack.c.l.b16 %v958
    %v1655 = vunpack.c.h.b16 %v958
    %v1656 = vunpack.c.l.b16 %v959
    %v1657 = vunpack.c.h.b16 %v959
    %v1658 = vunpack.c.l.b16 %v960
    %v1659 = vunpack.c.h.b16 %v960
    %v1660 = vunpack.c.l.b16 %v961
    %v1661 = vunpack.c.h.b16 %v961
    %v1662 = vunpack.c.l.b16 %v962
    %v1663 = vunpack.c.h.b16 %v962
    %v1664 = vunpack.c.l.b16 %v963
    %v1665 = vunpack.c.h.b16 %v963
    %v1666 = vunpack.c.l.b16 %v964
    %v1667 = vunpack.c.h.b16 %v964
    %v1668 = vunpack.c.l.b16 %v965
    %v1669 = vunpack.c.h.b16 %v965
    %v1670 = vunpack.c.l.b16 %v966
    %v1671 = vunpack.c.h.b16 %v966
    %v1672 = vunpack.c.l.b16 %v967
    %v1673 = vunpack.c.h.b16 %v967
    %v1674 = vunpack.c.l.b16 %v968
    %v1675 = vunpack.c.h.b16 %v968
    %v1676 = vunpack.c.l.b16 %v969
    %v1677 = vunpack.c.h.b16 %v969
    %v1678 = vunpack.c.l.b16 %v970
    %v1679 = vunpack.c.h.b16 %v970
    %v1680 = vunpack.c.l.b16 %v971
    %v1681 = vunpack.c.h.b16 %v971
    %v1682 = vunpack.c.l.b16 %v972
    %v1683 = vunpack.c.h.b16 %v972
    %v1684 = vunpack.c.l.b16 %v973
    %v1685 = vunpack.c.h.b16 %v973
    %v1686 = vunpack.c.l.b16 %v974
    %v1687 = vunpack.c.h.b16 %v974
    %v1688 = vunpack.c.l.b16 %v975
    %v1689 = vunpack.c.h.b16 %v975
    %v1690 = vunpack.c.l.b16 %v976
    %v1691 = vunpack.c.h.b16 %v976
    %v1692 = vunpack.c.l.b16 %v977
    %v1693 = vunpack.c.h.b16 %v977
    %v1694 = vunpack.c.l.b16 %v978
    %v1695 = vunpack.c.h.b16 %v978
    %v1696 = vunpack.c.l.b16 %v979
    %v1697 = vunpack.c.h.b16 %v979
    %v1698 = vunpack.c.l.b16 %v980
    %v1699 = vunpack.c.h.b16 %v980
    %v1700 = vunpack.c.l.b16 %v981
    %v1701 = vunpack.c.h.b16 %v981
    %v1702 = vunpack.c.l.b16 %v982
    %v1703 = vunpack.c.h.b16 %v982
    %v1704 = vunpack.c.l.b16 %v983
    %v1705 = vunpack.c.h.b16 %v983
    %v1706 = vunpack.c.l.b16 %v984
    %v1707 = vunpack.c.h.b16 %v984
    %v1708 = vunpack.c.l.b16 %v985
    %v1709 = vunpack.c.h.b16 %v985
    %v1710 = vunpack.c.l.b16 %v986
    %v1711 = vunpack.c.h.b16 %v986
    %v1712 = vunpack.c.l.b16 %v987
    %v1713 = vunpack.c.h.b16 %v987
    %v1714 = vunpack.c.l.b16 %v988
    %v1715 = vunpack.c.h.b16 %v988
    %v1716 = vunpack.c.l.b16 %v989
    %v1717 = vunpack.c.h.b16 %v989
    %v1718 = vunpack.c.l.b16 %v990
    %v1719 = vunpack.c.h.b16 %v990
    %v1720 = vunpack.c.l.b16 %v991
    %v1721 = vunpack.c.h.b16 %v991
    %v1722 = vunpack.c.l.b16 %v992
    %v1723 = vunpack.c.h.b16 %v992
    %v1724 = vunpack.c.l.b16 %v993
    %v1725 = vunpack.c.h.b16 %v993
    %v1726 = vunpack.c.l.b16 %v994
    %v1727 = vunpack.c.h.b16 %v994
    %v1728 = vunpack.c.l.b16 %v995
    %v1729 = vunpack.c.h.b16 %v995
    %v1730 = vunpack.c.l.b16 %v996
    %v1731 = vunpack.c.h.b16 %v996
    %v1732 = vunpack.c.l.b16 %v997
    %v1733 = vunpack.c.h.b16 %v997
    %v1734 = vunpack.c.l.b16 %v998
    %v1735 = vunpack.c.h.b16 %v998
    %v1736 = vunpack.c.l.b16 %v999
    %v1737 = vunpack.c.h.b16 %v999
    %v1738 = vunpack.c.l.b16 %v1000
    %v1739 = vunpack.c.h.b16 %v1000
    %v1740 = vunpack.c.l.b16 %v1001
    %v1741 = vunpack.c.h.b16 %v1001
    %v1742 = vunpack.c.l.b16 %v1002
    %v1743 = vunpack.c.h.b16 %v1002
    %v1744 = vunpack.c.l.b16 %v1003
    %v1745 = vunpack.c.h.b16 %v1003
    %v1746 = vunpack.c.l.b16 %v1004
    %v1747 = vunpack.c.h.b16 %v1004
    %v1748 = vunpack.c.l.b16 %v1005
    %v1749 = vunpack.c.h.b16 %v1005
    %v1750 = vunpack.c.l.b16 %v1006
    %v1751 = vunpack.c.h.b16 %v1006
    %v1752 = vunpack.c.l.b16 %v1007
    %v1753 = vunpack.c.h.b16 %v1007
    %v1754 = vunpack.c.l.b16 %v1008
    %v1755 = vunpack.c.h.b16 %v1008
    %v1756 = vunpack.c.l.b16 %v1009
    %v1757 = vunpack.c.h.b16 %v1009
    %v1758 = vunpack.c.l.b16 %v1010
    %v1759 = vunpack.c.h.b16 %v1010
    %v1760 = vunpack.c.l.b16 %v1011
    %v1761 = vunpack.c.h.b16 %v1011
    %v1762 = vunpack.c.l.b16 %v1012
    %v1763 = vunpack.c.h.b16 %v1012
    %v1764 = vunpack.c.l.b16 %v1013
    %v1765 = vunpack.c.h.b16 %v1013
    %v1766 = vunpack.c.l.b16 %v1014
    %v1767 = vunpack.c.h.b16 %v1014
    %v1768 = vunpack.c.l.b16 %v1015
    %v1769 = vunpack.c.h.b16 %v1015
    %v1770 = vunpack.c.l.b16 %v1016
    %v1771 = vunpack.c.h.b16 %v1016
    %v1772 = vunpack.c.l.b16 %v1017
    %v1773 = vunpack.c.h.b16 %v1017
    %v1774 = vunpack.c.l.b16 %v1018
    %v1775 = vunpack.c.h.b16 %v1018
    %v1776 = vunpack.c.l.b16 %v1019
    %v1777 = vunpack.c.h.b16 %v1019
    %v1778 = vunpack.c.l.b16 %v1020
    %v1779 = vunpack.c.h.b16 %v1020
    %v1780 = vunpack.c.l.b16 %v1021
    %v1781 = vunpack.c.h.b16 %v1021
    %v1782 = vunpack.c.l.b16 %v1022
    %v1783 = vunpack.c.h.b16 %v1022
    %v1784 = vunpack.c.l.b16 %v1023
    %v1785 = vunpack.c.h.b16 %v1023
    %v1786 = vunpack.c.l.b16 %v1024
    %v1787 = vunpack.c.h.b16 %v1024
    %v1788 = vunpack.c.l.b16 %v1025
    %v1789 = vunpack.c.h.b16 %v1025
    %v1790 = vunpack.c.l.b16 %v1026
    %v1791 = vunpack.c.h.b16 %v1026
    %v1792 = vunpack.c.l.b16 %v1027
    %v1793 = vunpack.c.h.b16 %v1027
    %v1794 = vunpack.c.l.b16 %v1028
    %v1795 = vunpack.c.h.b16 %v1028
    %v1796 = vunpack.c.l.b16 %v1029
    %v1797 = vunpack.c.h.b16 %v1029
    %v1798 = vunpack.c.l.b16 %v1030
    %v1799 = vunpack.c.h.b16 %v1030
    %v1800 = vunpack.c.l.b16 %v1031
    %v1801 = vunpack.c.h.b16 %v1031
    %v1802 = vunpack.c.l.b16 %v1032
    %v1803 = vunpack.c.h.b16 %v1032
    %v1804 = vunpack.c.l.b16 %v1033
    %v1805 = vunpack.c.h.b16 %v1033
    %v1806 = vunpack.c.l.b16 %v1034
    %v1807 = vunpack.c.h.b16 %v1034
    %v1808 = vunpack.c.l.b16 %v1035
    %v1809 = vunpack.c.h.b16 %v1035
    %v1810 = vunpack.c.l.b16 %v1036
    %v1811 = vunpack.c.h.b16 %v1036
    %v1812 = vunpack.c.l.b16 %v1037
    %v1813 = vunpack.c.h.b16 %v1037
    %v1814 = vunpack.c.l.b16 %v1038
    %v1815 = vunpack.c.h.b16 %v1038
    %v1816 = vunpack.c.l.b16 %v1039
    %v1817 = vunpack.c.h.b16 %v1039
    %v1818 = vunpack.c.l.b16 %v1040
    %v1819 = vunpack.c.h.b16 %v1040
    %v1820 = vunpack.c.l.b16 %v1041
    %v1821 = vunpack.c.h.b16 %v1041
    %v1822 = vunpack.c.l.b16 %v1042
    %v1823 = vunpack.c.h.b16 %v1042
    %v1824 = vunpack.c.l.b16 %v1043
    %v1825 = vunpack.c.h.b16 %v1043
    %v1826 = vunpack.c.l.b16 %v1044
    %v1827 = vunpack.c.h.b16 %v1044
    %v1828 = vunpack.c.l.b16 %v1045
    %v1829 = vunpack.c.h.b16 %v1045
    %v1830 = vunpack.c.l.b16 %v1046
    %v1831 = vunpack.c.h.b16 %v1046
    %v1832 = vunpack.c.l.b16 %v1047
    %v1833 = vunpack.c.h.b16 %v1047
    %v1834 = vpack.c.b16 %v1330, %v1322
    %v1835 = vpack.c.b16 %v1331, %v1323
    %v1836 = vpack.c.b16 %v1332, %v1324
    %v1837 = vpack.c.b16 %v1333, %v1325
    %v1838 = vpack.c.b16 %v1334, %v1326
    %v1839 = vpack.c.b16 %v1335, %v1327
    %v1840 = vpack.c.b16 %v1336, %v1328
    %v1841 = vpack.c.b16 %v1337, %v1329
    %v1842 = vpack.c.b16 %v1346, %v1338
    %v1843 = vpack.c.b16 %v1347, %v1339
    %v1844 = vpack.c.b16 %v1348, %v1340
    %v1845 = vpack.c.b16 %v1349, %v1341
    %v1846 = vpack.c.b16 %v1350, %v1342
    %v1847 = vpack.c.b16 %v1351, %v1343
    %v1848 = vpack.c.b16 %v1352, %v1344
    %v1849 = vpack.c.b16 %v1353, %v1345
    %v1850 = vpack.c.b16 %v1362, %v1354
    %v1851 = vpack.c.b16 %v1363, %v1355
    %v1852 = vpack.c.b16 %v1364, %v1356
    %v1853 = vpack.c.b16 %v1365, %v1357
    %v1854 = vpack.c.b16 %v1366, %v1358
    %v1855 = vpack.c.b16 %v1367, %v1359
    %v1856 = vpack.c.b16 %v1368, %v1360
    %v1857 = vpack.c.b16 %v1369, %v1361
    %v1858 = vpack.c.b16 %v1378, %v1370
    %v1859 = vpack.c.b16 %v1379, %v1371
    %v1860 = vpack.c.b16 %v1380, %v1372
    %v1861 = vpack.c.b16 %v1381, %v1373
    %v1862 = vpack.c.b16 %v1382, %v1374
    %v1863 = vpack.c.b16 %v1383, %v1375
    %v1864 = vpack.c.b16 %v1384, %v1376
    %v1865 = vpack.c.b16 %v1385, %v1377
    %v1866 = vpack.c.b16 %v1394, %v1386
    %v1867 = vpack.c.b16 %v1395, %v1387
    %v1868 = vpack.c.b16 %v1396, %v1388
    %v1869 = vpack.c.b16 %v1397, %v1389
    %v1870 = vpack.c.b16 %v1398, %v1390
    %v1871 = vpack.c.b16 %v1399, %v1391
    %v1872 = vpack.c.b16 %v1400, %v1392
    %v1873 = vpack.c.b16 %v1401, %v1393
    %v1874 = vpack.c.b16 %v1410, %v1402
    %v1875 = vpack.c.b16 %v1411, %v1403
    %v1876 = vpack.c.b16 %v1412, %v1404
    %v1877 = vpack.c.b16 %v1413, %v1405
    %v1878 = vpack.c.b16 %v1414, %v1406
    %v1879 = vpack.c.b16 %v1415, %v1407
    %v1880 = vpack.c.b16 %v1416, %v1408
    %v1881 = vpack.c.b16 %v1417, %v1409
    %v1882 = vpack.c.b16 %v1426, %v1418
    %v1883 = vpack.c.b16 %v1427, %v1419
    %v1884 = vpack.c.b16 %v1428, %v1420
    %v1885 = vpack.c.b16 %v1429, %v1421
    %v1886 = vpack.c.b16 %v1430, %v1422
    %v1887 = vpack.c.b16 %v1431, %v1423
    %v1888 = vpack.c.b16 %v1432, %v1424
    %v1889 = vpack.c.b16 %v1433, %v1425
    %v1890 = vpack.c.b16 %v1442, %v1434
    %v1891 = vpack.c.b16 %v1443, %v1435
    %v1892 = vpack.c.b16 %v1444, %v1436
    %v1893 = vpack.c.b16 %v1445, %v1437
    %v1894 = vpack.c.b16 %v1446, %v1438
    %v1895 = vpack.c.b16 %v1447, %v1439
    %v1896 = vpack.c.b16 %v1448, %v1440
    %v1897 = vpack.c.b16 %v1449, %v1441
    %v1898 = vpack.c.b16 %v1458, %v1450
    %v1899 = vpack.c.b16 %v1459, %v1451
    %v1900 = vpack.c.b16 %v1460, %v1452
    %v1901 = vpack.c.b16 %v1461, %v1453
    %v1902 = vpack.c.b16 %v1462, %v1454
    %v1903 = vpack.c.b16 %v1463, %v1455
    %v1904 = vpack.c.b16 %v1464, %v1456
    %v1905 = vpack.c.b16 %v1465, %v1457
    %v1906 = vpack.c.b16 %v1474, %v1466
    %v1907 = vpack.c.b16 %v1475, %v1467
    %v1908 = vpack.c.b16 %v1476, %v1468
    %v1909 = vpack.c.b16 %v1477, %v1469
    %v1910 = vpack.c.b16 %v1478, %v1470
    %v1911 = vpack.c.b16 %v1479, %v1471
    %v1912 = vpack.c.b16 %v1480, %v1472
    %v1913 = vpack.c.b16 %v1481, %v1473
    %v1914 = vpack.c.b16 %v1490, %v1482
    %v1915 = vpack.c.b16 %v1491, %v1483
    %v1916 = vpack.c.b16 %v1492, %v1484
    %v1917 = vpack.c.b16 %v1493, %v1485
    %v1918 = vpack.c.b16 %v1494, %v1486
    %v1919 = vpack.c.b16 %v1495, %v1487
    %v1920 = vpack.c.b16 %v1496, %v1488
    %v1921 = vpack.c.b16 %v1497, %v1489
    %v1922 = vpack.c.b16 %v1506, %v1498
    %v1923 = vpack.c.b16 %v1507, %v1499
    %v1924 = vpack.c.b16 %v1508, %v1500
    %v1925 = vpack.c.b16 %v1509, %v1501
    %v1926 = vpack.c.b16 %v1510, %v1502
    %v1927 = vpack.c.b16 %v1511, %v1503
    %v1928 = vpack.c.b16 %v1512, %v1504
    %v1929 = vpack.c.b16 %v1513, %v1505
    %v1930 = vpack.c.b16 %v1522, %v1514
    %v1931 = vpack.c.b16 %v1523, %v1515
    %v1932 = vpack.c.b16 %v1524, %v1516
    %v1933 = vpack.c.b16 %v1525, %v1517
    %v1934 = vpack.c.b16 %v1526, %v1518
    %v1935 = vpack.c.b16 %v1527, %v1519
    %v1936 = vpack.c.b16 %v1528, %v1520
    %v1937 = vpack.c.b16 %v1529, %v1521
    %v1938 = vpack.c.b16 %v1538, %v1530
    %v1939 = vpack.c.b16 %v1539, %v1531
    %v1940 = vpack.c.b16 %v1540, %v1532
    %v1941 = vpack.c.b16 %v1541, %v1533
    %v1942 = vpack.c.b16 %v1542, %v1534
    %v1943 = vpack.c.b16 %v1543, %v1535
    %v1944 = vpack.c.b16 %v1544, %v1536
    %v1945 = vpack.c.b16 %v1545, %v1537
    %v1946 = vpack.c.b16 %v1554, %v1546
    %v1947 = vpack.c.b16 %v1555, %v1547
    %v1948 = vpack.c.b16 %v1556, %v1548
    %v1949 = vpack.c.b16 %v1557, %v1549
    %v1950 = vpack.c.b16 %v1558, %v1550
    %v1951 = vpack.c.b16 %v1559, %v1551
    %v1952 = vpack.c.b16 %v1560, %v1552
    %v1953 = vpack.c.b16 %v1561, %v1553
    %v1954 = vpack.c.b16 %v1570, %v1562
    %v1955 = vpack.c.b16 %v1571, %v1563
    %v1956 = vpack.c.b16 %v1572, %v1564
    %v1957 = vpack.c.b16 %v1573, %v1565
    %v1958 = vpack.c.b16 %v1574, %v1566
    %v1959 = vpack.c.b16 %v1575, %v1567
    %v1960 = vpack.c.b16 %v1576, %v1568
    %v1961 = vpack.c.b16 %v1577, %v1569
    %v1962 = vpack.c.b16 %v1586, %v1578
    %v1963 = vpack.c.b16 %v1587, %v1579
    %v1964 = vpack.c.b16 %v1588, %v1580
    %v1965 = vpack.c.b16 %v1589, %v1581
    %v1966 = vpack.c.b16 %v1590, %v1582
    %v1967 = vpack.c.b16 %v1591, %v1583
    %v1968 = vpack.c.b16 %v1592, %v1584
    %v1969 = vpack.c.b16 %v1593, %v1585
    %v1970 = vpack.c.b16 %v1602, %v1594
    %v1971 = vpack.c.b16 %v1603, %v1595
    %v1972 = vpack.c.b16 %v1604, %v1596
    %v1973 = vpack.c.b16 %v1605, %v1597
    %v1974 = vpack.c.b16 %v1606, %v1598
    %v1975 = vpack.c.b16 %v1607, %v1599
    %v1976 = vpack.c.b16 %v1608, %v1600
    %v1977 = vpack.c.b16 %v1609, %v1601
    %v1978 = vpack.c.b16 %v1618, %v1610
    %v1979 = vpack.c.b16 %v1619, %v1611
    %v1980 = vpack.c.b16 %v1620, %v1612
    %v1981 = vpack.c.b16 %v1621, %v1613
    %v1982 = vpack.c.b16 %v1622, %v1614
    %v1983 = vpack.c.b16 %v1623, %v1615
    %v1984 = vpack.c.b16 %v1624, %v1616
    %v1985 = vpack.c.b16 %v1625, %v1617
    %v1986 = vpack.c.b16 %v1634, %v1626
    %v1987 = vpack.c.b16 %v1635, %v1627
    %v1988 = vpack.c.b16 %v1636, %v1628
    %v1989 = vpack.c.b16 %v1637, %v1629
    %v1990 = vpack.c.b16 %v1638, %v1630
    %v1991 = vpack.c.b16 %v1639, %v1631
    %v1992 = vpack.c.b16 %v1640, %v1632
    %v1993 = vpack.c.b16 %v1641, %v1633
    %v1994 = vpack.c.b16 %v1650, %v1642
    %v1995 = vpack.c.b16 %v1651, %v1643
    %v1996 = vpack.c.b16 %v1652, %v1644
    %v1997 = vpack.c.b16 %v1653, %v1645
    %v1998 = vpack.c.b16 %v1654, %v1646
    %v1999 = vpack.c.b16 %v1655, %v1647
    %v2000 = vpack.c.b16 %v1656, %v1648
    %v2001 = vpack.c.b16 %v1657, %v1649
    %v2002 = vpack.c.b16 %v1666, %v1658
    %v2003 = vpack.c.b16 %v1667, %v1659
    %v2004 = vpack.c.b16 %v1668, %v1660
    %v2005 = vpack.c.b16 %v1669, %v1661
    %v2006 = vpack.c.b16 %v1670, %v1662
    %v2007 = vpack.c.b16 %v1671, %v1663
    %v2008 = vpack.c.b16 %v1672, %v1664
    %v2009 = vpack.c.b16 %v1673, %v1665
    %v2010 = vpack.c.b16 %v1682, %v1674
    %v2011 = vpack.c.b16 %v1683, %v1675
    %v2012 = vpack.c.b16 %v1684, %v1676
    %v2013 = vpack.c.b16 %v1685, %v1677
    %v2014 = vpack.c.b16 %v1686, %v1678
    %v2015 = vpack.c.b16 %v1687, %v1679
    %v2016 = vpack.c.b16 %v1688, %v1680
    %v2017 = vpack.c.b16 %v1689, %v1681
    %v2018 = vpack.c.b16 %v1698, %v1690
    %v2019 = vpack.c.b16 %v1699, %v1691
    %v2020 = vpack.c.b16 %v1700, %v1692
    %v2021 = vpack.c.b16 %v1701, %v1693
    %v2022 = vpack.c.b16 %v1702, %v1694
    %v2023 = vpack.c.b16 %v1703, %v1695
    %v2024 = vpack.c.b16 %v1704, %v1696
    %v2025 = vpack.c.b16 %v1705, %v1697
    %v2026 = vpack.c.b16 %v1714, %v1706
    %v2027 = vpack.c.b16 %v1715, %v1707
    %v2028 = vpack.c.b16 %v1716, %v1708
    %v2029 = vpack.c.b16 %v1717, %v1709
    %v2030 = vpack.c.b16 %v1718, %v1710
    %v2031 = vpack.c.b16 %v1719, %v1711
    %v2032 = vpack.c.b16 %v1720, %v1712
    %v2033 = vpack.c.b16 %v1721, %v1713
    %v2034 = vpack.c.b16 %v1730, %v1722
    %v2035 = vpack.c.b16 %v1731, %v1723
    %v2036 = vpack.c.b16 %v1732, %v1724
    %v2037 = vpack.c.b16 %v1733, %v1725
    %v2038 = vpack.c.b16 %v1734, %v1726
    %v2039 = vpack.c.b16 %v1735, %v1727
    %v2040 = vpack.c.b16 %v1736, %v1728
    %v2041 = vpack.c.b16 %v1737, %v1729
    %v2042 = vpack.c.b16 %v1746, %v1738
    %v2043 = vpack.c.b16 %v1747, %v1739
    %v2044 = vpack.c.b16 %v1748, %v1740
    %v2045 = vpack.c.b16 %v1749, %v1741
    %v2046 = vpack.c.b16 %v1750, %v1742
    %v2047 = vpack.c.b16 %v1751, %v1743
    %v2048 = vpack.c.b16 %v1752, %v1744
    %v2049 = vpack.c.b16 %v1753, %v1745
    %v2050 = vpack.c.b16 %v1762, %v1754
    %v2051 = vpack.c.b16 %v1763, %v1755
    %v2052 = vpack.c.b16 %v1764, %v1756
    %v2053 = vpack.c.b16 %v1765, %v1757
    %v2054 = vpack.c.b16 %v1766, %v1758
    %v2055 = vpack.c.b16 %v1767, %v1759
    %v2056 = vpack.c.b16 %v1768, %v1760
    %v2057 = vpack.c.b16 %v1769, %v1761
    %v2058 = vpack.c.b16 %v1778, %v1770
    %v2059 = vpack.c.b16 %v1779, %v1771
    %v2060 = vpack.c.b16 %v1780, %v1772
    %v2061 = vpack.c.b16 %v1781, %v1773
    %v2062 = vpack.c.b16 %v1782, %v1774
    %v2063 = vpack.c.b16 %v1783, %v1775
    %v2064 = vpack.c.b16 %v1784, %v1776
    %v2065 = vpack.c.b16 %v1785, %v1777
    %v2066 = vpack.c.b16 %v1794, %v1786
    %v2067 = vpack.c.b16 %v1795, %v1787
    %v2068 = vpack.c.b16 %v1796, %v1788
    %v2069 = vpack.c.b16 %v1797, %v1789
    %v2070 = vpack.c.b16 %v1798, %v1790
    %v2071 = vpack.c.b16 %v1799, %v1791
    %v2072 = vpack.c.b16 %v1800, %v1792
    %v2073 = vpack.c.b16 %v1801, %v1793
    %v2074 = vpack.c.b16 %v1810, %v1802
    %v2075 = vpack.c.b16 %v1811, %v1803
    %v2076 = vpack.c.b16 %v1812, %v1804
    %v2077 = vpack.c.b16 %v1813, %v1805
    %v2078 = vpack.c.b16 %v1814, %v1806
    %v2079 = vpack.c.b16 %v1815, %v1807
    %v2080 = vpack.c.b16 %v1816, %v1808
    %v2081 = vpack.c.b16 %v1817, %v1809
    %v2082 = vpack.c.b16 %v1826, %v1818
    %v2083 = vpack.c.b16 %v1827, %v1819
    %v2084 = vpack.c.b16 %v1828, %v1820
    %v2085 = vpack.c.b16 %v1829, %v1821
    %v2086 = vpack.c.b16 %v1830, %v1822
    %v2087 = vpack.c.b16 %v1831, %v1823
    %v2088 = vpack.c.b16 %v1832, %v1824
    %v2089 = vpack.c.b16 %v1833, %v1825
    %2346 = vmatpush.bf16.msra.mxu0 %v1890
    %2347 = vmatpush.bf16.msra.mxu0 %v1882
    %2348 = vmatpush.bf16.msra.mxu0 %v1874
    %2349 = vmatpush.bf16.msra.mxu0 %v1866
    %2350 = vmatpush.bf16.msra.mxu0 %v1858
    %2351 = vmatpush.bf16.msra.mxu0 %v1850
    %2352 = vmatpush.bf16.msra.mxu0 %v1842
    %2353 = vmatpush.bf16.msra.mxu0 %v1834
    %2354 = vmatmul.bf16.gmra.mxu0 %v788
    %v2355 = vpop.f32.mrf.mxu0
    %v2356 = vadd.f32 %v1050, %v2355
    %v2357 = vpop.f32.mrf.mxu0
    %2358 = vdwg.mxu0
    %2359 = vmatpush.bf16.msra.mxu0 %v1954
    %2360 = vmatpush.bf16.msra.mxu0 %v1946
    %2361 = vmatpush.bf16.msra.mxu0 %v1938
    %2362 = vmatpush.bf16.msra.mxu0 %v1930
    %2363 = vmatpush.bf16.msra.mxu0 %v1922
    %2364 = vmatpush.bf16.msra.mxu0 %v1914
    %2365 = vmatpush.bf16.msra.mxu0 %v1906
    %2366 = vmatpush.bf16.msra.mxu0 %v1898
    %2367 = vmatmul.bf16.gmra.mxu0 %v789
    %v2368 = vpop.f32.mrf.mxu0
    %v2369 = vadd.f32 %v2356, %v2368
    %v2370 = vpop.f32.mrf.mxu0
    %2371 = vdwg.mxu0
    %2372 = vmatpush.bf16.msra.mxu0 %v2018
    %2373 = vmatpush.bf16.msra.mxu0 %v2010
    %2374 = vmatpush.bf16.msra.mxu0 %v2002
    %2375 = vmatpush.bf16.msra.mxu0 %v1994
    %2376 = vmatpush.bf16.msra.mxu0 %v1986
    %2377 = vmatpush.bf16.msra.mxu0 %v1978
    %2378 = vmatpush.bf16.msra.mxu0 %v1970
    %2379 = vmatpush.bf16.msra.mxu0 %v1962
    %2380 = vmatmul.bf16.gmra.mxu0 %v790
    %v2381 = vpop.f32.mrf.mxu0
    %v2382 = vadd.f32 %v2369, %v2381
    %v2383 = vpop.f32.mrf.mxu0
    %2384 = vdwg.mxu0
    %2385 = vmatpush.bf16.msra.mxu0 %v2082
    %2386 = vmatpush.bf16.msra.mxu0 %v2074
    %2387 = vmatpush.bf16.msra.mxu0 %v2066
    %2388 = vmatpush.bf16.msra.mxu0 %v2058
    %2389 = vmatpush.bf16.msra.mxu0 %v2050
    %2390 = vmatpush.bf16.msra.mxu0 %v2042
    %2391 = vmatpush.bf16.msra.mxu0 %v2034
    %2392 = vmatpush.bf16.msra.mxu0 %v2026
    %2393 = vmatmul.bf16.gmra.mxu0 %v791
    %v2394 = vpop.f32.mrf.mxu0
    %v2395 = vadd.f32 %v2382, %v2394
    %v2396 = vpop.f32.mrf.mxu0
    %2397 = vdwg.mxu0
    %2398 = vmatpush.bf16.msra.mxu0 %v1891
    %2399 = vmatpush.bf16.msra.mxu0 %v1883
    %2400 = vmatpush.bf16.msra.mxu0 %v1875
    %2401 = vmatpush.bf16.msra.mxu0 %v1867
    %2402 = vmatpush.bf16.msra.mxu0 %v1859
    %2403 = vmatpush.bf16.msra.mxu0 %v1851
    %2404 = vmatpush.bf16.msra.mxu0 %v1843
    %2405 = vmatpush.bf16.msra.mxu0 %v1835
    %2406 = vmatmul.bf16.gmra.mxu0 %v788
    %v2407 = vpop.f32.mrf.mxu0
    %v2408 = vadd.f32 %v1051, %v2407
    %v2409 = vpop.f32.mrf.mxu0
    %2410 = vdwg.mxu0
    %2411 = vmatpush.bf16.msra.mxu0 %v1955
    %2412 = vmatpush.bf16.msra.mxu0 %v1947
    %2413 = vmatpush.bf16.msra.mxu0 %v1939
    %2414 = vmatpush.bf16.msra.mxu0 %v1931
    %2415 = vmatpush.bf16.msra.mxu0 %v1923
    %2416 = vmatpush.bf16.msra.mxu0 %v1915
    %2417 = vmatpush.bf16.msra.mxu0 %v1907
    %2418 = vmatpush.bf16.msra.mxu0 %v1899
    %2419 = vmatmul.bf16.gmra.mxu0 %v789
    %v2420 = vpop.f32.mrf.mxu0
    %v2421 = vadd.f32 %v2408, %v2420
    %v2422 = vpop.f32.mrf.mxu0
    %2423 = vdwg.mxu0
    %2424 = vmatpush.bf16.msra.mxu0 %v2019
    %2425 = vmatpush.bf16.msra.mxu0 %v2011
    %2426 = vmatpush.bf16.msra.mxu0 %v2003
    %2427 = vmatpush.bf16.msra.mxu0 %v1995
    %2428 = vmatpush.bf16.msra.mxu0 %v1987
    %2429 = vmatpush.bf16.msra.mxu0 %v1979
    %2430 = vmatpush.bf16.msra.mxu0 %v1971
    %2431 = vmatpush.bf16.msra.mxu0 %v1963
    %2432 = vmatmul.bf16.gmra.mxu0 %v790
    %v2433 = vpop.f32.mrf.mxu0
    %v2434 = vadd.f32 %v2421, %v2433
    %v2435 = vpop.f32.mrf.mxu0
    %2436 = vdwg.mxu0
    %2437 = vmatpush.bf16.msra.mxu0 %v2083
    %2438 = vmatpush.bf16.msra.mxu0 %v2075
    %2439 = vmatpush.bf16.msra.mxu0 %v2067
    %2440 = vmatpush.bf16.msra.mxu0 %v2059
    %2441 = vmatpush.bf16.msra.mxu0 %v2051
    %2442 = vmatpush.bf16.msra.mxu0 %v2043
    %2443 = vmatpush.bf16.msra.mxu0 %v2035
    %2444 = vmatpush.bf16.msra.mxu0 %v2027
    %2445 = vmatmul.bf16.gmra.mxu0 %v791
    %v2446 = vpop.f32.mrf.mxu0
    %v2447 = vadd.f32 %v2434, %v2446
    %v2448 = vpop.f32.mrf.mxu0
    %2449 = vdwg.mxu0
    %2450 = vmatpush.bf16.msra.mxu0 %v1892
    %2451 = vmatpush.bf16.msra.mxu0 %v1884
    %2452 = vmatpush.bf16.msra.mxu0 %v1876
    %2453 = vmatpush.bf16.msra.mxu0 %v1868
    %2454 = vmatpush.bf16.msra.mxu0 %v1860
    %2455 = vmatpush.bf16.msra.mxu0 %v1852
    %2456 = vmatpush.bf16.msra.mxu0 %v1844
    %2457 = vmatpush.bf16.msra.mxu0 %v1836
    %2458 = vmatmul.bf16.gmra.mxu0 %v788
    %v2459 = vpop.f32.mrf.mxu0
    %v2460 = vadd.f32 %v1052, %v2459
    %v2461 = vpop.f32.mrf.mxu0
    %2462 = vdwg.mxu0
    %2463 = vmatpush.bf16.msra.mxu0 %v1956
    %2464 = vmatpush.bf16.msra.mxu0 %v1948
    %2465 = vmatpush.bf16.msra.mxu0 %v1940
    %2466 = vmatpush.bf16.msra.mxu0 %v1932
    %2467 = vmatpush.bf16.msra.mxu0 %v1924
    %2468 = vmatpush.bf16.msra.mxu0 %v1916
    %2469 = vmatpush.bf16.msra.mxu0 %v1908
    %2470 = vmatpush.bf16.msra.mxu0 %v1900
    %2471 = vmatmul.bf16.gmra.mxu0 %v789
    %v2472 = vpop.f32.mrf.mxu0
    %v2473 = vadd.f32 %v2460, %v2472
    %v2474 = vpop.f32.mrf.mxu0
    %2475 = vdwg.mxu0
    %2476 = vmatpush.bf16.msra.mxu0 %v2020
    %2477 = vmatpush.bf16.msra.mxu0 %v2012
    %2478 = vmatpush.bf16.msra.mxu0 %v2004
    %2479 = vmatpush.bf16.msra.mxu0 %v1996
    %2480 = vmatpush.bf16.msra.mxu0 %v1988
    %2481 = vmatpush.bf16.msra.mxu0 %v1980
    %2482 = vmatpush.bf16.msra.mxu0 %v1972
    %2483 = vmatpush.bf16.msra.mxu0 %v1964
    %2484 = vmatmul.bf16.gmra.mxu0 %v790
    %v2485 = vpop.f32.mrf.mxu0
    %v2486 = vadd.f32 %v2473, %v2485
    %v2487 = vpop.f32.mrf.mxu0
    %2488 = vdwg.mxu0
    %2489 = vmatpush.bf16.msra.mxu0 %v2084
    %2490 = vmatpush.bf16.msra.mxu0 %v2076
    %2491 = vmatpush.bf16.msra.mxu0 %v2068
    %2492 = vmatpush.bf16.msra.mxu0 %v2060
    %2493 = vmatpush.bf16.msra.mxu0 %v2052
    %2494 = vmatpush.bf16.msra.mxu0 %v2044
    %2495 = vmatpush.bf16.msra.mxu0 %v2036
    %2496 = vmatpush.bf16.msra.mxu0 %v2028
    %2497 = vmatmul.bf16.gmra.mxu0 %v791
    %v2498 = vpop.f32.mrf.mxu0
    %v2499 = vadd.f32 %v2486, %v2498
    %v2500 = vpop.f32.mrf.mxu0
    %2501 = vdwg.mxu0
    %2502 = vmatpush.bf16.msra.mxu0 %v1893
    %2503 = vmatpush.bf16.msra.mxu0 %v1885
    %2504 = vmatpush.bf16.msra.mxu0 %v1877
    %2505 = vmatpush.bf16.msra.mxu0 %v1869
    %2506 = vmatpush.bf16.msra.mxu0 %v1861
    %2507 = vmatpush.bf16.msra.mxu0 %v1853
    %2508 = vmatpush.bf16.msra.mxu0 %v1845
    %2509 = vmatpush.bf16.msra.mxu0 %v1837
    %2510 = vmatmul.bf16.gmra.mxu0 %v788
    %v2511 = vpop.f32.mrf.mxu0
    %v2512 = vadd.f32 %v1053, %v2511
    %v2513 = vpop.f32.mrf.mxu0
    %2514 = vdwg.mxu0
    %2515 = vmatpush.bf16.msra.mxu0 %v1957
    %2516 = vmatpush.bf16.msra.mxu0 %v1949
    %2517 = vmatpush.bf16.msra.mxu0 %v1941
    %2518 = vmatpush.bf16.msra.mxu0 %v1933
    %2519 = vmatpush.bf16.msra.mxu0 %v1925
    %2520 = vmatpush.bf16.msra.mxu0 %v1917
    %2521 = vmatpush.bf16.msra.mxu0 %v1909
    %2522 = vmatpush.bf16.msra.mxu0 %v1901
    %2523 = vmatmul.bf16.gmra.mxu0 %v789
    %v2524 = vpop.f32.mrf.mxu0
    %v2525 = vadd.f32 %v2512, %v2524
    %v2526 = vpop.f32.mrf.mxu0
    %2527 = vdwg.mxu0
    %2528 = vmatpush.bf16.msra.mxu0 %v2021
    %2529 = vmatpush.bf16.msra.mxu0 %v2013
    %2530 = vmatpush.bf16.msra.mxu0 %v2005
    %2531 = vmatpush.bf16.msra.mxu0 %v1997
    %2532 = vmatpush.bf16.msra.mxu0 %v1989
    %2533 = vmatpush.bf16.msra.mxu0 %v1981
    %2534 = vmatpush.bf16.msra.mxu0 %v1973
    %2535 = vmatpush.bf16.msra.mxu0 %v1965
    %2536 = vmatmul.bf16.gmra.mxu0 %v790
    %v2537 = vpop.f32.mrf.mxu0
    %v2538 = vadd.f32 %v2525, %v2537
    %v2539 = vpop.f32.mrf.mxu0
    %2540 = vdwg.mxu0
    %2541 = vmatpush.bf16.msra.mxu0 %v2085
    %2542 = vmatpush.bf16.msra.mxu0 %v2077
    %2543 = vmatpush.bf16.msra.mxu0 %v2069
    %2544 = vmatpush.bf16.msra.mxu0 %v2061
    %2545 = vmatpush.bf16.msra.mxu0 %v2053
    %2546 = vmatpush.bf16.msra.mxu0 %v2045
    %2547 = vmatpush.bf16.msra.mxu0 %v2037
    %2548 = vmatpush.bf16.msra.mxu0 %v2029
    %2549 = vmatmul.bf16.gmra.mxu0 %v791
    %v2550 = vpop.f32.mrf.mxu0
    %v2551 = vadd.f32 %v2538, %v2550
    %v2552 = vpop.f32.mrf.mxu0
    %2553 = vdwg.mxu0
    %2554 = vmatpush.bf16.msra.mxu0 %v1894
    %2555 = vmatpush.bf16.msra.mxu0 %v1886
    %2556 = vmatpush.bf16.msra.mxu0 %v1878
    %2557 = vmatpush.bf16.msra.mxu0 %v1870
    %2558 = vmatpush.bf16.msra.mxu0 %v1862
    %2559 = vmatpush.bf16.msra.mxu0 %v1854
    %2560 = vmatpush.bf16.msra.mxu0 %v1846
    %2561 = vmatpush.bf16.msra.mxu0 %v1838
    %2562 = vmatmul.bf16.gmra.mxu0 %v788
    %v2563 = vpop.f32.mrf.mxu0
    %v2564 = vadd.f32 %v1054, %v2563
    %v2565 = vpop.f32.mrf.mxu0
    %2566 = vdwg.mxu0
    %2567 = vmatpush.bf16.msra.mxu0 %v1958
    %2568 = vmatpush.bf16.msra.mxu0 %v1950
    %2569 = vmatpush.bf16.msra.mxu0 %v1942
    %2570 = vmatpush.bf16.msra.mxu0 %v1934
    %2571 = vmatpush.bf16.msra.mxu0 %v1926
    %2572 = vmatpush.bf16.msra.mxu0 %v1918
    %2573 = vmatpush.bf16.msra.mxu0 %v1910
    %2574 = vmatpush.bf16.msra.mxu0 %v1902
    %2575 = vmatmul.bf16.gmra.mxu0 %v789
    %v2576 = vpop.f32.mrf.mxu0
    %v2577 = vadd.f32 %v2564, %v2576
    %v2578 = vpop.f32.mrf.mxu0
    %2579 = vdwg.mxu0
    %2580 = vmatpush.bf16.msra.mxu0 %v2022
    %2581 = vmatpush.bf16.msra.mxu0 %v2014
    %2582 = vmatpush.bf16.msra.mxu0 %v2006
    %2583 = vmatpush.bf16.msra.mxu0 %v1998
    %2584 = vmatpush.bf16.msra.mxu0 %v1990
    %2585 = vmatpush.bf16.msra.mxu0 %v1982
    %2586 = vmatpush.bf16.msra.mxu0 %v1974
    %2587 = vmatpush.bf16.msra.mxu0 %v1966
    %2588 = vmatmul.bf16.gmra.mxu0 %v790
    %v2589 = vpop.f32.mrf.mxu0
    %v2590 = vadd.f32 %v2577, %v2589
    %v2591 = vpop.f32.mrf.mxu0
    %2592 = vdwg.mxu0
    %2593 = vmatpush.bf16.msra.mxu0 %v2086
    %2594 = vmatpush.bf16.msra.mxu0 %v2078
    %2595 = vmatpush.bf16.msra.mxu0 %v2070
    %2596 = vmatpush.bf16.msra.mxu0 %v2062
    %2597 = vmatpush.bf16.msra.mxu0 %v2054
    %2598 = vmatpush.bf16.msra.mxu0 %v2046
    %2599 = vmatpush.bf16.msra.mxu0 %v2038
    %2600 = vmatpush.bf16.msra.mxu0 %v2030
    %2601 = vmatmul.bf16.gmra.mxu0 %v791
    %v2602 = vpop.f32.mrf.mxu0
    %v2603 = vadd.f32 %v2590, %v2602
    %v2604 = vpop.f32.mrf.mxu0
    %2605 = vdwg.mxu0
    %2606 = vmatpush.bf16.msra.mxu0 %v1895
    %2607 = vmatpush.bf16.msra.mxu0 %v1887
    %2608 = vmatpush.bf16.msra.mxu0 %v1879
    %2609 = vmatpush.bf16.msra.mxu0 %v1871
    %2610 = vmatpush.bf16.msra.mxu0 %v1863
    %2611 = vmatpush.bf16.msra.mxu0 %v1855
    %2612 = vmatpush.bf16.msra.mxu0 %v1847
    %2613 = vmatpush.bf16.msra.mxu0 %v1839
    %2614 = vmatmul.bf16.gmra.mxu0 %v788
    %v2615 = vpop.f32.mrf.mxu0
    %v2616 = vadd.f32 %v1055, %v2615
    %v2617 = vpop.f32.mrf.mxu0
    %2618 = vdwg.mxu0
    %2619 = vmatpush.bf16.msra.mxu0 %v1959
    %2620 = vmatpush.bf16.msra.mxu0 %v1951
    %2621 = vmatpush.bf16.msra.mxu0 %v1943
    %2622 = vmatpush.bf16.msra.mxu0 %v1935
    %2623 = vmatpush.bf16.msra.mxu0 %v1927
    %2624 = vmatpush.bf16.msra.mxu0 %v1919
    %2625 = vmatpush.bf16.msra.mxu0 %v1911
    %2626 = vmatpush.bf16.msra.mxu0 %v1903
    %2627 = vmatmul.bf16.gmra.mxu0 %v789
    %v2628 = vpop.f32.mrf.mxu0
    %v2629 = vadd.f32 %v2616, %v2628
    %v2630 = vpop.f32.mrf.mxu0
    %2631 = vdwg.mxu0
    %2632 = vmatpush.bf16.msra.mxu0 %v2023
    %2633 = vmatpush.bf16.msra.mxu0 %v2015
    %2634 = vmatpush.bf16.msra.mxu0 %v2007
    %2635 = vmatpush.bf16.msra.mxu0 %v1999
    %2636 = vmatpush.bf16.msra.mxu0 %v1991
    %2637 = vmatpush.bf16.msra.mxu0 %v1983
    %2638 = vmatpush.bf16.msra.mxu0 %v1975
    %2639 = vmatpush.bf16.msra.mxu0 %v1967
    %2640 = vmatmul.bf16.gmra.mxu0 %v790
    %v2641 = vpop.f32.mrf.mxu0
    %v2642 = vadd.f32 %v2629, %v2641
    %v2643 = vpop.f32.mrf.mxu0
    %2644 = vdwg.mxu0
    %2645 = vmatpush.bf16.msra.mxu0 %v2087
    %2646 = vmatpush.bf16.msra.mxu0 %v2079
    %2647 = vmatpush.bf16.msra.mxu0 %v2071
    %2648 = vmatpush.bf16.msra.mxu0 %v2063
    %2649 = vmatpush.bf16.msra.mxu0 %v2055
    %2650 = vmatpush.bf16.msra.mxu0 %v2047
    %2651 = vmatpush.bf16.msra.mxu0 %v2039
    %2652 = vmatpush.bf16.msra.mxu0 %v2031
    %2653 = vmatmul.bf16.gmra.mxu0 %v791
    %v2654 = vpop.f32.mrf.mxu0
    %v2655 = vadd.f32 %v2642, %v2654
    %v2656 = vpop.f32.mrf.mxu0
    %2657 = vdwg.mxu0
    %2658 = vmatpush.bf16.msra.mxu0 %v1896
    %2659 = vmatpush.bf16.msra.mxu0 %v1888
    %2660 = vmatpush.bf16.msra.mxu0 %v1880
    %2661 = vmatpush.bf16.msra.mxu0 %v1872
    %2662 = vmatpush.bf16.msra.mxu0 %v1864
    %2663 = vmatpush.bf16.msra.mxu0 %v1856
    %2664 = vmatpush.bf16.msra.mxu0 %v1848
    %2665 = vmatpush.bf16.msra.mxu0 %v1840
    %2666 = vmatmul.bf16.gmra.mxu0 %v788
    %v2667 = vpop.f32.mrf.mxu0
    %v2668 = vadd.f32 %v1056, %v2667
    %v2669 = vpop.f32.mrf.mxu0
    %2670 = vdwg.mxu0
    %2671 = vmatpush.bf16.msra.mxu0 %v1960
    %2672 = vmatpush.bf16.msra.mxu0 %v1952
    %2673 = vmatpush.bf16.msra.mxu0 %v1944
    %2674 = vmatpush.bf16.msra.mxu0 %v1936
    %2675 = vmatpush.bf16.msra.mxu0 %v1928
    %2676 = vmatpush.bf16.msra.mxu0 %v1920
    %2677 = vmatpush.bf16.msra.mxu0 %v1912
    %2678 = vmatpush.bf16.msra.mxu0 %v1904
    %2679 = vmatmul.bf16.gmra.mxu0 %v789
    %v2680 = vpop.f32.mrf.mxu0
    %v2681 = vadd.f32 %v2668, %v2680
    %v2682 = vpop.f32.mrf.mxu0
    %2683 = vdwg.mxu0
    %2684 = vmatpush.bf16.msra.mxu0 %v2024
    %2685 = vmatpush.bf16.msra.mxu0 %v2016
    %2686 = vmatpush.bf16.msra.mxu0 %v2008
    %2687 = vmatpush.bf16.msra.mxu0 %v2000
    %2688 = vmatpush.bf16.msra.mxu0 %v1992
    %2689 = vmatpush.bf16.msra.mxu0 %v1984
    %2690 = vmatpush.bf16.msra.mxu0 %v1976
    %2691 = vmatpush.bf16.msra.mxu0 %v1968
    %2692 = vmatmul.bf16.gmra.mxu0 %v790
    %v2693 = vpop.f32.mrf.mxu0
    %v2694 = vadd.f32 %v2681, %v2693
    %v2695 = vpop.f32.mrf.mxu0
    %2696 = vdwg.mxu0
    %2697 = vmatpush.bf16.msra.mxu0 %v2088
    %2698 = vmatpush.bf16.msra.mxu0 %v2080
    %2699 = vmatpush.bf16.msra.mxu0 %v2072
    %2700 = vmatpush.bf16.msra.mxu0 %v2064
    %2701 = vmatpush.bf16.msra.mxu0 %v2056
    %2702 = vmatpush.bf16.msra.mxu0 %v2048
    %2703 = vmatpush.bf16.msra.mxu0 %v2040
    %2704 = vmatpush.bf16.msra.mxu0 %v2032
    %2705 = vmatmul.bf16.gmra.mxu0 %v791
    %v2706 = vpop.f32.mrf.mxu0
    %v2707 = vadd.f32 %v2694, %v2706
    %v2708 = vpop.f32.mrf.mxu0
    %2709 = vdwg.mxu0
    %2710 = vmatpush.bf16.msra.mxu0 %v1897
    %2711 = vmatpush.bf16.msra.mxu0 %v1889
    %2712 = vmatpush.bf16.msra.mxu0 %v1881
    %2713 = vmatpush.bf16.msra.mxu0 %v1873
    %2714 = vmatpush.bf16.msra.mxu0 %v1865
    %2715 = vmatpush.bf16.msra.mxu0 %v1857
    %2716 = vmatpush.bf16.msra.mxu0 %v1849
    %2717 = vmatpush.bf16.msra.mxu0 %v1841
    %2718 = vmatmul.bf16.gmra.mxu0 %v788
    %v2719 = vpop.f32.mrf.mxu0
    %v2720 = vadd.f32 %v1057, %v2719
    %v2721 = vpop.f32.mrf.mxu0
    %2722 = vdwg.mxu0
    %2723 = vmatpush.bf16.msra.mxu0 %v1961
    %2724 = vmatpush.bf16.msra.mxu0 %v1953
    %2725 = vmatpush.bf16.msra.mxu0 %v1945
    %2726 = vmatpush.bf16.msra.mxu0 %v1937
    %2727 = vmatpush.bf16.msra.mxu0 %v1929
    %2728 = vmatpush.bf16.msra.mxu0 %v1921
    %2729 = vmatpush.bf16.msra.mxu0 %v1913
    %2730 = vmatpush.bf16.msra.mxu0 %v1905
    %2731 = vmatmul.bf16.gmra.mxu0 %v789
    %v2732 = vpop.f32.mrf.mxu0
    %v2733 = vadd.f32 %v2720, %v2732
    %v2734 = vpop.f32.mrf.mxu0
    %2735 = vdwg.mxu0
    %2736 = vmatpush.bf16.msra.mxu0 %v2025
    %2737 = vmatpush.bf16.msra.mxu0 %v2017
    %2738 = vmatpush.bf16.msra.mxu0 %v2009
    %2739 = vmatpush.bf16.msra.mxu0 %v2001
    %2740 = vmatpush.bf16.msra.mxu0 %v1993
    %2741 = vmatpush.bf16.msra.mxu0 %v1985
    %2742 = vmatpush.bf16.msra.mxu0 %v1977
    %2743 = vmatpush.bf16.msra.mxu0 %v1969
    %2744 = vmatmul.bf16.gmra.mxu0 %v790
    %v2745 = vpop.f32.mrf.mxu0
    %v2746 = vadd.f32 %v2733, %v2745
    %v2747 = vpop.f32.mrf.mxu0
    %2748 = vdwg.mxu0
    %2749 = vmatpush.bf16.msra.mxu0 %v2089
    %2750 = vmatpush.bf16.msra.mxu0 %v2081
    %2751 = vmatpush.bf16.msra.mxu0 %v2073
    %2752 = vmatpush.bf16.msra.mxu0 %v2065
    %2753 = vmatpush.bf16.msra.mxu0 %v2057
    %2754 = vmatpush.bf16.msra.mxu0 %v2049
    %2755 = vmatpush.bf16.msra.mxu0 %v2041
    %2756 = vmatpush.bf16.msra.mxu0 %v2033
    %2757 = vmatmul.bf16.gmra.mxu0 %v791
    %v2758 = vpop.f32.mrf.mxu0
    %v2759 = vadd.f32 %v2746, %v2758
    %v2760 = vpop.f32.mrf.mxu0
    %2761 = vdwg.mxu0
    %vm2762 = vcmp.gt.f32.partialorder %v2395, 0.0
    %vm2763 = vcmp.gt.f32.partialorder %v2447, 0.0
    %vm2764 = vcmp.gt.f32.partialorder %v2499, 0.0
    %vm2765 = vcmp.gt.f32.partialorder %v2551, 0.0
    %vm2766 = vcmp.gt.f32.partialorder %v2603, 0.0
    %vm2767 = vcmp.gt.f32.partialorder %v2655, 0.0
    %vm2768 = vcmp.gt.f32.partialorder %v2707, 0.0
    %vm2769 = vcmp.gt.f32.partialorder %v2759, 0.0
    %v2770 = vmul.f32 %v2395, 0.01
    %v2771 = vmul.f32 %v2447, 0.01
    %v2772 = vmul.f32 %v2499, 0.01
    %v2773 = vmul.f32 %v2551, 0.01
    %v2774 = vmul.f32 %v2603, 0.01
    %v2775 = vmul.f32 %v2655, 0.01
    %v2776 = vmul.f32 %v2707, 0.01
    %v2777 = vmul.f32 %v2759, 0.01
    %v2778 = vsel %vm2762, %v2395, %v2770
    %v2779 = vsel %vm2763, %v2447, %v2771
    %v2780 = vsel %vm2764, %v2499, %v2772
    %v2781 = vsel %vm2765, %v2551, %v2773
    %v2782 = vsel %vm2766, %v2603, %v2774
    %v2783 = vsel %vm2767, %v2655, %v2775
    %v2784 = vsel %vm2768, %v2707, %v2776
    %v2785 = vsel %vm2769, %v2759, %v2777
    %v2786 = vpack.c.bf16 %v2778, %v2778
    %v2787 = vpack.c.bf16 %v2779, %v2779
    %v2788 = vpack.c.bf16 %v2780, %v2780
    %v2789 = vpack.c.bf16 %v2781, %v2781
    %v2790 = vpack.c.bf16 %v2782, %v2782
    %v2791 = vpack.c.bf16 %v2783, %v2783
    %v2792 = vpack.c.bf16 %v2784, %v2784
    %v2793 = vpack.c.bf16 %v2785, %v2785
    %v2794 = vld [vmem:[#allocation13] sm:$0xff]
    %v2795 = vld [vmem:[#allocation13 + $0x8] sm:$0xff]
    %v2796 = vld [vmem:[#allocation13 + $0x10] sm:$0xff]
    %v2797 = vld [vmem:[#allocation13 + $0x18] sm:$0xf]
    %v2798 = vld [vmem:[#allocation13 + $0x1c] sm:$0xff]
    %v2799 = vld [vmem:[#allocation13 + $0x24] sm:$0xff]
    %v2800 = vld [vmem:[#allocation13 + $0x2c] sm:$0xff]
    %v2801 = vld [vmem:[#allocation13 + $0x34] sm:$0xf]
    %v2802 = vld [vmem:[#allocation13 + $0x38] sm:$0xff]
    %v2803 = vld [vmem:[#allocation13 + $0x40] sm:$0xff]
    %v2804 = vld [vmem:[#allocation13 + $0x48] sm:$0xff]
    %v2805 = vld [vmem:[#allocation13 + $0x50] sm:$0xf]
    %v2806 = vld [vmem:[#allocation13 + $0x54] sm:$0xff]
    %v2807 = vld [vmem:[#allocation13 + $0x5c] sm:$0xff]
    %v2808 = vld [vmem:[#allocation13 + $0x64] sm:$0xff]
    %v2809 = vld [vmem:[#allocation13 + $0x6c] sm:$0xf]
    %v2810 = vld [vmem:[#allocation13 + $0x70] sm:$0xff]
    %v2811 = vld [vmem:[#allocation13 + $0x78] sm:$0xff]
    %v2812 = vld [vmem:[#allocation13 + $0x80] sm:$0xff]
    %v2813 = vld [vmem:[#allocation13 + $0x88] sm:$0xf]
    %v2814 = vld [vmem:[#allocation13 + $0x8c] sm:$0xff]
    %v2815 = vld [vmem:[#allocation13 + $0x94] sm:$0xff]
    %v2816 = vld [vmem:[#allocation13 + $0x9c] sm:$0xff]
    %v2817 = vld [vmem:[#allocation13 + $0xa4] sm:$0xf]
    %v2818 = vld [vmem:[#allocation13 + $0xa8] sm:$0xff]
    %v2819 = vld [vmem:[#allocation13 + $0xb0] sm:$0xff]
    %v2820 = vld [vmem:[#allocation13 + $0xb8] sm:$0xff]
    %v2821 = vld [vmem:[#allocation13 + $0xc0] sm:$0xf]
    %v2822 = vld [vmem:[#allocation13 + $0xc4] sm:$0xff]
    %v2823 = vld [vmem:[#allocation13 + $0xcc] sm:$0xff]
    %v2824 = vld [vmem:[#allocation13 + $0xd4] sm:$0xff]
    %v2825 = vld [vmem:[#allocation13 + $0xdc] sm:$0xf]
    %v2826 = vld [vmem:[#allocation13 + $0xe0] sm:$0xff]
    %v2827 = vld [vmem:[#allocation13 + $0xe8] sm:$0xff]
    %v2828 = vld [vmem:[#allocation13 + $0xf0] sm:$0xff]
    %v2829 = vld [vmem:[#allocation13 + $0xf8] sm:$0xf]
    %v2830 = vld [vmem:[#allocation13 + $0xfc] sm:$0xff]
    %v2831 = vld [vmem:[#allocation13 + $0x104] sm:$0xff]
    %v2832 = vld [vmem:[#allocation13 + $0x10c] sm:$0xff]
    %v2833 = vld [vmem:[#allocation13 + $0x114] sm:$0xf]
    %v2834 = vld [vmem:[#allocation13 + $0x118] sm:$0xff]
    %v2835 = vld [vmem:[#allocation13 + $0x120] sm:$0xff]
    %v2836 = vld [vmem:[#allocation13 + $0x128] sm:$0xff]
    %v2837 = vld [vmem:[#allocation13 + $0x130] sm:$0xf]
    %v2838 = vld [vmem:[#allocation13 + $0x134] sm:$0xff]
    %v2839 = vld [vmem:[#allocation13 + $0x13c] sm:$0xff]
    %v2840 = vld [vmem:[#allocation13 + $0x144] sm:$0xff]
    %v2841 = vld [vmem:[#allocation13 + $0x14c] sm:$0xf]
    %v2842 = vld [vmem:[#allocation13 + $0x150] sm:$0xff]
    %v2843 = vld [vmem:[#allocation13 + $0x158] sm:$0xff]
    %v2844 = vld [vmem:[#allocation13 + $0x160] sm:$0xff]
    %v2845 = vld [vmem:[#allocation13 + $0x168] sm:$0xf]
    %v2846 = vld [vmem:[#allocation13 + $0x16c] sm:$0xff]
    %v2847 = vld [vmem:[#allocation13 + $0x174] sm:$0xff]
    %v2848 = vld [vmem:[#allocation13 + $0x17c] sm:$0xff]
    %v2849 = vld [vmem:[#allocation13 + $0x184] sm:$0xf]
    %v2850 = vld [vmem:[#allocation13 + $0x188] sm:$0xff]
    %v2851 = vld [vmem:[#allocation13 + $0x190] sm:$0xff]
    %v2852 = vld [vmem:[#allocation13 + $0x198] sm:$0xff]
    %v2853 = vld [vmem:[#allocation13 + $0x1a0] sm:$0xf]
    %v2854 = vld [vmem:[#allocation13 + $0x1a4] sm:$0xff]
    %v2855 = vld [vmem:[#allocation13 + $0x1ac] sm:$0xff]
    %v2856 = vld [vmem:[#allocation13 + $0x1b4] sm:$0xff]
    %v2857 = vld [vmem:[#allocation13 + $0x1bc] sm:$0xf]
    %v2858 = vld [vmem:[#allocation13 + $0x1c0] sm:$0xff]
    %v2859 = vld [vmem:[#allocation13 + $0x1c8] sm:$0xff]
    %v2860 = vld [vmem:[#allocation13 + $0x1d0] sm:$0xff]
    %v2861 = vld [vmem:[#allocation13 + $0x1d8] sm:$0xf]
    %v2862 = vld [vmem:[#allocation13 + $0x1dc] sm:$0xff]
    %v2863 = vld [vmem:[#allocation13 + $0x1e4] sm:$0xff]
    %v2864 = vld [vmem:[#allocation13 + $0x1ec] sm:$0xff]
    %v2865 = vld [vmem:[#allocation13 + $0x1f4] sm:$0xf]
    %v2866 = vld [vmem:[#allocation13 + $0x1f8] sm:$0xff]
    %v2867 = vld [vmem:[#allocation13 + $0x200] sm:$0xff]
    %v2868 = vld [vmem:[#allocation13 + $0x208] sm:$0xff]
    %v2869 = vld [vmem:[#allocation13 + $0x210] sm:$0xf]
    %v2870 = vld [vmem:[#allocation13 + $0x214] sm:$0xff]
    %v2871 = vld [vmem:[#allocation13 + $0x21c] sm:$0xff]
    %v2872 = vld [vmem:[#allocation13 + $0x224] sm:$0xff]
    %v2873 = vld [vmem:[#allocation13 + $0x22c] sm:$0xf]
    %v2874 = vld [vmem:[#allocation13 + $0x230] sm:$0xff]
    %v2875 = vld [vmem:[#allocation13 + $0x238] sm:$0xff]
    %v2876 = vld [vmem:[#allocation13 + $0x240] sm:$0xff]
    %v2877 = vld [vmem:[#allocation13 + $0x248] sm:$0xf]
    %v2878 = vld [vmem:[#allocation13 + $0x24c] sm:$0xff]
    %v2879 = vld [vmem:[#allocation13 + $0x254] sm:$0xff]
    %v2880 = vld [vmem:[#allocation13 + $0x25c] sm:$0xff]
    %v2881 = vld [vmem:[#allocation13 + $0x264] sm:$0xf]
    %v2882 = vld [vmem:[#allocation13 + $0x268] sm:$0xff]
    %v2883 = vld [vmem:[#allocation13 + $0x270] sm:$0xff]
    %v2884 = vld [vmem:[#allocation13 + $0x278] sm:$0xff]
    %v2885 = vld [vmem:[#allocation13 + $0x280] sm:$0xf]
    %v2886 = vld [vmem:[#allocation13 + $0x284] sm:$0xff]
    %v2887 = vld [vmem:[#allocation13 + $0x28c] sm:$0xff]
    %v2888 = vld [vmem:[#allocation13 + $0x294] sm:$0xff]
    %v2889 = vld [vmem:[#allocation13 + $0x29c] sm:$0xf]
    %v2890 = vld [vmem:[#allocation13 + $0x2a0] sm:$0xff]
    %v2891 = vld [vmem:[#allocation13 + $0x2a8] sm:$0xff]
    %v2892 = vld [vmem:[#allocation13 + $0x2b0] sm:$0xff]
    %v2893 = vld [vmem:[#allocation13 + $0x2b8] sm:$0xf]
    %v2894 = vld [vmem:[#allocation13 + $0x2bc] sm:$0xff]
    %v2895 = vld [vmem:[#allocation13 + $0x2c4] sm:$0xff]
    %v2896 = vld [vmem:[#allocation13 + $0x2cc] sm:$0xff]
    %v2897 = vld [vmem:[#allocation13 + $0x2d4] sm:$0xf]
    %v2898 = vld [vmem:[#allocation13 + $0x2d8] sm:$0xff]
    %v2899 = vld [vmem:[#allocation13 + $0x2e0] sm:$0xff]
    %v2900 = vld [vmem:[#allocation13 + $0x2e8] sm:$0xff]
    %v2901 = vld [vmem:[#allocation13 + $0x2f0] sm:$0xf]
    %v2902 = vld [vmem:[#allocation13 + $0x2f4] sm:$0xff]
    %v2903 = vld [vmem:[#allocation13 + $0x2fc] sm:$0xff]
    %v2904 = vld [vmem:[#allocation13 + $0x304] sm:$0xff]
    %v2905 = vld [vmem:[#allocation13 + $0x30c] sm:$0xf]
    %v2906 = vld [vmem:[#allocation13 + $0x310] sm:$0xff]
    %v2907 = vld [vmem:[#allocation13 + $0x318] sm:$0xff]
    %v2908 = vld [vmem:[#allocation13 + $0x320] sm:$0xff]
    %v2909 = vld [vmem:[#allocation13 + $0x328] sm:$0xf]
    %v2910 = vld [vmem:[#allocation13 + $0x32c] sm:$0xff]
    %v2911 = vld [vmem:[#allocation13 + $0x334] sm:$0xff]
    %v2912 = vld [vmem:[#allocation13 + $0x33c] sm:$0xff]
    %v2913 = vld [vmem:[#allocation13 + $0x344] sm:$0xf]
    %v2914 = vld [vmem:[#allocation13 + $0x348] sm:$0xff]
    %v2915 = vld [vmem:[#allocation13 + $0x350] sm:$0xff]
    %v2916 = vld [vmem:[#allocation13 + $0x358] sm:$0xff]
    %v2917 = vld [vmem:[#allocation13 + $0x360] sm:$0xf]
    %v2918 = vld [vmem:[#allocation13 + $0x364] sm:$0xff]
    %v2919 = vld [vmem:[#allocation13 + $0x36c] sm:$0xff]
    %v2920 = vld [vmem:[#allocation13 + $0x374] sm:$0xff]
    %v2921 = vld [vmem:[#allocation13 + $0x37c] sm:$0xf]
    %v2922 = vld [vmem:[#allocation13 + $0x380] sm:$0xff]
    %v2923 = vld [vmem:[#allocation13 + $0x388] sm:$0xff]
    %v2924 = vld [vmem:[#allocation13 + $0x390] sm:$0xff]
    %v2925 = vld [vmem:[#allocation13 + $0x398] sm:$0xf]
    %v2926 = vld [vmem:[#allocation13 + $0x39c] sm:$0xff]
    %v2927 = vld [vmem:[#allocation13 + $0x3a4] sm:$0xff]
    %v2928 = vld [vmem:[#allocation13 + $0x3ac] sm:$0xff]
    %v2929 = vld [vmem:[#allocation13 + $0x3b4] sm:$0xf]
    %v2930 = vld [vmem:[#allocation13 + $0x3b8] sm:$0xff]
    %v2931 = vld [vmem:[#allocation13 + $0x3c0] sm:$0xff]
    %v2932 = vld [vmem:[#allocation13 + $0x3c8] sm:$0xff]
    %v2933 = vld [vmem:[#allocation13 + $0x3d0] sm:$0xf]
    %v2934 = vld [vmem:[#allocation13 + $0x3d4] sm:$0xff]
    %v2935 = vld [vmem:[#allocation13 + $0x3dc] sm:$0xff]
    %v2936 = vld [vmem:[#allocation13 + $0x3e4] sm:$0xff]
    %v2937 = vld [vmem:[#allocation13 + $0x3ec] sm:$0xf]
    %v2938 = vld [vmem:[#allocation13 + $0x3f0] sm:$0xff]
    %v2939 = vld [vmem:[#allocation13 + $0x3f8] sm:$0xff]
    %v2940 = vld [vmem:[#allocation13 + $0x400] sm:$0xff]
    %v2941 = vld [vmem:[#allocation13 + $0x408] sm:$0xf]
    %v2942 = vld [vmem:[#allocation13 + $0x40c] sm:$0xff]
    %v2943 = vld [vmem:[#allocation13 + $0x414] sm:$0xff]
    %v2944 = vld [vmem:[#allocation13 + $0x41c] sm:$0xff]
    %v2945 = vld [vmem:[#allocation13 + $0x424] sm:$0xf]
    %v2946 = vld [vmem:[#allocation13 + $0x428] sm:$0xff]
    %v2947 = vld [vmem:[#allocation13 + $0x430] sm:$0xff]
    %v2948 = vld [vmem:[#allocation13 + $0x438] sm:$0xff]
    %v2949 = vld [vmem:[#allocation13 + $0x440] sm:$0xf]
    %v2950 = vld [vmem:[#allocation13 + $0x444] sm:$0xff]
    %v2951 = vld [vmem:[#allocation13 + $0x44c] sm:$0xff]
    %v2952 = vld [vmem:[#allocation13 + $0x454] sm:$0xff]
    %v2953 = vld [vmem:[#allocation13 + $0x45c] sm:$0xf]
    %v2954 = vld [vmem:[#allocation13 + $0x460] sm:$0xff]
    %v2955 = vld [vmem:[#allocation13 + $0x468] sm:$0xff]
    %v2956 = vld [vmem:[#allocation13 + $0x470] sm:$0xff]
    %v2957 = vld [vmem:[#allocation13 + $0x478] sm:$0xf]
    %v2958 = vld [vmem:[#allocation13 + $0x47c] sm:$0xff]
    %v2959 = vld [vmem:[#allocation13 + $0x484] sm:$0xff]
    %v2960 = vld [vmem:[#allocation13 + $0x48c] sm:$0xff]
    %v2961 = vld [vmem:[#allocation13 + $0x494] sm:$0xf]
    %v2962 = vld [vmem:[#allocation13 + $0x498] sm:$0xff]
    %v2963 = vld [vmem:[#allocation13 + $0x4a0] sm:$0xff]
    %v2964 = vld [vmem:[#allocation13 + $0x4a8] sm:$0xff]
    %v2965 = vld [vmem:[#allocation13 + $0x4b0] sm:$0xf]
    %v2966 = vld [vmem:[#allocation13 + $0x4b4] sm:$0xff]
    %v2967 = vld [vmem:[#allocation13 + $0x4bc] sm:$0xff]
    %v2968 = vld [vmem:[#allocation13 + $0x4c4] sm:$0xff]
    %v2969 = vld [vmem:[#allocation13 + $0x4cc] sm:$0xf]
    %v2970 = vld [vmem:[#allocation13 + $0x4d0] sm:$0xff]
    %v2971 = vld [vmem:[#allocation13 + $0x4d8] sm:$0xff]
    %v2972 = vld [vmem:[#allocation13 + $0x4e0] sm:$0xff]
    %v2973 = vld [vmem:[#allocation13 + $0x4e8] sm:$0xf]
    %v2974 = vld [vmem:[#allocation13 + $0x4ec] sm:$0xff]
    %v2975 = vld [vmem:[#allocation13 + $0x4f4] sm:$0xff]
    %v2976 = vld [vmem:[#allocation13 + $0x4fc] sm:$0xff]
    %v2977 = vld [vmem:[#allocation13 + $0x504] sm:$0xf]
    %v2978 = vld [vmem:[#allocation13 + $0x508] sm:$0xff]
    %v2979 = vld [vmem:[#allocation13 + $0x510] sm:$0xff]
    %v2980 = vld [vmem:[#allocation13 + $0x518] sm:$0xff]
    %v2981 = vld [vmem:[#allocation13 + $0x520] sm:$0xf]
    %v2982 = vld [vmem:[#allocation13 + $0x524] sm:$0xff]
    %v2983 = vld [vmem:[#allocation13 + $0x52c] sm:$0xff]
    %v2984 = vld [vmem:[#allocation13 + $0x534] sm:$0xff]
    %v2985 = vld [vmem:[#allocation13 + $0x53c] sm:$0xf]
    %v2986 = vld [vmem:[#allocation13 + $0x540] sm:$0xff]
    %v2987 = vld [vmem:[#allocation13 + $0x548] sm:$0xff]
    %v2988 = vld [vmem:[#allocation13 + $0x550] sm:$0xff]
    %v2989 = vld [vmem:[#allocation13 + $0x558] sm:$0xf]
    %v2990 = vld [vmem:[#allocation13 + $0x55c] sm:$0xff]
    %v2991 = vld [vmem:[#allocation13 + $0x564] sm:$0xff]
    %v2992 = vld [vmem:[#allocation13 + $0x56c] sm:$0xff]
    %v2993 = vld [vmem:[#allocation13 + $0x574] sm:$0xf]
    %v2994 = vld [vmem:[#allocation13 + $0x578] sm:$0xff]
    %v2995 = vld [vmem:[#allocation13 + $0x580] sm:$0xff]
    %v2996 = vld [vmem:[#allocation13 + $0x588] sm:$0xff]
    %v2997 = vld [vmem:[#allocation13 + $0x590] sm:$0xf]
    %v2998 = vld [vmem:[#allocation13 + $0x594] sm:$0xff]
    %v2999 = vld [vmem:[#allocation13 + $0x59c] sm:$0xff]
    %v3000 = vld [vmem:[#allocation13 + $0x5a4] sm:$0xff]
    %v3001 = vld [vmem:[#allocation13 + $0x5ac] sm:$0xf]
    %v3002 = vld [vmem:[#allocation13 + $0x5b0] sm:$0xff]
    %v3003 = vld [vmem:[#allocation13 + $0x5b8] sm:$0xff]
    %v3004 = vld [vmem:[#allocation13 + $0x5c0] sm:$0xff]
    %v3005 = vld [vmem:[#allocation13 + $0x5c8] sm:$0xf]
    %v3006 = vld [vmem:[#allocation13 + $0x5cc] sm:$0xff]
    %v3007 = vld [vmem:[#allocation13 + $0x5d4] sm:$0xff]
    %v3008 = vld [vmem:[#allocation13 + $0x5dc] sm:$0xff]
    %v3009 = vld [vmem:[#allocation13 + $0x5e4] sm:$0xf]
    %v3010 = vld [vmem:[#allocation13 + $0x5e8] sm:$0xff]
    %v3011 = vld [vmem:[#allocation13 + $0x5f0] sm:$0xff]
    %v3012 = vld [vmem:[#allocation13 + $0x5f8] sm:$0xff]
    %v3013 = vld [vmem:[#allocation13 + $0x600] sm:$0xf]
    %v3014 = vld [vmem:[#allocation13 + $0x604] sm:$0xff]
    %v3015 = vld [vmem:[#allocation13 + $0x60c] sm:$0xff]
    %v3016 = vld [vmem:[#allocation13 + $0x614] sm:$0xff]
    %v3017 = vld [vmem:[#allocation13 + $0x61c] sm:$0xf]
    %v3018 = vld [vmem:[#allocation13 + $0x620] sm:$0xff]
    %v3019 = vld [vmem:[#allocation13 + $0x628] sm:$0xff]
    %v3020 = vld [vmem:[#allocation13 + $0x630] sm:$0xff]
    %v3021 = vld [vmem:[#allocation13 + $0x638] sm:$0xf]
    %v3022 = vld [vmem:[#allocation13 + $0x63c] sm:$0xff]
    %v3023 = vld [vmem:[#allocation13 + $0x644] sm:$0xff]
    %v3024 = vld [vmem:[#allocation13 + $0x64c] sm:$0xff]
    %v3025 = vld [vmem:[#allocation13 + $0x654] sm:$0xf]
    %v3026 = vld [vmem:[#allocation13 + $0x658] sm:$0xff]
    %v3027 = vld [vmem:[#allocation13 + $0x660] sm:$0xff]
    %v3028 = vld [vmem:[#allocation13 + $0x668] sm:$0xff]
    %v3029 = vld [vmem:[#allocation13 + $0x670] sm:$0xf]
    %v3030 = vld [vmem:[#allocation13 + $0x674] sm:$0xff]
    %v3031 = vld [vmem:[#allocation13 + $0x67c] sm:$0xff]
    %v3032 = vld [vmem:[#allocation13 + $0x684] sm:$0xff]
    %v3033 = vld [vmem:[#allocation13 + $0x68c] sm:$0xf]
    %v3034 = vld [vmem:[#allocation13 + $0x690] sm:$0xff]
    %v3035 = vld [vmem:[#allocation13 + $0x698] sm:$0xff]
    %v3036 = vld [vmem:[#allocation13 + $0x6a0] sm:$0xff]
    %v3037 = vld [vmem:[#allocation13 + $0x6a8] sm:$0xf]
    %v3038 = vld [vmem:[#allocation13 + $0x6ac] sm:$0xff]
    %v3039 = vld [vmem:[#allocation13 + $0x6b4] sm:$0xff]
    %v3040 = vld [vmem:[#allocation13 + $0x6bc] sm:$0xff]
    %v3041 = vld [vmem:[#allocation13 + $0x6c4] sm:$0xf]
    %v3042 = vld [vmem:[#allocation13 + $0x6c8] sm:$0xff]
    %v3043 = vld [vmem:[#allocation13 + $0x6d0] sm:$0xff]
    %v3044 = vld [vmem:[#allocation13 + $0x6d8] sm:$0xff]
    %v3045 = vld [vmem:[#allocation13 + $0x6e0] sm:$0xf]
    %v3046 = vld [vmem:[#allocation13 + $0x6e4] sm:$0xff]
    %v3047 = vld [vmem:[#allocation13 + $0x6ec] sm:$0xff]
    %v3048 = vld [vmem:[#allocation13 + $0x6f4] sm:$0xff]
    %v3049 = vld [vmem:[#allocation13 + $0x6fc] sm:$0xf]
    %v3050 = vld [vmem:[#allocation13 + $0x700] sm:$0xff]
    %v3051 = vld [vmem:[#allocation13 + $0x708] sm:$0xff]
    %v3052 = vld [vmem:[#allocation13 + $0x710] sm:$0xff]
    %v3053 = vld [vmem:[#allocation13 + $0x718] sm:$0xf]
    %v3054 = vld [vmem:[#allocation13 + $0x71c] sm:$0xff]
    %v3055 = vld [vmem:[#allocation13 + $0x724] sm:$0xff]
    %v3056 = vld [vmem:[#allocation13 + $0x72c] sm:$0xff]
    %v3057 = vld [vmem:[#allocation13 + $0x734] sm:$0xf]
    %v3058 = vld [vmem:[#allocation13 + $0x738] sm:$0xff]
    %v3059 = vld [vmem:[#allocation13 + $0x740] sm:$0xff]
    %v3060 = vld [vmem:[#allocation13 + $0x748] sm:$0xff]
    %v3061 = vld [vmem:[#allocation13 + $0x750] sm:$0xf]
    %v3062 = vld [vmem:[#allocation13 + $0x754] sm:$0xff]
    %v3063 = vld [vmem:[#allocation13 + $0x75c] sm:$0xff]
    %v3064 = vld [vmem:[#allocation13 + $0x764] sm:$0xff]
    %v3065 = vld [vmem:[#allocation13 + $0x76c] sm:$0xf]
    %v3066 = vld [vmem:[#allocation13 + $0x770] sm:$0xff]
    %v3067 = vld [vmem:[#allocation13 + $0x778] sm:$0xff]
    %v3068 = vld [vmem:[#allocation13 + $0x780] sm:$0xff]
    %v3069 = vld [vmem:[#allocation13 + $0x788] sm:$0xf]
    %v3070 = vld [vmem:[#allocation13 + $0x78c] sm:$0xff]
    %v3071 = vld [vmem:[#allocation13 + $0x794] sm:$0xff]
    %v3072 = vld [vmem:[#allocation13 + $0x79c] sm:$0xff]
    %v3073 = vld [vmem:[#allocation13 + $0x7a4] sm:$0xf]
    %v3074 = vld [vmem:[#allocation13 + $0x7a8] sm:$0xff]
    %v3075 = vld [vmem:[#allocation13 + $0x7b0] sm:$0xff]
    %v3076 = vld [vmem:[#allocation13 + $0x7b8] sm:$0xff]
    %v3077 = vld [vmem:[#allocation13 + $0x7c0] sm:$0xf]
    %v3078 = vld [vmem:[#allocation13 + $0x7c4] sm:$0xff]
    %v3079 = vld [vmem:[#allocation13 + $0x7cc] sm:$0xff]
    %v3080 = vld [vmem:[#allocation13 + $0x7d4] sm:$0xff]
    %v3081 = vld [vmem:[#allocation13 + $0x7dc] sm:$0xf]
    %v3082 = vld [vmem:[#allocation13 + $0x7e0] sm:$0xff]
    %v3083 = vld [vmem:[#allocation13 + $0x7e8] sm:$0xff]
    %v3084 = vld [vmem:[#allocation13 + $0x7f0] sm:$0xff]
    %v3085 = vld [vmem:[#allocation13 + $0x7f8] sm:$0xf]
    %v3086 = vld [vmem:[#allocation13 + $0x7fc] sm:$0xff]
    %v3087 = vld [vmem:[#allocation13 + $0x804] sm:$0xff]
    %v3088 = vld [vmem:[#allocation13 + $0x80c] sm:$0xff]
    %v3089 = vld [vmem:[#allocation13 + $0x814] sm:$0xf]
    %v3090 = vld [vmem:[#allocation13 + $0x818] sm:$0xff]
    %v3091 = vld [vmem:[#allocation13 + $0x820] sm:$0xff]
    %v3092 = vld [vmem:[#allocation13 + $0x828] sm:$0xff]
    %v3093 = vld [vmem:[#allocation13 + $0x830] sm:$0xf]
    %v3094 = vld [vmem:[#allocation13 + $0x834] sm:$0xff]
    %v3095 = vld [vmem:[#allocation13 + $0x83c] sm:$0xff]
    %v3096 = vld [vmem:[#allocation13 + $0x844] sm:$0xff]
    %v3097 = vld [vmem:[#allocation13 + $0x84c] sm:$0xf]
    %v3098 = vld [vmem:[#allocation13 + $0x850] sm:$0xff]
    %v3099 = vld [vmem:[#allocation13 + $0x858] sm:$0xff]
    %v3100 = vld [vmem:[#allocation13 + $0x860] sm:$0xff]
    %v3101 = vld [vmem:[#allocation13 + $0x868] sm:$0xf]
    %v3102 = vld [vmem:[#allocation13 + $0x86c] sm:$0xff]
    %v3103 = vld [vmem:[#allocation13 + $0x874] sm:$0xff]
    %v3104 = vld [vmem:[#allocation13 + $0x87c] sm:$0xff]
    %v3105 = vld [vmem:[#allocation13 + $0x884] sm:$0xf]
    %v3106 = vld [vmem:[#allocation13 + $0x888] sm:$0xff]
    %v3107 = vld [vmem:[#allocation13 + $0x890] sm:$0xff]
    %v3108 = vld [vmem:[#allocation13 + $0x898] sm:$0xff]
    %v3109 = vld [vmem:[#allocation13 + $0x8a0] sm:$0xf]
    %v3110 = vld [vmem:[#allocation13 + $0x8a4] sm:$0xff]
    %v3111 = vld [vmem:[#allocation13 + $0x8ac] sm:$0xff]
    %v3112 = vld [vmem:[#allocation13 + $0x8b4] sm:$0xff]
    %v3113 = vld [vmem:[#allocation13 + $0x8bc] sm:$0xf]
    %v3114 = vld [vmem:[#allocation13 + $0x8c0] sm:$0xff]
    %v3115 = vld [vmem:[#allocation13 + $0x8c8] sm:$0xff]
    %v3116 = vld [vmem:[#allocation13 + $0x8d0] sm:$0xff]
    %v3117 = vld [vmem:[#allocation13 + $0x8d8] sm:$0xf]
    %v3118 = vld [vmem:[#allocation13 + $0x8dc] sm:$0xff]
    %v3119 = vld [vmem:[#allocation13 + $0x8e4] sm:$0xff]
    %v3120 = vld [vmem:[#allocation13 + $0x8ec] sm:$0xff]
    %v3121 = vld [vmem:[#allocation13 + $0x8f4] sm:$0xf]
    %v3122 = vld [vmem:[#allocation13 + $0x8f8] sm:$0xff]
    %v3123 = vld [vmem:[#allocation13 + $0x900] sm:$0xff]
    %v3124 = vld [vmem:[#allocation13 + $0x908] sm:$0xff]
    %v3125 = vld [vmem:[#allocation13 + $0x910] sm:$0xf]
    %v3126 = vld [vmem:[#allocation13 + $0x914] sm:$0xff]
    %v3127 = vld [vmem:[#allocation13 + $0x91c] sm:$0xff]
    %v3128 = vld [vmem:[#allocation13 + $0x924] sm:$0xff]
    %v3129 = vld [vmem:[#allocation13 + $0x92c] sm:$0xf]
    %v3130 = vld [vmem:[#allocation13 + $0x930] sm:$0xff]
    %v3131 = vld [vmem:[#allocation13 + $0x938] sm:$0xff]
    %v3132 = vld [vmem:[#allocation13 + $0x940] sm:$0xff]
    %v3133 = vld [vmem:[#allocation13 + $0x948] sm:$0xf]
    %v3134 = vld [vmem:[#allocation13 + $0x94c] sm:$0xff]
    %v3135 = vld [vmem:[#allocation13 + $0x954] sm:$0xff]
    %v3136 = vld [vmem:[#allocation13 + $0x95c] sm:$0xff]
    %v3137 = vld [vmem:[#allocation13 + $0x964] sm:$0xf]
    %v3138 = vld [vmem:[#allocation13 + $0x968] sm:$0xff]
    %v3139 = vld [vmem:[#allocation13 + $0x970] sm:$0xff]
    %v3140 = vld [vmem:[#allocation13 + $0x978] sm:$0xff]
    %v3141 = vld [vmem:[#allocation13 + $0x980] sm:$0xf]
    %v3142 = vld [vmem:[#allocation13 + $0x984] sm:$0xff]
    %v3143 = vld [vmem:[#allocation13 + $0x98c] sm:$0xff]
    %v3144 = vld [vmem:[#allocation13 + $0x994] sm:$0xff]
    %v3145 = vld [vmem:[#allocation13 + $0x99c] sm:$0xf]
    %v3146 = vld [vmem:[#allocation13 + $0x9a0] sm:$0xff]
    %v3147 = vld [vmem:[#allocation13 + $0x9a8] sm:$0xff]
    %v3148 = vld [vmem:[#allocation13 + $0x9b0] sm:$0xff]
    %v3149 = vld [vmem:[#allocation13 + $0x9b8] sm:$0xf]
    %v3150 = vld [vmem:[#allocation13 + $0x9bc] sm:$0xff]
    %v3151 = vld [vmem:[#allocation13 + $0x9c4] sm:$0xff]
    %v3152 = vld [vmem:[#allocation13 + $0x9cc] sm:$0xff]
    %v3153 = vld [vmem:[#allocation13 + $0x9d4] sm:$0xf]
    %v3154 = vld [vmem:[#allocation13 + $0x9d8] sm:$0xff]
    %v3155 = vld [vmem:[#allocation13 + $0x9e0] sm:$0xff]
    %v3156 = vld [vmem:[#allocation13 + $0x9e8] sm:$0xff]
    %v3157 = vld [vmem:[#allocation13 + $0x9f0] sm:$0xf]
    %v3158 = vld [vmem:[#allocation13 + $0x9f4] sm:$0xff]
    %v3159 = vld [vmem:[#allocation13 + $0x9fc] sm:$0xff]
    %v3160 = vld [vmem:[#allocation13 + $0xa04] sm:$0xff]
    %v3161 = vld [vmem:[#allocation13 + $0xa0c] sm:$0xf]
    %v3162 = vld [vmem:[#allocation13 + $0xa10] sm:$0xff]
    %v3163 = vld [vmem:[#allocation13 + $0xa18] sm:$0xff]
    %v3164 = vld [vmem:[#allocation13 + $0xa20] sm:$0xff]
    %v3165 = vld [vmem:[#allocation13 + $0xa28] sm:$0xf]
    %v3166 = vld [vmem:[#allocation13 + $0xa2c] sm:$0xff]
    %v3167 = vld [vmem:[#allocation13 + $0xa34] sm:$0xff]
    %v3168 = vld [vmem:[#allocation13 + $0xa3c] sm:$0xff]
    %v3169 = vld [vmem:[#allocation13 + $0xa44] sm:$0xf]
    %v3170 = vld [vmem:[#allocation13 + $0xa48] sm:$0xff]
    %v3171 = vld [vmem:[#allocation13 + $0xa50] sm:$0xff]
    %v3172 = vld [vmem:[#allocation13 + $0xa58] sm:$0xff]
    %v3173 = vld [vmem:[#allocation13 + $0xa60] sm:$0xf]
    %v3174 = vld [vmem:[#allocation13 + $0xa64] sm:$0xff]
    %v3175 = vld [vmem:[#allocation13 + $0xa6c] sm:$0xff]
    %v3176 = vld [vmem:[#allocation13 + $0xa74] sm:$0xff]
    %v3177 = vld [vmem:[#allocation13 + $0xa7c] sm:$0xf]
    %v3178 = vld [vmem:[#allocation13 + $0xa80] sm:$0xff]
    %v3179 = vld [vmem:[#allocation13 + $0xa88] sm:$0xff]
    %v3180 = vld [vmem:[#allocation13 + $0xa90] sm:$0xff]
    %v3181 = vld [vmem:[#allocation13 + $0xa98] sm:$0xf]
    %v3182 = vld [vmem:[#allocation13 + $0xa9c] sm:$0xff]
    %v3183 = vld [vmem:[#allocation13 + $0xaa4] sm:$0xff]
    %v3184 = vld [vmem:[#allocation13 + $0xaac] sm:$0xff]
    %v3185 = vld [vmem:[#allocation13 + $0xab4] sm:$0xf]
    %v3186 = vld [vmem:[#allocation13 + $0xab8] sm:$0xff]
    %v3187 = vld [vmem:[#allocation13 + $0xac0] sm:$0xff]
    %v3188 = vld [vmem:[#allocation13 + $0xac8] sm:$0xff]
    %v3189 = vld [vmem:[#allocation13 + $0xad0] sm:$0xf]
    %v3190 = vld [vmem:[#allocation13 + $0xad4] sm:$0xff]
    %v3191 = vld [vmem:[#allocation13 + $0xadc] sm:$0xff]
    %v3192 = vld [vmem:[#allocation13 + $0xae4] sm:$0xff]
    %v3193 = vld [vmem:[#allocation13 + $0xaec] sm:$0xf]
    %v3194 = vld [vmem:[#allocation13 + $0xaf0] sm:$0xff]
    %v3195 = vld [vmem:[#allocation13 + $0xaf8] sm:$0xff]
    %v3196 = vld [vmem:[#allocation13 + $0xb00] sm:$0xff]
    %v3197 = vld [vmem:[#allocation13 + $0xb08] sm:$0xf]
    %v3198 = vld [vmem:[#allocation13 + $0xb0c] sm:$0xff]
    %v3199 = vld [vmem:[#allocation13 + $0xb14] sm:$0xff]
    %v3200 = vld [vmem:[#allocation13 + $0xb1c] sm:$0xff]
    %v3201 = vld [vmem:[#allocation13 + $0xb24] sm:$0xf]
    %v3202 = vld [vmem:[#allocation13 + $0xb28] sm:$0xff]
    %v3203 = vld [vmem:[#allocation13 + $0xb30] sm:$0xff]
    %v3204 = vld [vmem:[#allocation13 + $0xb38] sm:$0xff]
    %v3205 = vld [vmem:[#allocation13 + $0xb40] sm:$0xf]
    %v3206 = vld [vmem:[#allocation13 + $0xb44] sm:$0xff]
    %v3207 = vld [vmem:[#allocation13 + $0xb4c] sm:$0xff]
    %v3208 = vld [vmem:[#allocation13 + $0xb54] sm:$0xff]
    %v3209 = vld [vmem:[#allocation13 + $0xb5c] sm:$0xf]
    %v3210 = vld [vmem:[#allocation13 + $0xb60] sm:$0xff]
    %v3211 = vld [vmem:[#allocation13 + $0xb68] sm:$0xff]
    %v3212 = vld [vmem:[#allocation13 + $0xb70] sm:$0xff]
    %v3213 = vld [vmem:[#allocation13 + $0xb78] sm:$0xf]
    %v3214 = vld [vmem:[#allocation13 + $0xb7c] sm:$0xff]
    %v3215 = vld [vmem:[#allocation13 + $0xb84] sm:$0xff]
    %v3216 = vld [vmem:[#allocation13 + $0xb8c] sm:$0xff]
    %v3217 = vld [vmem:[#allocation13 + $0xb94] sm:$0xf]
    %v3218 = vld [vmem:[#allocation13 + $0xb98] sm:$0xff]
    %v3219 = vld [vmem:[#allocation13 + $0xba0] sm:$0xff]
    %v3220 = vld [vmem:[#allocation13 + $0xba8] sm:$0xff]
    %v3221 = vld [vmem:[#allocation13 + $0xbb0] sm:$0xf]
    %v3222 = vld [vmem:[#allocation13 + $0xbb4] sm:$0xff]
    %v3223 = vld [vmem:[#allocation13 + $0xbbc] sm:$0xff]
    %v3224 = vld [vmem:[#allocation13 + $0xbc4] sm:$0xff]
    %v3225 = vld [vmem:[#allocation13 + $0xbcc] sm:$0xf]
    %v3226 = vld [vmem:[#allocation13 + $0xbd0] sm:$0xff]
    %v3227 = vld [vmem:[#allocation13 + $0xbd8] sm:$0xff]
    %v3228 = vld [vmem:[#allocation13 + $0xbe0] sm:$0xff]
    %v3229 = vld [vmem:[#allocation13 + $0xbe8] sm:$0xf]
    %v3230 = vld [vmem:[#allocation13 + $0xbec] sm:$0xff]
    %v3231 = vld [vmem:[#allocation13 + $0xbf4] sm:$0xff]
    %v3232 = vld [vmem:[#allocation13 + $0xbfc] sm:$0xff]
    %v3233 = vld [vmem:[#allocation13 + $0xc04] sm:$0xf]
    %v3234 = vld [vmem:[#allocation13 + $0xc08] sm:$0xff]
    %v3235 = vld [vmem:[#allocation13 + $0xc10] sm:$0xff]
    %v3236 = vld [vmem:[#allocation13 + $0xc18] sm:$0xff]
    %v3237 = vld [vmem:[#allocation13 + $0xc20] sm:$0xf]
    %v3238 = vld [vmem:[#allocation13 + $0xc24] sm:$0xff]
    %v3239 = vld [vmem:[#allocation13 + $0xc2c] sm:$0xff]
    %v3240 = vld [vmem:[#allocation13 + $0xc34] sm:$0xff]
    %v3241 = vld [vmem:[#allocation13 + $0xc3c] sm:$0xf]
    %v3242 = vld [vmem:[#allocation13 + $0xc40] sm:$0xff]
    %v3243 = vld [vmem:[#allocation13 + $0xc48] sm:$0xff]
    %v3244 = vld [vmem:[#allocation13 + $0xc50] sm:$0xff]
    %v3245 = vld [vmem:[#allocation13 + $0xc58] sm:$0xf]
    %v3246 = vld [vmem:[#allocation13 + $0xc5c] sm:$0xff]
    %v3247 = vld [vmem:[#allocation13 + $0xc64] sm:$0xff]
    %v3248 = vld [vmem:[#allocation13 + $0xc6c] sm:$0xff]
    %v3249 = vld [vmem:[#allocation13 + $0xc74] sm:$0xf]
    %v3250 = vld [vmem:[#allocation13 + $0xc78] sm:$0xff]
    %v3251 = vld [vmem:[#allocation13 + $0xc80] sm:$0xff]
    %v3252 = vld [vmem:[#allocation13 + $0xc88] sm:$0xff]
    %v3253 = vld [vmem:[#allocation13 + $0xc90] sm:$0xf]
    %v3254 = vld [vmem:[#allocation13 + $0xc94] sm:$0xff]
    %v3255 = vld [vmem:[#allocation13 + $0xc9c] sm:$0xff]
    %v3256 = vld [vmem:[#allocation13 + $0xca4] sm:$0xff]
    %v3257 = vld [vmem:[#allocation13 + $0xcac] sm:$0xf]
    %v3258 = vld [vmem:[#allocation13 + $0xcb0] sm:$0xff]
    %v3259 = vld [vmem:[#allocation13 + $0xcb8] sm:$0xff]
    %v3260 = vld [vmem:[#allocation13 + $0xcc0] sm:$0xff]
    %v3261 = vld [vmem:[#allocation13 + $0xcc8] sm:$0xf]
    %v3262 = vld [vmem:[#allocation13 + $0xccc] sm:$0xff]
    %v3263 = vld [vmem:[#allocation13 + $0xcd4] sm:$0xff]
    %v3264 = vld [vmem:[#allocation13 + $0xcdc] sm:$0xff]
    %v3265 = vld [vmem:[#allocation13 + $0xce4] sm:$0xf]
    %v3266 = vld [vmem:[#allocation13 + $0xce8] sm:$0xff]
    %v3267 = vld [vmem:[#allocation13 + $0xcf0] sm:$0xff]
    %v3268 = vld [vmem:[#allocation13 + $0xcf8] sm:$0xff]
    %v3269 = vld [vmem:[#allocation13 + $0xd00] sm:$0xf]
    %v3270 = vld [vmem:[#allocation13 + $0xd04] sm:$0xff]
    %v3271 = vld [vmem:[#allocation13 + $0xd0c] sm:$0xff]
    %v3272 = vld [vmem:[#allocation13 + $0xd14] sm:$0xff]
    %v3273 = vld [vmem:[#allocation13 + $0xd1c] sm:$0xf]
    %v3274 = vld [vmem:[#allocation13 + $0xd20] sm:$0xff]
    %v3275 = vld [vmem:[#allocation13 + $0xd28] sm:$0xff]
    %v3276 = vld [vmem:[#allocation13 + $0xd30] sm:$0xff]
    %v3277 = vld [vmem:[#allocation13 + $0xd38] sm:$0xf]
    %v3278 = vld [vmem:[#allocation13 + $0xd3c] sm:$0xff]
    %v3279 = vld [vmem:[#allocation13 + $0xd44] sm:$0xff]
    %v3280 = vld [vmem:[#allocation13 + $0xd4c] sm:$0xff]
    %v3281 = vld [vmem:[#allocation13 + $0xd54] sm:$0xf]
    %v3282 = vld [vmem:[#allocation13 + $0xd58] sm:$0xff]
    %v3283 = vld [vmem:[#allocation13 + $0xd60] sm:$0xff]
    %v3284 = vld [vmem:[#allocation13 + $0xd68] sm:$0xff]
    %v3285 = vld [vmem:[#allocation13 + $0xd70] sm:$0xf]
    %v3286 = vld [vmem:[#allocation13 + $0xd74] sm:$0xff]
    %v3287 = vld [vmem:[#allocation13 + $0xd7c] sm:$0xff]
    %v3288 = vld [vmem:[#allocation13 + $0xd84] sm:$0xff]
    %v3289 = vld [vmem:[#allocation13 + $0xd8c] sm:$0xf]
    %v3290 = vld [vmem:[#allocation13 + $0xd90] sm:$0xff]
    %v3291 = vld [vmem:[#allocation13 + $0xd98] sm:$0xff]
    %v3292 = vld [vmem:[#allocation13 + $0xda0] sm:$0xff]
    %v3293 = vld [vmem:[#allocation13 + $0xda8] sm:$0xf]
    %v3294 = vld [vmem:[#allocation13 + $0xdac] sm:$0xff]
    %v3295 = vld [vmem:[#allocation13 + $0xdb4] sm:$0xff]
    %v3296 = vld [vmem:[#allocation13 + $0xdbc] sm:$0xff]
    %v3297 = vld [vmem:[#allocation13 + $0xdc4] sm:$0xf]
    %v3298 = vld [vmem:[#allocation13 + $0xdc8] sm:$0xff]
    %v3299 = vld [vmem:[#allocation13 + $0xdd0] sm:$0xff]
    %v3300 = vld [vmem:[#allocation13 + $0xdd8] sm:$0xff]
    %v3301 = vld [vmem:[#allocation13 + $0xde0] sm:$0xf]
    %v3302 = vld [vmem:[#allocation13 + $0xde4] sm:$0xff]
    %v3303 = vld [vmem:[#allocation13 + $0xdec] sm:$0xff]
    %v3304 = vld [vmem:[#allocation13 + $0xdf4] sm:$0xff]
    %v3305 = vld [vmem:[#allocation13 + $0xdfc] sm:$0xf]
    %v3306 = vld [vmem:[#allocation14] sm:$0xff]
    %v3308 = vperm.slane %v3306, 0
    %v3309 = vperm.slane %v3306, 1
    %v3310 = vperm.slane %v3306, 2
    %v3311 = vperm.slane %v3306, 3
    %v3312 = vperm.slane %v3306, 4
    %v3313 = vperm.slane %v3306, 5
    %v3314 = vperm.slane %v3306, 6
    %v3834 = vunpack.c.l.b16 %v2794
    %v3835 = vunpack.c.h.b16 %v2794
    %v3836 = vunpack.c.l.b16 %v2795
    %v3837 = vunpack.c.h.b16 %v2795
    %v3838 = vunpack.c.l.b16 %v2796
    %v3839 = vunpack.c.h.b16 %v2796
    %v3840 = vunpack.c.l.b16 %v2797
    %v3841 = vunpack.c.l.b16 %v2798
    %v3842 = vunpack.c.h.b16 %v2798
    %v3843 = vunpack.c.l.b16 %v2799
    %v3844 = vunpack.c.h.b16 %v2799
    %v3845 = vunpack.c.l.b16 %v2800
    %v3846 = vunpack.c.h.b16 %v2800
    %v3847 = vunpack.c.l.b16 %v2801
    %v3848 = vunpack.c.l.b16 %v2802
    %v3849 = vunpack.c.h.b16 %v2802
    %v3850 = vunpack.c.l.b16 %v2803
    %v3851 = vunpack.c.h.b16 %v2803
    %v3852 = vunpack.c.l.b16 %v2804
    %v3853 = vunpack.c.h.b16 %v2804
    %v3854 = vunpack.c.l.b16 %v2805
    %v3855 = vunpack.c.l.b16 %v2806
    %v3856 = vunpack.c.h.b16 %v2806
    %v3857 = vunpack.c.l.b16 %v2807
    %v3858 = vunpack.c.h.b16 %v2807
    %v3859 = vunpack.c.l.b16 %v2808
    %v3860 = vunpack.c.h.b16 %v2808
    %v3861 = vunpack.c.l.b16 %v2809
    %v3862 = vunpack.c.l.b16 %v2810
    %v3863 = vunpack.c.h.b16 %v2810
    %v3864 = vunpack.c.l.b16 %v2811
    %v3865 = vunpack.c.h.b16 %v2811
    %v3866 = vunpack.c.l.b16 %v2812
    %v3867 = vunpack.c.h.b16 %v2812
    %v3868 = vunpack.c.l.b16 %v2813
    %v3869 = vunpack.c.l.b16 %v2814
    %v3870 = vunpack.c.h.b16 %v2814
    %v3871 = vunpack.c.l.b16 %v2815
    %v3872 = vunpack.c.h.b16 %v2815
    %v3873 = vunpack.c.l.b16 %v2816
    %v3874 = vunpack.c.h.b16 %v2816
    %v3875 = vunpack.c.l.b16 %v2817
    %v3876 = vunpack.c.l.b16 %v2818
    %v3877 = vunpack.c.h.b16 %v2818
    %v3878 = vunpack.c.l.b16 %v2819
    %v3879 = vunpack.c.h.b16 %v2819
    %v3880 = vunpack.c.l.b16 %v2820
    %v3881 = vunpack.c.h.b16 %v2820
    %v3882 = vunpack.c.l.b16 %v2821
    %v3883 = vunpack.c.l.b16 %v2822
    %v3884 = vunpack.c.h.b16 %v2822
    %v3885 = vunpack.c.l.b16 %v2823
    %v3886 = vunpack.c.h.b16 %v2823
    %v3887 = vunpack.c.l.b16 %v2824
    %v3888 = vunpack.c.h.b16 %v2824
    %v3889 = vunpack.c.l.b16 %v2825
    %v3890 = vunpack.c.l.b16 %v2826
    %v3891 = vunpack.c.h.b16 %v2826
    %v3892 = vunpack.c.l.b16 %v2827
    %v3893 = vunpack.c.h.b16 %v2827
    %v3894 = vunpack.c.l.b16 %v2828
    %v3895 = vunpack.c.h.b16 %v2828
    %v3896 = vunpack.c.l.b16 %v2829
    %v3897 = vunpack.c.l.b16 %v2830
    %v3898 = vunpack.c.h.b16 %v2830
    %v3899 = vunpack.c.l.b16 %v2831
    %v3900 = vunpack.c.h.b16 %v2831
    %v3901 = vunpack.c.l.b16 %v2832
    %v3902 = vunpack.c.h.b16 %v2832
    %v3903 = vunpack.c.l.b16 %v2833
    %v3904 = vunpack.c.l.b16 %v2834
    %v3905 = vunpack.c.h.b16 %v2834
    %v3906 = vunpack.c.l.b16 %v2835
    %v3907 = vunpack.c.h.b16 %v2835
    %v3908 = vunpack.c.l.b16 %v2836
    %v3909 = vunpack.c.h.b16 %v2836
    %v3910 = vunpack.c.l.b16 %v2837
    %v3911 = vunpack.c.l.b16 %v2838
    %v3912 = vunpack.c.h.b16 %v2838
    %v3913 = vunpack.c.l.b16 %v2839
    %v3914 = vunpack.c.h.b16 %v2839
    %v3915 = vunpack.c.l.b16 %v2840
    %v3916 = vunpack.c.h.b16 %v2840
    %v3917 = vunpack.c.l.b16 %v2841
    %v3918 = vunpack.c.l.b16 %v2842
    %v3919 = vunpack.c.h.b16 %v2842
    %v3920 = vunpack.c.l.b16 %v2843
    %v3921 = vunpack.c.h.b16 %v2843
    %v3922 = vunpack.c.l.b16 %v2844
    %v3923 = vunpack.c.h.b16 %v2844
    %v3924 = vunpack.c.l.b16 %v2845
    %v3925 = vunpack.c.l.b16 %v2846
    %v3926 = vunpack.c.h.b16 %v2846
    %v3927 = vunpack.c.l.b16 %v2847
    %v3928 = vunpack.c.h.b16 %v2847
    %v3929 = vunpack.c.l.b16 %v2848
    %v3930 = vunpack.c.h.b16 %v2848
    %v3931 = vunpack.c.l.b16 %v2849
    %v3932 = vunpack.c.l.b16 %v2850
    %v3933 = vunpack.c.h.b16 %v2850
    %v3934 = vunpack.c.l.b16 %v2851
    %v3935 = vunpack.c.h.b16 %v2851
    %v3936 = vunpack.c.l.b16 %v2852
    %v3937 = vunpack.c.h.b16 %v2852
    %v3938 = vunpack.c.l.b16 %v2853
    %v3939 = vunpack.c.l.b16 %v2854
    %v3940 = vunpack.c.h.b16 %v2854
    %v3941 = vunpack.c.l.b16 %v2855
    %v3942 = vunpack.c.h.b16 %v2855
    %v3943 = vunpack.c.l.b16 %v2856
    %v3944 = vunpack.c.h.b16 %v2856
    %v3945 = vunpack.c.l.b16 %v2857
    %v3946 = vunpack.c.l.b16 %v2858
    %v3947 = vunpack.c.h.b16 %v2858
    %v3948 = vunpack.c.l.b16 %v2859
    %v3949 = vunpack.c.h.b16 %v2859
    %v3950 = vunpack.c.l.b16 %v2860
    %v3951 = vunpack.c.h.b16 %v2860
    %v3952 = vunpack.c.l.b16 %v2861
    %v3953 = vunpack.c.l.b16 %v2862
    %v3954 = vunpack.c.h.b16 %v2862
    %v3955 = vunpack.c.l.b16 %v2863
    %v3956 = vunpack.c.h.b16 %v2863
    %v3957 = vunpack.c.l.b16 %v2864
    %v3958 = vunpack.c.h.b16 %v2864
    %v3959 = vunpack.c.l.b16 %v2865
    %v3960 = vunpack.c.l.b16 %v2866
    %v3961 = vunpack.c.h.b16 %v2866
    %v3962 = vunpack.c.l.b16 %v2867
    %v3963 = vunpack.c.h.b16 %v2867
    %v3964 = vunpack.c.l.b16 %v2868
    %v3965 = vunpack.c.h.b16 %v2868
    %v3966 = vunpack.c.l.b16 %v2869
    %v3967 = vunpack.c.l.b16 %v2870
    %v3968 = vunpack.c.h.b16 %v2870
    %v3969 = vunpack.c.l.b16 %v2871
    %v3970 = vunpack.c.h.b16 %v2871
    %v3971 = vunpack.c.l.b16 %v2872
    %v3972 = vunpack.c.h.b16 %v2872
    %v3973 = vunpack.c.l.b16 %v2873
    %v3974 = vunpack.c.l.b16 %v2874
    %v3975 = vunpack.c.h.b16 %v2874
    %v3976 = vunpack.c.l.b16 %v2875
    %v3977 = vunpack.c.h.b16 %v2875
    %v3978 = vunpack.c.l.b16 %v2876
    %v3979 = vunpack.c.h.b16 %v2876
    %v3980 = vunpack.c.l.b16 %v2877
    %v3981 = vunpack.c.l.b16 %v2878
    %v3982 = vunpack.c.h.b16 %v2878
    %v3983 = vunpack.c.l.b16 %v2879
    %v3984 = vunpack.c.h.b16 %v2879
    %v3985 = vunpack.c.l.b16 %v2880
    %v3986 = vunpack.c.h.b16 %v2880
    %v3987 = vunpack.c.l.b16 %v2881
    %v3988 = vunpack.c.l.b16 %v2882
    %v3989 = vunpack.c.h.b16 %v2882
    %v3990 = vunpack.c.l.b16 %v2883
    %v3991 = vunpack.c.h.b16 %v2883
    %v3992 = vunpack.c.l.b16 %v2884
    %v3993 = vunpack.c.h.b16 %v2884
    %v3994 = vunpack.c.l.b16 %v2885
    %v3995 = vunpack.c.l.b16 %v2886
    %v3996 = vunpack.c.h.b16 %v2886
    %v3997 = vunpack.c.l.b16 %v2887
    %v3998 = vunpack.c.h.b16 %v2887
    %v3999 = vunpack.c.l.b16 %v2888
    %v4000 = vunpack.c.h.b16 %v2888
    %v4001 = vunpack.c.l.b16 %v2889
    %v4002 = vunpack.c.l.b16 %v2890
    %v4003 = vunpack.c.h.b16 %v2890
    %v4004 = vunpack.c.l.b16 %v2891
    %v4005 = vunpack.c.h.b16 %v2891
    %v4006 = vunpack.c.l.b16 %v2892
    %v4007 = vunpack.c.h.b16 %v2892
    %v4008 = vunpack.c.l.b16 %v2893
    %v4009 = vunpack.c.l.b16 %v2894
    %v4010 = vunpack.c.h.b16 %v2894
    %v4011 = vunpack.c.l.b16 %v2895
    %v4012 = vunpack.c.h.b16 %v2895
    %v4013 = vunpack.c.l.b16 %v2896
    %v4014 = vunpack.c.h.b16 %v2896
    %v4015 = vunpack.c.l.b16 %v2897
    %v4016 = vunpack.c.l.b16 %v2898
    %v4017 = vunpack.c.h.b16 %v2898
    %v4018 = vunpack.c.l.b16 %v2899
    %v4019 = vunpack.c.h.b16 %v2899
    %v4020 = vunpack.c.l.b16 %v2900
    %v4021 = vunpack.c.h.b16 %v2900
    %v4022 = vunpack.c.l.b16 %v2901
    %v4023 = vunpack.c.l.b16 %v2902
    %v4024 = vunpack.c.h.b16 %v2902
    %v4025 = vunpack.c.l.b16 %v2903
    %v4026 = vunpack.c.h.b16 %v2903
    %v4027 = vunpack.c.l.b16 %v2904
    %v4028 = vunpack.c.h.b16 %v2904
    %v4029 = vunpack.c.l.b16 %v2905
    %v4030 = vunpack.c.l.b16 %v2906
    %v4031 = vunpack.c.h.b16 %v2906
    %v4032 = vunpack.c.l.b16 %v2907
    %v4033 = vunpack.c.h.b16 %v2907
    %v4034 = vunpack.c.l.b16 %v2908
    %v4035 = vunpack.c.h.b16 %v2908
    %v4036 = vunpack.c.l.b16 %v2909
    %v4037 = vunpack.c.l.b16 %v2910
    %v4038 = vunpack.c.h.b16 %v2910
    %v4039 = vunpack.c.l.b16 %v2911
    %v4040 = vunpack.c.h.b16 %v2911
    %v4041 = vunpack.c.l.b16 %v2912
    %v4042 = vunpack.c.h.b16 %v2912
    %v4043 = vunpack.c.l.b16 %v2913
    %v4044 = vunpack.c.l.b16 %v2914
    %v4045 = vunpack.c.h.b16 %v2914
    %v4046 = vunpack.c.l.b16 %v2915
    %v4047 = vunpack.c.h.b16 %v2915
    %v4048 = vunpack.c.l.b16 %v2916
    %v4049 = vunpack.c.h.b16 %v2916
    %v4050 = vunpack.c.l.b16 %v2917
    %v4051 = vunpack.c.l.b16 %v2918
    %v4052 = vunpack.c.h.b16 %v2918
    %v4053 = vunpack.c.l.b16 %v2919
    %v4054 = vunpack.c.h.b16 %v2919
    %v4055 = vunpack.c.l.b16 %v2920
    %v4056 = vunpack.c.h.b16 %v2920
    %v4057 = vunpack.c.l.b16 %v2921
    %v4058 = vunpack.c.l.b16 %v2922
    %v4059 = vunpack.c.h.b16 %v2922
    %v4060 = vunpack.c.l.b16 %v2923
    %v4061 = vunpack.c.h.b16 %v2923
    %v4062 = vunpack.c.l.b16 %v2924
    %v4063 = vunpack.c.h.b16 %v2924
    %v4064 = vunpack.c.l.b16 %v2925
    %v4065 = vunpack.c.l.b16 %v2926
    %v4066 = vunpack.c.h.b16 %v2926
    %v4067 = vunpack.c.l.b16 %v2927
    %v4068 = vunpack.c.h.b16 %v2927
    %v4069 = vunpack.c.l.b16 %v2928
    %v4070 = vunpack.c.h.b16 %v2928
    %v4071 = vunpack.c.l.b16 %v2929
    %v4072 = vunpack.c.l.b16 %v2930
    %v4073 = vunpack.c.h.b16 %v2930
    %v4074 = vunpack.c.l.b16 %v2931
    %v4075 = vunpack.c.h.b16 %v2931
    %v4076 = vunpack.c.l.b16 %v2932
    %v4077 = vunpack.c.h.b16 %v2932
    %v4078 = vunpack.c.l.b16 %v2933
    %v4079 = vunpack.c.l.b16 %v2934
    %v4080 = vunpack.c.h.b16 %v2934
    %v4081 = vunpack.c.l.b16 %v2935
    %v4082 = vunpack.c.h.b16 %v2935
    %v4083 = vunpack.c.l.b16 %v2936
    %v4084 = vunpack.c.h.b16 %v2936
    %v4085 = vunpack.c.l.b16 %v2937
    %v4086 = vunpack.c.l.b16 %v2938
    %v4087 = vunpack.c.h.b16 %v2938
    %v4088 = vunpack.c.l.b16 %v2939
    %v4089 = vunpack.c.h.b16 %v2939
    %v4090 = vunpack.c.l.b16 %v2940
    %v4091 = vunpack.c.h.b16 %v2940
    %v4092 = vunpack.c.l.b16 %v2941
    %v4093 = vunpack.c.l.b16 %v2942
    %v4094 = vunpack.c.h.b16 %v2942
    %v4095 = vunpack.c.l.b16 %v2943
    %v4096 = vunpack.c.h.b16 %v2943
    %v4097 = vunpack.c.l.b16 %v2944
    %v4098 = vunpack.c.h.b16 %v2944
    %v4099 = vunpack.c.l.b16 %v2945
    %v4100 = vunpack.c.l.b16 %v2946
    %v4101 = vunpack.c.h.b16 %v2946
    %v4102 = vunpack.c.l.b16 %v2947
    %v4103 = vunpack.c.h.b16 %v2947
    %v4104 = vunpack.c.l.b16 %v2948
    %v4105 = vunpack.c.h.b16 %v2948
    %v4106 = vunpack.c.l.b16 %v2949
    %v4107 = vunpack.c.l.b16 %v2950
    %v4108 = vunpack.c.h.b16 %v2950
    %v4109 = vunpack.c.l.b16 %v2951
    %v4110 = vunpack.c.h.b16 %v2951
    %v4111 = vunpack.c.l.b16 %v2952
    %v4112 = vunpack.c.h.b16 %v2952
    %v4113 = vunpack.c.l.b16 %v2953
    %v4114 = vunpack.c.l.b16 %v2954
    %v4115 = vunpack.c.h.b16 %v2954
    %v4116 = vunpack.c.l.b16 %v2955
    %v4117 = vunpack.c.h.b16 %v2955
    %v4118 = vunpack.c.l.b16 %v2956
    %v4119 = vunpack.c.h.b16 %v2956
    %v4120 = vunpack.c.l.b16 %v2957
    %v4121 = vunpack.c.l.b16 %v2958
    %v4122 = vunpack.c.h.b16 %v2958
    %v4123 = vunpack.c.l.b16 %v2959
    %v4124 = vunpack.c.h.b16 %v2959
    %v4125 = vunpack.c.l.b16 %v2960
    %v4126 = vunpack.c.h.b16 %v2960
    %v4127 = vunpack.c.l.b16 %v2961
    %v4128 = vunpack.c.l.b16 %v2962
    %v4129 = vunpack.c.h.b16 %v2962
    %v4130 = vunpack.c.l.b16 %v2963
    %v4131 = vunpack.c.h.b16 %v2963
    %v4132 = vunpack.c.l.b16 %v2964
    %v4133 = vunpack.c.h.b16 %v2964
    %v4134 = vunpack.c.l.b16 %v2965
    %v4135 = vunpack.c.l.b16 %v2966
    %v4136 = vunpack.c.h.b16 %v2966
    %v4137 = vunpack.c.l.b16 %v2967
    %v4138 = vunpack.c.h.b16 %v2967
    %v4139 = vunpack.c.l.b16 %v2968
    %v4140 = vunpack.c.h.b16 %v2968
    %v4141 = vunpack.c.l.b16 %v2969
    %v4142 = vunpack.c.l.b16 %v2970
    %v4143 = vunpack.c.h.b16 %v2970
    %v4144 = vunpack.c.l.b16 %v2971
    %v4145 = vunpack.c.h.b16 %v2971
    %v4146 = vunpack.c.l.b16 %v2972
    %v4147 = vunpack.c.h.b16 %v2972
    %v4148 = vunpack.c.l.b16 %v2973
    %v4149 = vunpack.c.l.b16 %v2974
    %v4150 = vunpack.c.h.b16 %v2974
    %v4151 = vunpack.c.l.b16 %v2975
    %v4152 = vunpack.c.h.b16 %v2975
    %v4153 = vunpack.c.l.b16 %v2976
    %v4154 = vunpack.c.h.b16 %v2976
    %v4155 = vunpack.c.l.b16 %v2977
    %v4156 = vunpack.c.l.b16 %v2978
    %v4157 = vunpack.c.h.b16 %v2978
    %v4158 = vunpack.c.l.b16 %v2979
    %v4159 = vunpack.c.h.b16 %v2979
    %v4160 = vunpack.c.l.b16 %v2980
    %v4161 = vunpack.c.h.b16 %v2980
    %v4162 = vunpack.c.l.b16 %v2981
    %v4163 = vunpack.c.l.b16 %v2982
    %v4164 = vunpack.c.h.b16 %v2982
    %v4165 = vunpack.c.l.b16 %v2983
    %v4166 = vunpack.c.h.b16 %v2983
    %v4167 = vunpack.c.l.b16 %v2984
    %v4168 = vunpack.c.h.b16 %v2984
    %v4169 = vunpack.c.l.b16 %v2985
    %v4170 = vunpack.c.l.b16 %v2986
    %v4171 = vunpack.c.h.b16 %v2986
    %v4172 = vunpack.c.l.b16 %v2987
    %v4173 = vunpack.c.h.b16 %v2987
    %v4174 = vunpack.c.l.b16 %v2988
    %v4175 = vunpack.c.h.b16 %v2988
    %v4176 = vunpack.c.l.b16 %v2989
    %v4177 = vunpack.c.l.b16 %v2990
    %v4178 = vunpack.c.h.b16 %v2990
    %v4179 = vunpack.c.l.b16 %v2991
    %v4180 = vunpack.c.h.b16 %v2991
    %v4181 = vunpack.c.l.b16 %v2992
    %v4182 = vunpack.c.h.b16 %v2992
    %v4183 = vunpack.c.l.b16 %v2993
    %v4184 = vunpack.c.l.b16 %v2994
    %v4185 = vunpack.c.h.b16 %v2994
    %v4186 = vunpack.c.l.b16 %v2995
    %v4187 = vunpack.c.h.b16 %v2995
    %v4188 = vunpack.c.l.b16 %v2996
    %v4189 = vunpack.c.h.b16 %v2996
    %v4190 = vunpack.c.l.b16 %v2997
    %v4191 = vunpack.c.l.b16 %v2998
    %v4192 = vunpack.c.h.b16 %v2998
    %v4193 = vunpack.c.l.b16 %v2999
    %v4194 = vunpack.c.h.b16 %v2999
    %v4195 = vunpack.c.l.b16 %v3000
    %v4196 = vunpack.c.h.b16 %v3000
    %v4197 = vunpack.c.l.b16 %v3001
    %v4198 = vunpack.c.l.b16 %v3002
    %v4199 = vunpack.c.h.b16 %v3002
    %v4200 = vunpack.c.l.b16 %v3003
    %v4201 = vunpack.c.h.b16 %v3003
    %v4202 = vunpack.c.l.b16 %v3004
    %v4203 = vunpack.c.h.b16 %v3004
    %v4204 = vunpack.c.l.b16 %v3005
    %v4205 = vunpack.c.l.b16 %v3006
    %v4206 = vunpack.c.h.b16 %v3006
    %v4207 = vunpack.c.l.b16 %v3007
    %v4208 = vunpack.c.h.b16 %v3007
    %v4209 = vunpack.c.l.b16 %v3008
    %v4210 = vunpack.c.h.b16 %v3008
    %v4211 = vunpack.c.l.b16 %v3009
    %v4212 = vunpack.c.l.b16 %v3010
    %v4213 = vunpack.c.h.b16 %v3010
    %v4214 = vunpack.c.l.b16 %v3011
    %v4215 = vunpack.c.h.b16 %v3011
    %v4216 = vunpack.c.l.b16 %v3012
    %v4217 = vunpack.c.h.b16 %v3012
    %v4218 = vunpack.c.l.b16 %v3013
    %v4219 = vunpack.c.l.b16 %v3014
    %v4220 = vunpack.c.h.b16 %v3014
    %v4221 = vunpack.c.l.b16 %v3015
    %v4222 = vunpack.c.h.b16 %v3015
    %v4223 = vunpack.c.l.b16 %v3016
    %v4224 = vunpack.c.h.b16 %v3016
    %v4225 = vunpack.c.l.b16 %v3017
    %v4226 = vunpack.c.l.b16 %v3018
    %v4227 = vunpack.c.h.b16 %v3018
    %v4228 = vunpack.c.l.b16 %v3019
    %v4229 = vunpack.c.h.b16 %v3019
    %v4230 = vunpack.c.l.b16 %v3020
    %v4231 = vunpack.c.h.b16 %v3020
    %v4232 = vunpack.c.l.b16 %v3021
    %v4233 = vunpack.c.l.b16 %v3022
    %v4234 = vunpack.c.h.b16 %v3022
    %v4235 = vunpack.c.l.b16 %v3023
    %v4236 = vunpack.c.h.b16 %v3023
    %v4237 = vunpack.c.l.b16 %v3024
    %v4238 = vunpack.c.h.b16 %v3024
    %v4239 = vunpack.c.l.b16 %v3025
    %v4240 = vunpack.c.l.b16 %v3026
    %v4241 = vunpack.c.h.b16 %v3026
    %v4242 = vunpack.c.l.b16 %v3027
    %v4243 = vunpack.c.h.b16 %v3027
    %v4244 = vunpack.c.l.b16 %v3028
    %v4245 = vunpack.c.h.b16 %v3028
    %v4246 = vunpack.c.l.b16 %v3029
    %v4247 = vunpack.c.l.b16 %v3030
    %v4248 = vunpack.c.h.b16 %v3030
    %v4249 = vunpack.c.l.b16 %v3031
    %v4250 = vunpack.c.h.b16 %v3031
    %v4251 = vunpack.c.l.b16 %v3032
    %v4252 = vunpack.c.h.b16 %v3032
    %v4253 = vunpack.c.l.b16 %v3033
    %v4254 = vunpack.c.l.b16 %v3034
    %v4255 = vunpack.c.h.b16 %v3034
    %v4256 = vunpack.c.l.b16 %v3035
    %v4257 = vunpack.c.h.b16 %v3035
    %v4258 = vunpack.c.l.b16 %v3036
    %v4259 = vunpack.c.h.b16 %v3036
    %v4260 = vunpack.c.l.b16 %v3037
    %v4261 = vunpack.c.l.b16 %v3038
    %v4262 = vunpack.c.h.b16 %v3038
    %v4263 = vunpack.c.l.b16 %v3039
    %v4264 = vunpack.c.h.b16 %v3039
    %v4265 = vunpack.c.l.b16 %v3040
    %v4266 = vunpack.c.h.b16 %v3040
    %v4267 = vunpack.c.l.b16 %v3041
    %v4268 = vunpack.c.l.b16 %v3042
    %v4269 = vunpack.c.h.b16 %v3042
    %v4270 = vunpack.c.l.b16 %v3043
    %v4271 = vunpack.c.h.b16 %v3043
    %v4272 = vunpack.c.l.b16 %v3044
    %v4273 = vunpack.c.h.b16 %v3044
    %v4274 = vunpack.c.l.b16 %v3045
    %v4275 = vunpack.c.l.b16 %v3046
    %v4276 = vunpack.c.h.b16 %v3046
    %v4277 = vunpack.c.l.b16 %v3047
    %v4278 = vunpack.c.h.b16 %v3047
    %v4279 = vunpack.c.l.b16 %v3048
    %v4280 = vunpack.c.h.b16 %v3048
    %v4281 = vunpack.c.l.b16 %v3049
    %v4282 = vunpack.c.l.b16 %v3050
    %v4283 = vunpack.c.h.b16 %v3050
    %v4284 = vunpack.c.l.b16 %v3051
    %v4285 = vunpack.c.h.b16 %v3051
    %v4286 = vunpack.c.l.b16 %v3052
    %v4287 = vunpack.c.h.b16 %v3052
    %v4288 = vunpack.c.l.b16 %v3053
    %v4289 = vunpack.c.l.b16 %v3054
    %v4290 = vunpack.c.h.b16 %v3054
    %v4291 = vunpack.c.l.b16 %v3055
    %v4292 = vunpack.c.h.b16 %v3055
    %v4293 = vunpack.c.l.b16 %v3056
    %v4294 = vunpack.c.h.b16 %v3056
    %v4295 = vunpack.c.l.b16 %v3057
    %v4296 = vunpack.c.l.b16 %v3058
    %v4297 = vunpack.c.h.b16 %v3058
    %v4298 = vunpack.c.l.b16 %v3059
    %v4299 = vunpack.c.h.b16 %v3059
    %v4300 = vunpack.c.l.b16 %v3060
    %v4301 = vunpack.c.h.b16 %v3060
    %v4302 = vunpack.c.l.b16 %v3061
    %v4303 = vunpack.c.l.b16 %v3062
    %v4304 = vunpack.c.h.b16 %v3062
    %v4305 = vunpack.c.l.b16 %v3063
    %v4306 = vunpack.c.h.b16 %v3063
    %v4307 = vunpack.c.l.b16 %v3064
    %v4308 = vunpack.c.h.b16 %v3064
    %v4309 = vunpack.c.l.b16 %v3065
    %v4310 = vunpack.c.l.b16 %v3066
    %v4311 = vunpack.c.h.b16 %v3066
    %v4312 = vunpack.c.l.b16 %v3067
    %v4313 = vunpack.c.h.b16 %v3067
    %v4314 = vunpack.c.l.b16 %v3068
    %v4315 = vunpack.c.h.b16 %v3068
    %v4316 = vunpack.c.l.b16 %v3069
    %v4317 = vunpack.c.l.b16 %v3070
    %v4318 = vunpack.c.h.b16 %v3070
    %v4319 = vunpack.c.l.b16 %v3071
    %v4320 = vunpack.c.h.b16 %v3071
    %v4321 = vunpack.c.l.b16 %v3072
    %v4322 = vunpack.c.h.b16 %v3072
    %v4323 = vunpack.c.l.b16 %v3073
    %v4324 = vunpack.c.l.b16 %v3074
    %v4325 = vunpack.c.h.b16 %v3074
    %v4326 = vunpack.c.l.b16 %v3075
    %v4327 = vunpack.c.h.b16 %v3075
    %v4328 = vunpack.c.l.b16 %v3076
    %v4329 = vunpack.c.h.b16 %v3076
    %v4330 = vunpack.c.l.b16 %v3077
    %v4331 = vunpack.c.l.b16 %v3078
    %v4332 = vunpack.c.h.b16 %v3078
    %v4333 = vunpack.c.l.b16 %v3079
    %v4334 = vunpack.c.h.b16 %v3079
    %v4335 = vunpack.c.l.b16 %v3080
    %v4336 = vunpack.c.h.b16 %v3080
    %v4337 = vunpack.c.l.b16 %v3081
    %v4338 = vunpack.c.l.b16 %v3082
    %v4339 = vunpack.c.h.b16 %v3082
    %v4340 = vunpack.c.l.b16 %v3083
    %v4341 = vunpack.c.h.b16 %v3083
    %v4342 = vunpack.c.l.b16 %v3084
    %v4343 = vunpack.c.h.b16 %v3084
    %v4344 = vunpack.c.l.b16 %v3085
    %v4345 = vunpack.c.l.b16 %v3086
    %v4346 = vunpack.c.h.b16 %v3086
    %v4347 = vunpack.c.l.b16 %v3087
    %v4348 = vunpack.c.h.b16 %v3087
    %v4349 = vunpack.c.l.b16 %v3088
    %v4350 = vunpack.c.h.b16 %v3088
    %v4351 = vunpack.c.l.b16 %v3089
    %v4352 = vunpack.c.l.b16 %v3090
    %v4353 = vunpack.c.h.b16 %v3090
    %v4354 = vunpack.c.l.b16 %v3091
    %v4355 = vunpack.c.h.b16 %v3091
    %v4356 = vunpack.c.l.b16 %v3092
    %v4357 = vunpack.c.h.b16 %v3092
    %v4358 = vunpack.c.l.b16 %v3093
    %v4359 = vunpack.c.l.b16 %v3094
    %v4360 = vunpack.c.h.b16 %v3094
    %v4361 = vunpack.c.l.b16 %v3095
    %v4362 = vunpack.c.h.b16 %v3095
    %v4363 = vunpack.c.l.b16 %v3096
    %v4364 = vunpack.c.h.b16 %v3096
    %v4365 = vunpack.c.l.b16 %v3097
    %v4366 = vunpack.c.l.b16 %v3098
    %v4367 = vunpack.c.h.b16 %v3098
    %v4368 = vunpack.c.l.b16 %v3099
    %v4369 = vunpack.c.h.b16 %v3099
    %v4370 = vunpack.c.l.b16 %v3100
    %v4371 = vunpack.c.h.b16 %v3100
    %v4372 = vunpack.c.l.b16 %v3101
    %v4373 = vunpack.c.l.b16 %v3102
    %v4374 = vunpack.c.h.b16 %v3102
    %v4375 = vunpack.c.l.b16 %v3103
    %v4376 = vunpack.c.h.b16 %v3103
    %v4377 = vunpack.c.l.b16 %v3104
    %v4378 = vunpack.c.h.b16 %v3104
    %v4379 = vunpack.c.l.b16 %v3105
    %v4380 = vunpack.c.l.b16 %v3106
    %v4381 = vunpack.c.h.b16 %v3106
    %v4382 = vunpack.c.l.b16 %v3107
    %v4383 = vunpack.c.h.b16 %v3107
    %v4384 = vunpack.c.l.b16 %v3108
    %v4385 = vunpack.c.h.b16 %v3108
    %v4386 = vunpack.c.l.b16 %v3109
    %v4387 = vunpack.c.l.b16 %v3110
    %v4388 = vunpack.c.h.b16 %v3110
    %v4389 = vunpack.c.l.b16 %v3111
    %v4390 = vunpack.c.h.b16 %v3111
    %v4391 = vunpack.c.l.b16 %v3112
    %v4392 = vunpack.c.h.b16 %v3112
    %v4393 = vunpack.c.l.b16 %v3113
    %v4394 = vunpack.c.l.b16 %v3114
    %v4395 = vunpack.c.h.b16 %v3114
    %v4396 = vunpack.c.l.b16 %v3115
    %v4397 = vunpack.c.h.b16 %v3115
    %v4398 = vunpack.c.l.b16 %v3116
    %v4399 = vunpack.c.h.b16 %v3116
    %v4400 = vunpack.c.l.b16 %v3117
    %v4401 = vunpack.c.l.b16 %v3118
    %v4402 = vunpack.c.h.b16 %v3118
    %v4403 = vunpack.c.l.b16 %v3119
    %v4404 = vunpack.c.h.b16 %v3119
    %v4405 = vunpack.c.l.b16 %v3120
    %v4406 = vunpack.c.h.b16 %v3120
    %v4407 = vunpack.c.l.b16 %v3121
    %v4408 = vunpack.c.l.b16 %v3122
    %v4409 = vunpack.c.h.b16 %v3122
    %v4410 = vunpack.c.l.b16 %v3123
    %v4411 = vunpack.c.h.b16 %v3123
    %v4412 = vunpack.c.l.b16 %v3124
    %v4413 = vunpack.c.h.b16 %v3124
    %v4414 = vunpack.c.l.b16 %v3125
    %v4415 = vunpack.c.l.b16 %v3126
    %v4416 = vunpack.c.h.b16 %v3126
    %v4417 = vunpack.c.l.b16 %v3127
    %v4418 = vunpack.c.h.b16 %v3127
    %v4419 = vunpack.c.l.b16 %v3128
    %v4420 = vunpack.c.h.b16 %v3128
    %v4421 = vunpack.c.l.b16 %v3129
    %v4422 = vunpack.c.l.b16 %v3130
    %v4423 = vunpack.c.h.b16 %v3130
    %v4424 = vunpack.c.l.b16 %v3131
    %v4425 = vunpack.c.h.b16 %v3131
    %v4426 = vunpack.c.l.b16 %v3132
    %v4427 = vunpack.c.h.b16 %v3132
    %v4428 = vunpack.c.l.b16 %v3133
    %v4429 = vunpack.c.l.b16 %v3134
    %v4430 = vunpack.c.h.b16 %v3134
    %v4431 = vunpack.c.l.b16 %v3135
    %v4432 = vunpack.c.h.b16 %v3135
    %v4433 = vunpack.c.l.b16 %v3136
    %v4434 = vunpack.c.h.b16 %v3136
    %v4435 = vunpack.c.l.b16 %v3137
    %v4436 = vunpack.c.l.b16 %v3138
    %v4437 = vunpack.c.h.b16 %v3138
    %v4438 = vunpack.c.l.b16 %v3139
    %v4439 = vunpack.c.h.b16 %v3139
    %v4440 = vunpack.c.l.b16 %v3140
    %v4441 = vunpack.c.h.b16 %v3140
    %v4442 = vunpack.c.l.b16 %v3141
    %v4443 = vunpack.c.l.b16 %v3142
    %v4444 = vunpack.c.h.b16 %v3142
    %v4445 = vunpack.c.l.b16 %v3143
    %v4446 = vunpack.c.h.b16 %v3143
    %v4447 = vunpack.c.l.b16 %v3144
    %v4448 = vunpack.c.h.b16 %v3144
    %v4449 = vunpack.c.l.b16 %v3145
    %v4450 = vunpack.c.l.b16 %v3146
    %v4451 = vunpack.c.h.b16 %v3146
    %v4452 = vunpack.c.l.b16 %v3147
    %v4453 = vunpack.c.h.b16 %v3147
    %v4454 = vunpack.c.l.b16 %v3148
    %v4455 = vunpack.c.h.b16 %v3148
    %v4456 = vunpack.c.l.b16 %v3149
    %v4457 = vunpack.c.l.b16 %v3150
    %v4458 = vunpack.c.h.b16 %v3150
    %v4459 = vunpack.c.l.b16 %v3151
    %v4460 = vunpack.c.h.b16 %v3151
    %v4461 = vunpack.c.l.b16 %v3152
    %v4462 = vunpack.c.h.b16 %v3152
    %v4463 = vunpack.c.l.b16 %v3153
    %v4464 = vunpack.c.l.b16 %v3154
    %v4465 = vunpack.c.h.b16 %v3154
    %v4466 = vunpack.c.l.b16 %v3155
    %v4467 = vunpack.c.h.b16 %v3155
    %v4468 = vunpack.c.l.b16 %v3156
    %v4469 = vunpack.c.h.b16 %v3156
    %v4470 = vunpack.c.l.b16 %v3157
    %v4471 = vunpack.c.l.b16 %v3158
    %v4472 = vunpack.c.h.b16 %v3158
    %v4473 = vunpack.c.l.b16 %v3159
    %v4474 = vunpack.c.h.b16 %v3159
    %v4475 = vunpack.c.l.b16 %v3160
    %v4476 = vunpack.c.h.b16 %v3160
    %v4477 = vunpack.c.l.b16 %v3161
    %v4478 = vunpack.c.l.b16 %v3162
    %v4479 = vunpack.c.h.b16 %v3162
    %v4480 = vunpack.c.l.b16 %v3163
    %v4481 = vunpack.c.h.b16 %v3163
    %v4482 = vunpack.c.l.b16 %v3164
    %v4483 = vunpack.c.h.b16 %v3164
    %v4484 = vunpack.c.l.b16 %v3165
    %v4485 = vunpack.c.l.b16 %v3166
    %v4486 = vunpack.c.h.b16 %v3166
    %v4487 = vunpack.c.l.b16 %v3167
    %v4488 = vunpack.c.h.b16 %v3167
    %v4489 = vunpack.c.l.b16 %v3168
    %v4490 = vunpack.c.h.b16 %v3168
    %v4491 = vunpack.c.l.b16 %v3169
    %v4492 = vunpack.c.l.b16 %v3170
    %v4493 = vunpack.c.h.b16 %v3170
    %v4494 = vunpack.c.l.b16 %v3171
    %v4495 = vunpack.c.h.b16 %v3171
    %v4496 = vunpack.c.l.b16 %v3172
    %v4497 = vunpack.c.h.b16 %v3172
    %v4498 = vunpack.c.l.b16 %v3173
    %v4499 = vunpack.c.l.b16 %v3174
    %v4500 = vunpack.c.h.b16 %v3174
    %v4501 = vunpack.c.l.b16 %v3175
    %v4502 = vunpack.c.h.b16 %v3175
    %v4503 = vunpack.c.l.b16 %v3176
    %v4504 = vunpack.c.h.b16 %v3176
    %v4505 = vunpack.c.l.b16 %v3177
    %v4506 = vunpack.c.l.b16 %v3178
    %v4507 = vunpack.c.h.b16 %v3178
    %v4508 = vunpack.c.l.b16 %v3179
    %v4509 = vunpack.c.h.b16 %v3179
    %v4510 = vunpack.c.l.b16 %v3180
    %v4511 = vunpack.c.h.b16 %v3180
    %v4512 = vunpack.c.l.b16 %v3181
    %v4513 = vunpack.c.l.b16 %v3182
    %v4514 = vunpack.c.h.b16 %v3182
    %v4515 = vunpack.c.l.b16 %v3183
    %v4516 = vunpack.c.h.b16 %v3183
    %v4517 = vunpack.c.l.b16 %v3184
    %v4518 = vunpack.c.h.b16 %v3184
    %v4519 = vunpack.c.l.b16 %v3185
    %v4520 = vunpack.c.l.b16 %v3186
    %v4521 = vunpack.c.h.b16 %v3186
    %v4522 = vunpack.c.l.b16 %v3187
    %v4523 = vunpack.c.h.b16 %v3187
    %v4524 = vunpack.c.l.b16 %v3188
    %v4525 = vunpack.c.h.b16 %v3188
    %v4526 = vunpack.c.l.b16 %v3189
    %v4527 = vunpack.c.l.b16 %v3190
    %v4528 = vunpack.c.h.b16 %v3190
    %v4529 = vunpack.c.l.b16 %v3191
    %v4530 = vunpack.c.h.b16 %v3191
    %v4531 = vunpack.c.l.b16 %v3192
    %v4532 = vunpack.c.h.b16 %v3192
    %v4533 = vunpack.c.l.b16 %v3193
    %v4534 = vunpack.c.l.b16 %v3194
    %v4535 = vunpack.c.h.b16 %v3194
    %v4536 = vunpack.c.l.b16 %v3195
    %v4537 = vunpack.c.h.b16 %v3195
    %v4538 = vunpack.c.l.b16 %v3196
    %v4539 = vunpack.c.h.b16 %v3196
    %v4540 = vunpack.c.l.b16 %v3197
    %v4541 = vunpack.c.l.b16 %v3198
    %v4542 = vunpack.c.h.b16 %v3198
    %v4543 = vunpack.c.l.b16 %v3199
    %v4544 = vunpack.c.h.b16 %v3199
    %v4545 = vunpack.c.l.b16 %v3200
    %v4546 = vunpack.c.h.b16 %v3200
    %v4547 = vunpack.c.l.b16 %v3201
    %v4548 = vunpack.c.l.b16 %v3202
    %v4549 = vunpack.c.h.b16 %v3202
    %v4550 = vunpack.c.l.b16 %v3203
    %v4551 = vunpack.c.h.b16 %v3203
    %v4552 = vunpack.c.l.b16 %v3204
    %v4553 = vunpack.c.h.b16 %v3204
    %v4554 = vunpack.c.l.b16 %v3205
    %v4555 = vunpack.c.l.b16 %v3206
    %v4556 = vunpack.c.h.b16 %v3206
    %v4557 = vunpack.c.l.b16 %v3207
    %v4558 = vunpack.c.h.b16 %v3207
    %v4559 = vunpack.c.l.b16 %v3208
    %v4560 = vunpack.c.h.b16 %v3208
    %v4561 = vunpack.c.l.b16 %v3209
    %v4562 = vunpack.c.l.b16 %v3210
    %v4563 = vunpack.c.h.b16 %v3210
    %v4564 = vunpack.c.l.b16 %v3211
    %v4565 = vunpack.c.h.b16 %v3211
    %v4566 = vunpack.c.l.b16 %v3212
    %v4567 = vunpack.c.h.b16 %v3212
    %v4568 = vunpack.c.l.b16 %v3213
    %v4569 = vunpack.c.l.b16 %v3214
    %v4570 = vunpack.c.h.b16 %v3214
    %v4571 = vunpack.c.l.b16 %v3215
    %v4572 = vunpack.c.h.b16 %v3215
    %v4573 = vunpack.c.l.b16 %v3216
    %v4574 = vunpack.c.h.b16 %v3216
    %v4575 = vunpack.c.l.b16 %v3217
    %v4576 = vunpack.c.l.b16 %v3218
    %v4577 = vunpack.c.h.b16 %v3218
    %v4578 = vunpack.c.l.b16 %v3219
    %v4579 = vunpack.c.h.b16 %v3219
    %v4580 = vunpack.c.l.b16 %v3220
    %v4581 = vunpack.c.h.b16 %v3220
    %v4582 = vunpack.c.l.b16 %v3221
    %v4583 = vunpack.c.l.b16 %v3222
    %v4584 = vunpack.c.h.b16 %v3222
    %v4585 = vunpack.c.l.b16 %v3223
    %v4586 = vunpack.c.h.b16 %v3223
    %v4587 = vunpack.c.l.b16 %v3224
    %v4588 = vunpack.c.h.b16 %v3224
    %v4589 = vunpack.c.l.b16 %v3225
    %v4590 = vunpack.c.l.b16 %v3226
    %v4591 = vunpack.c.h.b16 %v3226
    %v4592 = vunpack.c.l.b16 %v3227
    %v4593 = vunpack.c.h.b16 %v3227
    %v4594 = vunpack.c.l.b16 %v3228
    %v4595 = vunpack.c.h.b16 %v3228
    %v4596 = vunpack.c.l.b16 %v3229
    %v4597 = vunpack.c.l.b16 %v3230
    %v4598 = vunpack.c.h.b16 %v3230
    %v4599 = vunpack.c.l.b16 %v3231
    %v4600 = vunpack.c.h.b16 %v3231
    %v4601 = vunpack.c.l.b16 %v3232
    %v4602 = vunpack.c.h.b16 %v3232
    %v4603 = vunpack.c.l.b16 %v3233
    %v4604 = vunpack.c.l.b16 %v3234
    %v4605 = vunpack.c.h.b16 %v3234
    %v4606 = vunpack.c.l.b16 %v3235
    %v4607 = vunpack.c.h.b16 %v3235
    %v4608 = vunpack.c.l.b16 %v3236
    %v4609 = vunpack.c.h.b16 %v3236
    %v4610 = vunpack.c.l.b16 %v3237
    %v4611 = vunpack.c.l.b16 %v3238
    %v4612 = vunpack.c.h.b16 %v3238
    %v4613 = vunpack.c.l.b16 %v3239
    %v4614 = vunpack.c.h.b16 %v3239
    %v4615 = vunpack.c.l.b16 %v3240
    %v4616 = vunpack.c.h.b16 %v3240
    %v4617 = vunpack.c.l.b16 %v3241
    %v4618 = vunpack.c.l.b16 %v3242
    %v4619 = vunpack.c.h.b16 %v3242
    %v4620 = vunpack.c.l.b16 %v3243
    %v4621 = vunpack.c.h.b16 %v3243
    %v4622 = vunpack.c.l.b16 %v3244
    %v4623 = vunpack.c.h.b16 %v3244
    %v4624 = vunpack.c.l.b16 %v3245
    %v4625 = vunpack.c.l.b16 %v3246
    %v4626 = vunpack.c.h.b16 %v3246
    %v4627 = vunpack.c.l.b16 %v3247
    %v4628 = vunpack.c.h.b16 %v3247
    %v4629 = vunpack.c.l.b16 %v3248
    %v4630 = vunpack.c.h.b16 %v3248
    %v4631 = vunpack.c.l.b16 %v3249
    %v4632 = vunpack.c.l.b16 %v3250
    %v4633 = vunpack.c.h.b16 %v3250
    %v4634 = vunpack.c.l.b16 %v3251
    %v4635 = vunpack.c.h.b16 %v3251
    %v4636 = vunpack.c.l.b16 %v3252
    %v4637 = vunpack.c.h.b16 %v3252
    %v4638 = vunpack.c.l.b16 %v3253
    %v4639 = vunpack.c.l.b16 %v3254
    %v4640 = vunpack.c.h.b16 %v3254
    %v4641 = vunpack.c.l.b16 %v3255
    %v4642 = vunpack.c.h.b16 %v3255
    %v4643 = vunpack.c.l.b16 %v3256
    %v4644 = vunpack.c.h.b16 %v3256
    %v4645 = vunpack.c.l.b16 %v3257
    %v4646 = vunpack.c.l.b16 %v3258
    %v4647 = vunpack.c.h.b16 %v3258
    %v4648 = vunpack.c.l.b16 %v3259
    %v4649 = vunpack.c.h.b16 %v3259
    %v4650 = vunpack.c.l.b16 %v3260
    %v4651 = vunpack.c.h.b16 %v3260
    %v4652 = vunpack.c.l.b16 %v3261
    %v4653 = vunpack.c.l.b16 %v3262
    %v4654 = vunpack.c.h.b16 %v3262
    %v4655 = vunpack.c.l.b16 %v3263
    %v4656 = vunpack.c.h.b16 %v3263
    %v4657 = vunpack.c.l.b16 %v3264
    %v4658 = vunpack.c.h.b16 %v3264
    %v4659 = vunpack.c.l.b16 %v3265
    %v4660 = vunpack.c.l.b16 %v3266
    %v4661 = vunpack.c.h.b16 %v3266
    %v4662 = vunpack.c.l.b16 %v3267
    %v4663 = vunpack.c.h.b16 %v3267
    %v4664 = vunpack.c.l.b16 %v3268
    %v4665 = vunpack.c.h.b16 %v3268
    %v4666 = vunpack.c.l.b16 %v3269
    %v4667 = vunpack.c.l.b16 %v3270
    %v4668 = vunpack.c.h.b16 %v3270
    %v4669 = vunpack.c.l.b16 %v3271
    %v4670 = vunpack.c.h.b16 %v3271
    %v4671 = vunpack.c.l.b16 %v3272
    %v4672 = vunpack.c.h.b16 %v3272
    %v4673 = vunpack.c.l.b16 %v3273
    %v4674 = vunpack.c.l.b16 %v3274
    %v4675 = vunpack.c.h.b16 %v3274
    %v4676 = vunpack.c.l.b16 %v3275
    %v4677 = vunpack.c.h.b16 %v3275
    %v4678 = vunpack.c.l.b16 %v3276
    %v4679 = vunpack.c.h.b16 %v3276
    %v4680 = vunpack.c.l.b16 %v3277
    %v4681 = vunpack.c.l.b16 %v3278
    %v4682 = vunpack.c.h.b16 %v3278
    %v4683 = vunpack.c.l.b16 %v3279
    %v4684 = vunpack.c.h.b16 %v3279
    %v4685 = vunpack.c.l.b16 %v3280
    %v4686 = vunpack.c.h.b16 %v3280
    %v4687 = vunpack.c.l.b16 %v3281
    %v4688 = vunpack.c.l.b16 %v3282
    %v4689 = vunpack.c.h.b16 %v3282
    %v4690 = vunpack.c.l.b16 %v3283
    %v4691 = vunpack.c.h.b16 %v3283
    %v4692 = vunpack.c.l.b16 %v3284
    %v4693 = vunpack.c.h.b16 %v3284
    %v4694 = vunpack.c.l.b16 %v3285
    %v4695 = vunpack.c.l.b16 %v3286
    %v4696 = vunpack.c.h.b16 %v3286
    %v4697 = vunpack.c.l.b16 %v3287
    %v4698 = vunpack.c.h.b16 %v3287
    %v4699 = vunpack.c.l.b16 %v3288
    %v4700 = vunpack.c.h.b16 %v3288
    %v4701 = vunpack.c.l.b16 %v3289
    %v4702 = vunpack.c.l.b16 %v3290
    %v4703 = vunpack.c.h.b16 %v3290
    %v4704 = vunpack.c.l.b16 %v3291
    %v4705 = vunpack.c.h.b16 %v3291
    %v4706 = vunpack.c.l.b16 %v3292
    %v4707 = vunpack.c.h.b16 %v3292
    %v4708 = vunpack.c.l.b16 %v3293
    %v4709 = vunpack.c.l.b16 %v3294
    %v4710 = vunpack.c.h.b16 %v3294
    %v4711 = vunpack.c.l.b16 %v3295
    %v4712 = vunpack.c.h.b16 %v3295
    %v4713 = vunpack.c.l.b16 %v3296
    %v4714 = vunpack.c.h.b16 %v3296
    %v4715 = vunpack.c.l.b16 %v3297
    %v4716 = vunpack.c.l.b16 %v3298
    %v4717 = vunpack.c.h.b16 %v3298
    %v4718 = vunpack.c.l.b16 %v3299
    %v4719 = vunpack.c.h.b16 %v3299
    %v4720 = vunpack.c.l.b16 %v3300
    %v4721 = vunpack.c.h.b16 %v3300
    %v4722 = vunpack.c.l.b16 %v3301
    %v4723 = vunpack.c.l.b16 %v3302
    %v4724 = vunpack.c.h.b16 %v3302
    %v4725 = vunpack.c.l.b16 %v3303
    %v4726 = vunpack.c.h.b16 %v3303
    %v4727 = vunpack.c.l.b16 %v3304
    %v4728 = vunpack.c.h.b16 %v3304
    %v4729 = vunpack.c.l.b16 %v3305
    %v4730 = vpack.c.b16 %v3841, %v3834
    %v4731 = vpack.c.b16 %v3842, %v3835
    %v4732 = vpack.c.b16 %v3843, %v3836
    %v4733 = vpack.c.b16 %v3844, %v3837
    %v4734 = vpack.c.b16 %v3845, %v3838
    %v4735 = vpack.c.b16 %v3846, %v3839
    %v4736 = vpack.c.b16 %v3847, %v3840
    %v4737 = vpack.c.b16 %v3855, %v3848
    %v4738 = vpack.c.b16 %v3856, %v3849
    %v4739 = vpack.c.b16 %v3857, %v3850
    %v4740 = vpack.c.b16 %v3858, %v3851
    %v4741 = vpack.c.b16 %v3859, %v3852
    %v4742 = vpack.c.b16 %v3860, %v3853
    %v4743 = vpack.c.b16 %v3861, %v3854
    %v4744 = vpack.c.b16 %v3869, %v3862
    %v4745 = vpack.c.b16 %v3870, %v3863
    %v4746 = vpack.c.b16 %v3871, %v3864
    %v4747 = vpack.c.b16 %v3872, %v3865
    %v4748 = vpack.c.b16 %v3873, %v3866
    %v4749 = vpack.c.b16 %v3874, %v3867
    %v4750 = vpack.c.b16 %v3875, %v3868
    %v4751 = vpack.c.b16 %v3883, %v3876
    %v4752 = vpack.c.b16 %v3884, %v3877
    %v4753 = vpack.c.b16 %v3885, %v3878
    %v4754 = vpack.c.b16 %v3886, %v3879
    %v4755 = vpack.c.b16 %v3887, %v3880
    %v4756 = vpack.c.b16 %v3888, %v3881
    %v4757 = vpack.c.b16 %v3889, %v3882
    %v4758 = vpack.c.b16 %v3897, %v3890
    %v4759 = vpack.c.b16 %v3898, %v3891
    %v4760 = vpack.c.b16 %v3899, %v3892
    %v4761 = vpack.c.b16 %v3900, %v3893
    %v4762 = vpack.c.b16 %v3901, %v3894
    %v4763 = vpack.c.b16 %v3902, %v3895
    %v4764 = vpack.c.b16 %v3903, %v3896
    %v4765 = vpack.c.b16 %v3911, %v3904
    %v4766 = vpack.c.b16 %v3912, %v3905
    %v4767 = vpack.c.b16 %v3913, %v3906
    %v4768 = vpack.c.b16 %v3914, %v3907
    %v4769 = vpack.c.b16 %v3915, %v3908
    %v4770 = vpack.c.b16 %v3916, %v3909
    %v4771 = vpack.c.b16 %v3917, %v3910
    %v4772 = vpack.c.b16 %v3925, %v3918
    %v4773 = vpack.c.b16 %v3926, %v3919
    %v4774 = vpack.c.b16 %v3927, %v3920
    %v4775 = vpack.c.b16 %v3928, %v3921
    %v4776 = vpack.c.b16 %v3929, %v3922
    %v4777 = vpack.c.b16 %v3930, %v3923
    %v4778 = vpack.c.b16 %v3931, %v3924
    %v4779 = vpack.c.b16 %v3939, %v3932
    %v4780 = vpack.c.b16 %v3940, %v3933
    %v4781 = vpack.c.b16 %v3941, %v3934
    %v4782 = vpack.c.b16 %v3942, %v3935
    %v4783 = vpack.c.b16 %v3943, %v3936
    %v4784 = vpack.c.b16 %v3944, %v3937
    %v4785 = vpack.c.b16 %v3945, %v3938
    %v4786 = vpack.c.b16 %v3953, %v3946
    %v4787 = vpack.c.b16 %v3954, %v3947
    %v4788 = vpack.c.b16 %v3955, %v3948
    %v4789 = vpack.c.b16 %v3956, %v3949
    %v4790 = vpack.c.b16 %v3957, %v3950
    %v4791 = vpack.c.b16 %v3958, %v3951
    %v4792 = vpack.c.b16 %v3959, %v3952
    %v4793 = vpack.c.b16 %v3967, %v3960
    %v4794 = vpack.c.b16 %v3968, %v3961
    %v4795 = vpack.c.b16 %v3969, %v3962
    %v4796 = vpack.c.b16 %v3970, %v3963
    %v4797 = vpack.c.b16 %v3971, %v3964
    %v4798 = vpack.c.b16 %v3972, %v3965
    %v4799 = vpack.c.b16 %v3973, %v3966
    %v4800 = vpack.c.b16 %v3981, %v3974
    %v4801 = vpack.c.b16 %v3982, %v3975
    %v4802 = vpack.c.b16 %v3983, %v3976
    %v4803 = vpack.c.b16 %v3984, %v3977
    %v4804 = vpack.c.b16 %v3985, %v3978
    %v4805 = vpack.c.b16 %v3986, %v3979
    %v4806 = vpack.c.b16 %v3987, %v3980
    %v4807 = vpack.c.b16 %v3995, %v3988
    %v4808 = vpack.c.b16 %v3996, %v3989
    %v4809 = vpack.c.b16 %v3997, %v3990
    %v4810 = vpack.c.b16 %v3998, %v3991
    %v4811 = vpack.c.b16 %v3999, %v3992
    %v4812 = vpack.c.b16 %v4000, %v3993
    %v4813 = vpack.c.b16 %v4001, %v3994
    %v4814 = vpack.c.b16 %v4009, %v4002
    %v4815 = vpack.c.b16 %v4010, %v4003
    %v4816 = vpack.c.b16 %v4011, %v4004
    %v4817 = vpack.c.b16 %v4012, %v4005
    %v4818 = vpack.c.b16 %v4013, %v4006
    %v4819 = vpack.c.b16 %v4014, %v4007
    %v4820 = vpack.c.b16 %v4015, %v4008
    %v4821 = vpack.c.b16 %v4023, %v4016
    %v4822 = vpack.c.b16 %v4024, %v4017
    %v4823 = vpack.c.b16 %v4025, %v4018
    %v4824 = vpack.c.b16 %v4026, %v4019
    %v4825 = vpack.c.b16 %v4027, %v4020
    %v4826 = vpack.c.b16 %v4028, %v4021
    %v4827 = vpack.c.b16 %v4029, %v4022
    %v4828 = vpack.c.b16 %v4037, %v4030
    %v4829 = vpack.c.b16 %v4038, %v4031
    %v4830 = vpack.c.b16 %v4039, %v4032
    %v4831 = vpack.c.b16 %v4040, %v4033
    %v4832 = vpack.c.b16 %v4041, %v4034
    %v4833 = vpack.c.b16 %v4042, %v4035
    %v4834 = vpack.c.b16 %v4043, %v4036
    %v4835 = vpack.c.b16 %v4051, %v4044
    %v4836 = vpack.c.b16 %v4052, %v4045
    %v4837 = vpack.c.b16 %v4053, %v4046
    %v4838 = vpack.c.b16 %v4054, %v4047
    %v4839 = vpack.c.b16 %v4055, %v4048
    %v4840 = vpack.c.b16 %v4056, %v4049
    %v4841 = vpack.c.b16 %v4057, %v4050
    %v4842 = vpack.c.b16 %v4065, %v4058
    %v4843 = vpack.c.b16 %v4066, %v4059
    %v4844 = vpack.c.b16 %v4067, %v4060
    %v4845 = vpack.c.b16 %v4068, %v4061
    %v4846 = vpack.c.b16 %v4069, %v4062
    %v4847 = vpack.c.b16 %v4070, %v4063
    %v4848 = vpack.c.b16 %v4071, %v4064
    %v4849 = vpack.c.b16 %v4079, %v4072
    %v4850 = vpack.c.b16 %v4080, %v4073
    %v4851 = vpack.c.b16 %v4081, %v4074
    %v4852 = vpack.c.b16 %v4082, %v4075
    %v4853 = vpack.c.b16 %v4083, %v4076
    %v4854 = vpack.c.b16 %v4084, %v4077
    %v4855 = vpack.c.b16 %v4085, %v4078
    %v4856 = vpack.c.b16 %v4093, %v4086
    %v4857 = vpack.c.b16 %v4094, %v4087
    %v4858 = vpack.c.b16 %v4095, %v4088
    %v4859 = vpack.c.b16 %v4096, %v4089
    %v4860 = vpack.c.b16 %v4097, %v4090
    %v4861 = vpack.c.b16 %v4098, %v4091
    %v4862 = vpack.c.b16 %v4099, %v4092
    %v4863 = vpack.c.b16 %v4107, %v4100
    %v4864 = vpack.c.b16 %v4108, %v4101
    %v4865 = vpack.c.b16 %v4109, %v4102
    %v4866 = vpack.c.b16 %v4110, %v4103
    %v4867 = vpack.c.b16 %v4111, %v4104
    %v4868 = vpack.c.b16 %v4112, %v4105
    %v4869 = vpack.c.b16 %v4113, %v4106
    %v4870 = vpack.c.b16 %v4121, %v4114
    %v4871 = vpack.c.b16 %v4122, %v4115
    %v4872 = vpack.c.b16 %v4123, %v4116
    %v4873 = vpack.c.b16 %v4124, %v4117
    %v4874 = vpack.c.b16 %v4125, %v4118
    %v4875 = vpack.c.b16 %v4126, %v4119
    %v4876 = vpack.c.b16 %v4127, %v4120
    %v4877 = vpack.c.b16 %v4135, %v4128
    %v4878 = vpack.c.b16 %v4136, %v4129
    %v4879 = vpack.c.b16 %v4137, %v4130
    %v4880 = vpack.c.b16 %v4138, %v4131
    %v4881 = vpack.c.b16 %v4139, %v4132
    %v4882 = vpack.c.b16 %v4140, %v4133
    %v4883 = vpack.c.b16 %v4141, %v4134
    %v4884 = vpack.c.b16 %v4149, %v4142
    %v4885 = vpack.c.b16 %v4150, %v4143
    %v4886 = vpack.c.b16 %v4151, %v4144
    %v4887 = vpack.c.b16 %v4152, %v4145
    %v4888 = vpack.c.b16 %v4153, %v4146
    %v4889 = vpack.c.b16 %v4154, %v4147
    %v4890 = vpack.c.b16 %v4155, %v4148
    %v4891 = vpack.c.b16 %v4163, %v4156
    %v4892 = vpack.c.b16 %v4164, %v4157
    %v4893 = vpack.c.b16 %v4165, %v4158
    %v4894 = vpack.c.b16 %v4166, %v4159
    %v4895 = vpack.c.b16 %v4167, %v4160
    %v4896 = vpack.c.b16 %v4168, %v4161
    %v4897 = vpack.c.b16 %v4169, %v4162
    %v4898 = vpack.c.b16 %v4177, %v4170
    %v4899 = vpack.c.b16 %v4178, %v4171
    %v4900 = vpack.c.b16 %v4179, %v4172
    %v4901 = vpack.c.b16 %v4180, %v4173
    %v4902 = vpack.c.b16 %v4181, %v4174
    %v4903 = vpack.c.b16 %v4182, %v4175
    %v4904 = vpack.c.b16 %v4183, %v4176
    %v4905 = vpack.c.b16 %v4191, %v4184
    %v4906 = vpack.c.b16 %v4192, %v4185
    %v4907 = vpack.c.b16 %v4193, %v4186
    %v4908 = vpack.c.b16 %v4194, %v4187
    %v4909 = vpack.c.b16 %v4195, %v4188
    %v4910 = vpack.c.b16 %v4196, %v4189
    %v4911 = vpack.c.b16 %v4197, %v4190
    %v4912 = vpack.c.b16 %v4205, %v4198
    %v4913 = vpack.c.b16 %v4206, %v4199
    %v4914 = vpack.c.b16 %v4207, %v4200
    %v4915 = vpack.c.b16 %v4208, %v4201
    %v4916 = vpack.c.b16 %v4209, %v4202
    %v4917 = vpack.c.b16 %v4210, %v4203
    %v4918 = vpack.c.b16 %v4211, %v4204
    %v4919 = vpack.c.b16 %v4219, %v4212
    %v4920 = vpack.c.b16 %v4220, %v4213
    %v4921 = vpack.c.b16 %v4221, %v4214
    %v4922 = vpack.c.b16 %v4222, %v4215
    %v4923 = vpack.c.b16 %v4223, %v4216
    %v4924 = vpack.c.b16 %v4224, %v4217
    %v4925 = vpack.c.b16 %v4225, %v4218
    %v4926 = vpack.c.b16 %v4233, %v4226
    %v4927 = vpack.c.b16 %v4234, %v4227
    %v4928 = vpack.c.b16 %v4235, %v4228
    %v4929 = vpack.c.b16 %v4236, %v4229
    %v4930 = vpack.c.b16 %v4237, %v4230
    %v4931 = vpack.c.b16 %v4238, %v4231
    %v4932 = vpack.c.b16 %v4239, %v4232
    %v4933 = vpack.c.b16 %v4247, %v4240
    %v4934 = vpack.c.b16 %v4248, %v4241
    %v4935 = vpack.c.b16 %v4249, %v4242
    %v4936 = vpack.c.b16 %v4250, %v4243
    %v4937 = vpack.c.b16 %v4251, %v4244
    %v4938 = vpack.c.b16 %v4252, %v4245
    %v4939 = vpack.c.b16 %v4253, %v4246
    %v4940 = vpack.c.b16 %v4261, %v4254
    %v4941 = vpack.c.b16 %v4262, %v4255
    %v4942 = vpack.c.b16 %v4263, %v4256
    %v4943 = vpack.c.b16 %v4264, %v4257
    %v4944 = vpack.c.b16 %v4265, %v4258
    %v4945 = vpack.c.b16 %v4266, %v4259
    %v4946 = vpack.c.b16 %v4267, %v4260
    %v4947 = vpack.c.b16 %v4275, %v4268
    %v4948 = vpack.c.b16 %v4276, %v4269
    %v4949 = vpack.c.b16 %v4277, %v4270
    %v4950 = vpack.c.b16 %v4278, %v4271
    %v4951 = vpack.c.b16 %v4279, %v4272
    %v4952 = vpack.c.b16 %v4280, %v4273
    %v4953 = vpack.c.b16 %v4281, %v4274
    %v4954 = vpack.c.b16 %v4289, %v4282
    %v4955 = vpack.c.b16 %v4290, %v4283
    %v4956 = vpack.c.b16 %v4291, %v4284
    %v4957 = vpack.c.b16 %v4292, %v4285
    %v4958 = vpack.c.b16 %v4293, %v4286
    %v4959 = vpack.c.b16 %v4294, %v4287
    %v4960 = vpack.c.b16 %v4295, %v4288
    %v4961 = vpack.c.b16 %v4303, %v4296
    %v4962 = vpack.c.b16 %v4304, %v4297
    %v4963 = vpack.c.b16 %v4305, %v4298
    %v4964 = vpack.c.b16 %v4306, %v4299
    %v4965 = vpack.c.b16 %v4307, %v4300
    %v4966 = vpack.c.b16 %v4308, %v4301
    %v4967 = vpack.c.b16 %v4309, %v4302
    %v4968 = vpack.c.b16 %v4317, %v4310
    %v4969 = vpack.c.b16 %v4318, %v4311
    %v4970 = vpack.c.b16 %v4319, %v4312
    %v4971 = vpack.c.b16 %v4320, %v4313
    %v4972 = vpack.c.b16 %v4321, %v4314
    %v4973 = vpack.c.b16 %v4322, %v4315
    %v4974 = vpack.c.b16 %v4323, %v4316
    %v4975 = vpack.c.b16 %v4331, %v4324
    %v4976 = vpack.c.b16 %v4332, %v4325
    %v4977 = vpack.c.b16 %v4333, %v4326
    %v4978 = vpack.c.b16 %v4334, %v4327
    %v4979 = vpack.c.b16 %v4335, %v4328
    %v4980 = vpack.c.b16 %v4336, %v4329
    %v4981 = vpack.c.b16 %v4337, %v4330
    %v4982 = vpack.c.b16 %v4345, %v4338
    %v4983 = vpack.c.b16 %v4346, %v4339
    %v4984 = vpack.c.b16 %v4347, %v4340
    %v4985 = vpack.c.b16 %v4348, %v4341
    %v4986 = vpack.c.b16 %v4349, %v4342
    %v4987 = vpack.c.b16 %v4350, %v4343
    %v4988 = vpack.c.b16 %v4351, %v4344
    %v4989 = vpack.c.b16 %v4359, %v4352
    %v4990 = vpack.c.b16 %v4360, %v4353
    %v4991 = vpack.c.b16 %v4361, %v4354
    %v4992 = vpack.c.b16 %v4362, %v4355
    %v4993 = vpack.c.b16 %v4363, %v4356
    %v4994 = vpack.c.b16 %v4364, %v4357
    %v4995 = vpack.c.b16 %v4365, %v4358
    %v4996 = vpack.c.b16 %v4373, %v4366
    %v4997 = vpack.c.b16 %v4374, %v4367
    %v4998 = vpack.c.b16 %v4375, %v4368
    %v4999 = vpack.c.b16 %v4376, %v4369
    %v5000 = vpack.c.b16 %v4377, %v4370
    %v5001 = vpack.c.b16 %v4378, %v4371
    %v5002 = vpack.c.b16 %v4379, %v4372
    %v5003 = vpack.c.b16 %v4387, %v4380
    %v5004 = vpack.c.b16 %v4388, %v4381
    %v5005 = vpack.c.b16 %v4389, %v4382
    %v5006 = vpack.c.b16 %v4390, %v4383
    %v5007 = vpack.c.b16 %v4391, %v4384
    %v5008 = vpack.c.b16 %v4392, %v4385
    %v5009 = vpack.c.b16 %v4393, %v4386
    %v5010 = vpack.c.b16 %v4401, %v4394
    %v5011 = vpack.c.b16 %v4402, %v4395
    %v5012 = vpack.c.b16 %v4403, %v4396
    %v5013 = vpack.c.b16 %v4404, %v4397
    %v5014 = vpack.c.b16 %v4405, %v4398
    %v5015 = vpack.c.b16 %v4406, %v4399
    %v5016 = vpack.c.b16 %v4407, %v4400
    %v5017 = vpack.c.b16 %v4415, %v4408
    %v5018 = vpack.c.b16 %v4416, %v4409
    %v5019 = vpack.c.b16 %v4417, %v4410
    %v5020 = vpack.c.b16 %v4418, %v4411
    %v5021 = vpack.c.b16 %v4419, %v4412
    %v5022 = vpack.c.b16 %v4420, %v4413
    %v5023 = vpack.c.b16 %v4421, %v4414
    %v5024 = vpack.c.b16 %v4429, %v4422
    %v5025 = vpack.c.b16 %v4430, %v4423
    %v5026 = vpack.c.b16 %v4431, %v4424
    %v5027 = vpack.c.b16 %v4432, %v4425
    %v5028 = vpack.c.b16 %v4433, %v4426
    %v5029 = vpack.c.b16 %v4434, %v4427
    %v5030 = vpack.c.b16 %v4435, %v4428
    %v5031 = vpack.c.b16 %v4443, %v4436
    %v5032 = vpack.c.b16 %v4444, %v4437
    %v5033 = vpack.c.b16 %v4445, %v4438
    %v5034 = vpack.c.b16 %v4446, %v4439
    %v5035 = vpack.c.b16 %v4447, %v4440
    %v5036 = vpack.c.b16 %v4448, %v4441
    %v5037 = vpack.c.b16 %v4449, %v4442
    %v5038 = vpack.c.b16 %v4457, %v4450
    %v5039 = vpack.c.b16 %v4458, %v4451
    %v5040 = vpack.c.b16 %v4459, %v4452
    %v5041 = vpack.c.b16 %v4460, %v4453
    %v5042 = vpack.c.b16 %v4461, %v4454
    %v5043 = vpack.c.b16 %v4462, %v4455
    %v5044 = vpack.c.b16 %v4463, %v4456
    %v5045 = vpack.c.b16 %v4471, %v4464
    %v5046 = vpack.c.b16 %v4472, %v4465
    %v5047 = vpack.c.b16 %v4473, %v4466
    %v5048 = vpack.c.b16 %v4474, %v4467
    %v5049 = vpack.c.b16 %v4475, %v4468
    %v5050 = vpack.c.b16 %v4476, %v4469
    %v5051 = vpack.c.b16 %v4477, %v4470
    %v5052 = vpack.c.b16 %v4485, %v4478
    %v5053 = vpack.c.b16 %v4486, %v4479
    %v5054 = vpack.c.b16 %v4487, %v4480
    %v5055 = vpack.c.b16 %v4488, %v4481
    %v5056 = vpack.c.b16 %v4489, %v4482
    %v5057 = vpack.c.b16 %v4490, %v4483
    %v5058 = vpack.c.b16 %v4491, %v4484
    %v5059 = vpack.c.b16 %v4499, %v4492
    %v5060 = vpack.c.b16 %v4500, %v4493
    %v5061 = vpack.c.b16 %v4501, %v4494
    %v5062 = vpack.c.b16 %v4502, %v4495
    %v5063 = vpack.c.b16 %v4503, %v4496
    %v5064 = vpack.c.b16 %v4504, %v4497
    %v5065 = vpack.c.b16 %v4505, %v4498
    %v5066 = vpack.c.b16 %v4513, %v4506
    %v5067 = vpack.c.b16 %v4514, %v4507
    %v5068 = vpack.c.b16 %v4515, %v4508
    %v5069 = vpack.c.b16 %v4516, %v4509
    %v5070 = vpack.c.b16 %v4517, %v4510
    %v5071 = vpack.c.b16 %v4518, %v4511
    %v5072 = vpack.c.b16 %v4519, %v4512
    %v5073 = vpack.c.b16 %v4527, %v4520
    %v5074 = vpack.c.b16 %v4528, %v4521
    %v5075 = vpack.c.b16 %v4529, %v4522
    %v5076 = vpack.c.b16 %v4530, %v4523
    %v5077 = vpack.c.b16 %v4531, %v4524
    %v5078 = vpack.c.b16 %v4532, %v4525
    %v5079 = vpack.c.b16 %v4533, %v4526
    %v5080 = vpack.c.b16 %v4541, %v4534
    %v5081 = vpack.c.b16 %v4542, %v4535
    %v5082 = vpack.c.b16 %v4543, %v4536
    %v5083 = vpack.c.b16 %v4544, %v4537
    %v5084 = vpack.c.b16 %v4545, %v4538
    %v5085 = vpack.c.b16 %v4546, %v4539
    %v5086 = vpack.c.b16 %v4547, %v4540
    %v5087 = vpack.c.b16 %v4555, %v4548
    %v5088 = vpack.c.b16 %v4556, %v4549
    %v5089 = vpack.c.b16 %v4557, %v4550
    %v5090 = vpack.c.b16 %v4558, %v4551
    %v5091 = vpack.c.b16 %v4559, %v4552
    %v5092 = vpack.c.b16 %v4560, %v4553
    %v5093 = vpack.c.b16 %v4561, %v4554
    %v5094 = vpack.c.b16 %v4569, %v4562
    %v5095 = vpack.c.b16 %v4570, %v4563
    %v5096 = vpack.c.b16 %v4571, %v4564
    %v5097 = vpack.c.b16 %v4572, %v4565
    %v5098 = vpack.c.b16 %v4573, %v4566
    %v5099 = vpack.c.b16 %v4574, %v4567
    %v5100 = vpack.c.b16 %v4575, %v4568
    %v5101 = vpack.c.b16 %v4583, %v4576
    %v5102 = vpack.c.b16 %v4584, %v4577
    %v5103 = vpack.c.b16 %v4585, %v4578
    %v5104 = vpack.c.b16 %v4586, %v4579
    %v5105 = vpack.c.b16 %v4587, %v4580
    %v5106 = vpack.c.b16 %v4588, %v4581
    %v5107 = vpack.c.b16 %v4589, %v4582
    %v5108 = vpack.c.b16 %v4597, %v4590
    %v5109 = vpack.c.b16 %v4598, %v4591
    %v5110 = vpack.c.b16 %v4599, %v4592
    %v5111 = vpack.c.b16 %v4600, %v4593
    %v5112 = vpack.c.b16 %v4601, %v4594
    %v5113 = vpack.c.b16 %v4602, %v4595
    %v5114 = vpack.c.b16 %v4603, %v4596
    %v5115 = vpack.c.b16 %v4611, %v4604
    %v5116 = vpack.c.b16 %v4612, %v4605
    %v5117 = vpack.c.b16 %v4613, %v4606
    %v5118 = vpack.c.b16 %v4614, %v4607
    %v5119 = vpack.c.b16 %v4615, %v4608
    %v5120 = vpack.c.b16 %v4616, %v4609
    %v5121 = vpack.c.b16 %v4617, %v4610
    %v5122 = vpack.c.b16 %v4625, %v4618
    %v5123 = vpack.c.b16 %v4626, %v4619
    %v5124 = vpack.c.b16 %v4627, %v4620
    %v5125 = vpack.c.b16 %v4628, %v4621
    %v5126 = vpack.c.b16 %v4629, %v4622
    %v5127 = vpack.c.b16 %v4630, %v4623
    %v5128 = vpack.c.b16 %v4631, %v4624
    %v5129 = vpack.c.b16 %v4639, %v4632
    %v5130 = vpack.c.b16 %v4640, %v4633
    %v5131 = vpack.c.b16 %v4641, %v4634
    %v5132 = vpack.c.b16 %v4642, %v4635
    %v5133 = vpack.c.b16 %v4643, %v4636
    %v5134 = vpack.c.b16 %v4644, %v4637
    %v5135 = vpack.c.b16 %v4645, %v4638
    %v5136 = vpack.c.b16 %v4653, %v4646
    %v5137 = vpack.c.b16 %v4654, %v4647
    %v5138 = vpack.c.b16 %v4655, %v4648
    %v5139 = vpack.c.b16 %v4656, %v4649
    %v5140 = vpack.c.b16 %v4657, %v4650
    %v5141 = vpack.c.b16 %v4658, %v4651
    %v5142 = vpack.c.b16 %v4659, %v4652
    %v5143 = vpack.c.b16 %v4667, %v4660
    %v5144 = vpack.c.b16 %v4668, %v4661
    %v5145 = vpack.c.b16 %v4669, %v4662
    %v5146 = vpack.c.b16 %v4670, %v4663
    %v5147 = vpack.c.b16 %v4671, %v4664
    %v5148 = vpack.c.b16 %v4672, %v4665
    %v5149 = vpack.c.b16 %v4673, %v4666
    %v5150 = vpack.c.b16 %v4681, %v4674
    %v5151 = vpack.c.b16 %v4682, %v4675
    %v5152 = vpack.c.b16 %v4683, %v4676
    %v5153 = vpack.c.b16 %v4684, %v4677
    %v5154 = vpack.c.b16 %v4685, %v4678
    %v5155 = vpack.c.b16 %v4686, %v4679
    %v5156 = vpack.c.b16 %v4687, %v4680
    %v5157 = vpack.c.b16 %v4695, %v4688
    %v5158 = vpack.c.b16 %v4696, %v4689
    %v5159 = vpack.c.b16 %v4697, %v4690
    %v5160 = vpack.c.b16 %v4698, %v4691
    %v5161 = vpack.c.b16 %v4699, %v4692
    %v5162 = vpack.c.b16 %v4700, %v4693
    %v5163 = vpack.c.b16 %v4701, %v4694
    %v5164 = vpack.c.b16 %v4709, %v4702
    %v5165 = vpack.c.b16 %v4710, %v4703
    %v5166 = vpack.c.b16 %v4711, %v4704
    %v5167 = vpack.c.b16 %v4712, %v4705
    %v5168 = vpack.c.b16 %v4713, %v4706
    %v5169 = vpack.c.b16 %v4714, %v4707
    %v5170 = vpack.c.b16 %v4715, %v4708
    %v5171 = vpack.c.b16 %v4723, %v4716
    %v5172 = vpack.c.b16 %v4724, %v4717
    %v5173 = vpack.c.b16 %v4725, %v4718
    %v5174 = vpack.c.b16 %v4726, %v4719
    %v5175 = vpack.c.b16 %v4727, %v4720
    %v5176 = vpack.c.b16 %v4728, %v4721
    %v5177 = vpack.c.b16 %v4729, %v4722
    %5626 = vmatpush.bf16.msra.mxu0 %v4779
    %5627 = vmatpush.bf16.msra.mxu0 %v4772
    %5628 = vmatpush.bf16.msra.mxu0 %v4765
    %5629 = vmatpush.bf16.msra.mxu0 %v4758
    %5630 = vmatpush.bf16.msra.mxu0 %v4751
    %5631 = vmatpush.bf16.msra.mxu0 %v4744
    %5632 = vmatpush.bf16.msra.mxu0 %v4737
    %5633 = vmatpush.bf16.msra.mxu0 %v4730
    %5634 = vmatmul.bf16.gmra.mxu0 %v2786
    %v5635 = vpop.f32.mrf.mxu0
    %v5636 = vadd.f32 %v3308, %v5635
    %v5637 = vpop.f32.mrf.mxu0
    %5638 = vdwg.mxu0
    %5639 = vmatpush.bf16.msra.mxu0 %v4835
    %5640 = vmatpush.bf16.msra.mxu0 %v4828
    %5641 = vmatpush.bf16.msra.mxu0 %v4821
    %5642 = vmatpush.bf16.msra.mxu0 %v4814
    %5643 = vmatpush.bf16.msra.mxu0 %v4807
    %5644 = vmatpush.bf16.msra.mxu0 %v4800
    %5645 = vmatpush.bf16.msra.mxu0 %v4793
    %5646 = vmatpush.bf16.msra.mxu0 %v4786
    %5647 = vmatmul.bf16.gmra.mxu0 %v2787
    %v5648 = vpop.f32.mrf.mxu0
    %v5649 = vadd.f32 %v5636, %v5648
    %v5650 = vpop.f32.mrf.mxu0
    %5651 = vdwg.mxu0
    %5652 = vmatpush.bf16.msra.mxu0 %v4891
    %5653 = vmatpush.bf16.msra.mxu0 %v4884
    %5654 = vmatpush.bf16.msra.mxu0 %v4877
    %5655 = vmatpush.bf16.msra.mxu0 %v4870
    %5656 = vmatpush.bf16.msra.mxu0 %v4863
    %5657 = vmatpush.bf16.msra.mxu0 %v4856
    %5658 = vmatpush.bf16.msra.mxu0 %v4849
    %5659 = vmatpush.bf16.msra.mxu0 %v4842
    %5660 = vmatmul.bf16.gmra.mxu0 %v2788
    %v5661 = vpop.f32.mrf.mxu0
    %v5662 = vadd.f32 %v5649, %v5661
    %v5663 = vpop.f32.mrf.mxu0
    %5664 = vdwg.mxu0
    %5665 = vmatpush.bf16.msra.mxu0 %v4947
    %5666 = vmatpush.bf16.msra.mxu0 %v4940
    %5667 = vmatpush.bf16.msra.mxu0 %v4933
    %5668 = vmatpush.bf16.msra.mxu0 %v4926
    %5669 = vmatpush.bf16.msra.mxu0 %v4919
    %5670 = vmatpush.bf16.msra.mxu0 %v4912
    %5671 = vmatpush.bf16.msra.mxu0 %v4905
    %5672 = vmatpush.bf16.msra.mxu0 %v4898
    %5673 = vmatmul.bf16.gmra.mxu0 %v2789
    %v5674 = vpop.f32.mrf.mxu0
    %v5675 = vadd.f32 %v5662, %v5674
    %v5676 = vpop.f32.mrf.mxu0
    %5677 = vdwg.mxu0
    %5678 = vmatpush.bf16.msra.mxu0 %v5003
    %5679 = vmatpush.bf16.msra.mxu0 %v4996
    %5680 = vmatpush.bf16.msra.mxu0 %v4989
    %5681 = vmatpush.bf16.msra.mxu0 %v4982
    %5682 = vmatpush.bf16.msra.mxu0 %v4975
    %5683 = vmatpush.bf16.msra.mxu0 %v4968
    %5684 = vmatpush.bf16.msra.mxu0 %v4961
    %5685 = vmatpush.bf16.msra.mxu0 %v4954
    %5686 = vmatmul.bf16.gmra.mxu0 %v2790
    %v5687 = vpop.f32.mrf.mxu0
    %v5688 = vadd.f32 %v5675, %v5687
    %v5689 = vpop.f32.mrf.mxu0
    %5690 = vdwg.mxu0
    %5691 = vmatpush.bf16.msra.mxu0 %v5059
    %5692 = vmatpush.bf16.msra.mxu0 %v5052
    %5693 = vmatpush.bf16.msra.mxu0 %v5045
    %5694 = vmatpush.bf16.msra.mxu0 %v5038
    %5695 = vmatpush.bf16.msra.mxu0 %v5031
    %5696 = vmatpush.bf16.msra.mxu0 %v5024
    %5697 = vmatpush.bf16.msra.mxu0 %v5017
    %5698 = vmatpush.bf16.msra.mxu0 %v5010
    %5699 = vmatmul.bf16.gmra.mxu0 %v2791
    %v5700 = vpop.f32.mrf.mxu0
    %v5701 = vadd.f32 %v5688, %v5700
    %v5702 = vpop.f32.mrf.mxu0
    %5703 = vdwg.mxu0
    %5704 = vmatpush.bf16.msra.mxu0 %v5115
    %5705 = vmatpush.bf16.msra.mxu0 %v5108
    %5706 = vmatpush.bf16.msra.mxu0 %v5101
    %5707 = vmatpush.bf16.msra.mxu0 %v5094
    %5708 = vmatpush.bf16.msra.mxu0 %v5087
    %5709 = vmatpush.bf16.msra.mxu0 %v5080
    %5710 = vmatpush.bf16.msra.mxu0 %v5073
    %5711 = vmatpush.bf16.msra.mxu0 %v5066
    %5712 = vmatmul.bf16.gmra.mxu0 %v2792
    %v5713 = vpop.f32.mrf.mxu0
    %v5714 = vadd.f32 %v5701, %v5713
    %v5715 = vpop.f32.mrf.mxu0
    %5716 = vdwg.mxu0
    %5717 = vmatpush.bf16.msra.mxu0 %v5171
    %5718 = vmatpush.bf16.msra.mxu0 %v5164
    %5719 = vmatpush.bf16.msra.mxu0 %v5157
    %5720 = vmatpush.bf16.msra.mxu0 %v5150
    %5721 = vmatpush.bf16.msra.mxu0 %v5143
    %5722 = vmatpush.bf16.msra.mxu0 %v5136
    %5723 = vmatpush.bf16.msra.mxu0 %v5129
    %5724 = vmatpush.bf16.msra.mxu0 %v5122
    %5725 = vmatmul.bf16.gmra.mxu0 %v2793
    %v5726 = vpop.f32.mrf.mxu0
    %v5727 = vadd.f32 %v5714, %v5726
    %v5728 = vpop.f32.mrf.mxu0
    %5729 = vdwg.mxu0
    %5730 = vmatpush.bf16.msra.mxu0 %v4780
    %5731 = vmatpush.bf16.msra.mxu0 %v4773
    %5732 = vmatpush.bf16.msra.mxu0 %v4766
    %5733 = vmatpush.bf16.msra.mxu0 %v4759
    %5734 = vmatpush.bf16.msra.mxu0 %v4752
    %5735 = vmatpush.bf16.msra.mxu0 %v4745
    %5736 = vmatpush.bf16.msra.mxu0 %v4738
    %5737 = vmatpush.bf16.msra.mxu0 %v4731
    %5738 = vmatmul.bf16.gmra.mxu0 %v2786
    %v5739 = vpop.f32.mrf.mxu0
    %v5740 = vadd.f32 %v3309, %v5739
    %v5741 = vpop.f32.mrf.mxu0
    %5742 = vdwg.mxu0
    %5743 = vmatpush.bf16.msra.mxu0 %v4836
    %5744 = vmatpush.bf16.msra.mxu0 %v4829
    %5745 = vmatpush.bf16.msra.mxu0 %v4822
    %5746 = vmatpush.bf16.msra.mxu0 %v4815
    %5747 = vmatpush.bf16.msra.mxu0 %v4808
    %5748 = vmatpush.bf16.msra.mxu0 %v4801
    %5749 = vmatpush.bf16.msra.mxu0 %v4794
    %5750 = vmatpush.bf16.msra.mxu0 %v4787
    %5751 = vmatmul.bf16.gmra.mxu0 %v2787
    %v5752 = vpop.f32.mrf.mxu0
    %v5753 = vadd.f32 %v5740, %v5752
    %v5754 = vpop.f32.mrf.mxu0
    %5755 = vdwg.mxu0
    %5756 = vmatpush.bf16.msra.mxu0 %v4892
    %5757 = vmatpush.bf16.msra.mxu0 %v4885
    %5758 = vmatpush.bf16.msra.mxu0 %v4878
    %5759 = vmatpush.bf16.msra.mxu0 %v4871
    %5760 = vmatpush.bf16.msra.mxu0 %v4864
    %5761 = vmatpush.bf16.msra.mxu0 %v4857
    %5762 = vmatpush.bf16.msra.mxu0 %v4850
    %5763 = vmatpush.bf16.msra.mxu0 %v4843
    %5764 = vmatmul.bf16.gmra.mxu0 %v2788
    %v5765 = vpop.f32.mrf.mxu0
    %v5766 = vadd.f32 %v5753, %v5765
    %v5767 = vpop.f32.mrf.mxu0
    %5768 = vdwg.mxu0
    %5769 = vmatpush.bf16.msra.mxu0 %v4948
    %5770 = vmatpush.bf16.msra.mxu0 %v4941
    %5771 = vmatpush.bf16.msra.mxu0 %v4934
    %5772 = vmatpush.bf16.msra.mxu0 %v4927
    %5773 = vmatpush.bf16.msra.mxu0 %v4920
    %5774 = vmatpush.bf16.msra.mxu0 %v4913
    %5775 = vmatpush.bf16.msra.mxu0 %v4906
    %5776 = vmatpush.bf16.msra.mxu0 %v4899
    %5777 = vmatmul.bf16.gmra.mxu0 %v2789
    %v5778 = vpop.f32.mrf.mxu0
    %v5779 = vadd.f32 %v5766, %v5778
    %v5780 = vpop.f32.mrf.mxu0
    %5781 = vdwg.mxu0
    %5782 = vmatpush.bf16.msra.mxu0 %v5004
    %5783 = vmatpush.bf16.msra.mxu0 %v4997
    %5784 = vmatpush.bf16.msra.mxu0 %v4990
    %5785 = vmatpush.bf16.msra.mxu0 %v4983
    %5786 = vmatpush.bf16.msra.mxu0 %v4976
    %5787 = vmatpush.bf16.msra.mxu0 %v4969
    %5788 = vmatpush.bf16.msra.mxu0 %v4962
    %5789 = vmatpush.bf16.msra.mxu0 %v4955
    %5790 = vmatmul.bf16.gmra.mxu0 %v2790
    %v5791 = vpop.f32.mrf.mxu0
    %v5792 = vadd.f32 %v5779, %v5791
    %v5793 = vpop.f32.mrf.mxu0
    %5794 = vdwg.mxu0
    %5795 = vmatpush.bf16.msra.mxu0 %v5060
    %5796 = vmatpush.bf16.msra.mxu0 %v5053
    %5797 = vmatpush.bf16.msra.mxu0 %v5046
    %5798 = vmatpush.bf16.msra.mxu0 %v5039
    %5799 = vmatpush.bf16.msra.mxu0 %v5032
    %5800 = vmatpush.bf16.msra.mxu0 %v5025
    %5801 = vmatpush.bf16.msra.mxu0 %v5018
    %5802 = vmatpush.bf16.msra.mxu0 %v5011
    %5803 = vmatmul.bf16.gmra.mxu0 %v2791
    %v5804 = vpop.f32.mrf.mxu0
    %v5805 = vadd.f32 %v5792, %v5804
    %v5806 = vpop.f32.mrf.mxu0
    %5807 = vdwg.mxu0
    %5808 = vmatpush.bf16.msra.mxu0 %v5116
    %5809 = vmatpush.bf16.msra.mxu0 %v5109
    %5810 = vmatpush.bf16.msra.mxu0 %v5102
    %5811 = vmatpush.bf16.msra.mxu0 %v5095
    %5812 = vmatpush.bf16.msra.mxu0 %v5088
    %5813 = vmatpush.bf16.msra.mxu0 %v5081
    %5814 = vmatpush.bf16.msra.mxu0 %v5074
    %5815 = vmatpush.bf16.msra.mxu0 %v5067
    %5816 = vmatmul.bf16.gmra.mxu0 %v2792
    %v5817 = vpop.f32.mrf.mxu0
    %v5818 = vadd.f32 %v5805, %v5817
    %v5819 = vpop.f32.mrf.mxu0
    %5820 = vdwg.mxu0
    %5821 = vmatpush.bf16.msra.mxu0 %v5172
    %5822 = vmatpush.bf16.msra.mxu0 %v5165
    %5823 = vmatpush.bf16.msra.mxu0 %v5158
    %5824 = vmatpush.bf16.msra.mxu0 %v5151
    %5825 = vmatpush.bf16.msra.mxu0 %v5144
    %5826 = vmatpush.bf16.msra.mxu0 %v5137
    %5827 = vmatpush.bf16.msra.mxu0 %v5130
    %5828 = vmatpush.bf16.msra.mxu0 %v5123
    %5829 = vmatmul.bf16.gmra.mxu0 %v2793
    %v5830 = vpop.f32.mrf.mxu0
    %v5831 = vadd.f32 %v5818, %v5830
    %v5832 = vpop.f32.mrf.mxu0
    %5833 = vdwg.mxu0
    %5834 = vmatpush.bf16.msra.mxu0 %v4781
    %5835 = vmatpush.bf16.msra.mxu0 %v4774
    %5836 = vmatpush.bf16.msra.mxu0 %v4767
    %5837 = vmatpush.bf16.msra.mxu0 %v4760
    %5838 = vmatpush.bf16.msra.mxu0 %v4753
    %5839 = vmatpush.bf16.msra.mxu0 %v4746
    %5840 = vmatpush.bf16.msra.mxu0 %v4739
    %5841 = vmatpush.bf16.msra.mxu0 %v4732
    %5842 = vmatmul.bf16.gmra.mxu0 %v2786
    %v5843 = vpop.f32.mrf.mxu0
    %v5844 = vadd.f32 %v3310, %v5843
    %v5845 = vpop.f32.mrf.mxu0
    %5846 = vdwg.mxu0
    %5847 = vmatpush.bf16.msra.mxu0 %v4837
    %5848 = vmatpush.bf16.msra.mxu0 %v4830
    %5849 = vmatpush.bf16.msra.mxu0 %v4823
    %5850 = vmatpush.bf16.msra.mxu0 %v4816
    %5851 = vmatpush.bf16.msra.mxu0 %v4809
    %5852 = vmatpush.bf16.msra.mxu0 %v4802
    %5853 = vmatpush.bf16.msra.mxu0 %v4795
    %5854 = vmatpush.bf16.msra.mxu0 %v4788
    %5855 = vmatmul.bf16.gmra.mxu0 %v2787
    %v5856 = vpop.f32.mrf.mxu0
    %v5857 = vadd.f32 %v5844, %v5856
    %v5858 = vpop.f32.mrf.mxu0
    %5859 = vdwg.mxu0
    %5860 = vmatpush.bf16.msra.mxu0 %v4893
    %5861 = vmatpush.bf16.msra.mxu0 %v4886
    %5862 = vmatpush.bf16.msra.mxu0 %v4879
    %5863 = vmatpush.bf16.msra.mxu0 %v4872
    %5864 = vmatpush.bf16.msra.mxu0 %v4865
    %5865 = vmatpush.bf16.msra.mxu0 %v4858
    %5866 = vmatpush.bf16.msra.mxu0 %v4851
    %5867 = vmatpush.bf16.msra.mxu0 %v4844
    %5868 = vmatmul.bf16.gmra.mxu0 %v2788
    %v5869 = vpop.f32.mrf.mxu0
    %v5870 = vadd.f32 %v5857, %v5869
    %v5871 = vpop.f32.mrf.mxu0
    %5872 = vdwg.mxu0
    %5873 = vmatpush.bf16.msra.mxu0 %v4949
    %5874 = vmatpush.bf16.msra.mxu0 %v4942
    %5875 = vmatpush.bf16.msra.mxu0 %v4935
    %5876 = vmatpush.bf16.msra.mxu0 %v4928
    %5877 = vmatpush.bf16.msra.mxu0 %v4921
    %5878 = vmatpush.bf16.msra.mxu0 %v4914
    %5879 = vmatpush.bf16.msra.mxu0 %v4907
    %5880 = vmatpush.bf16.msra.mxu0 %v4900
    %5881 = vmatmul.bf16.gmra.mxu0 %v2789
    %v5882 = vpop.f32.mrf.mxu0
    %v5883 = vadd.f32 %v5870, %v5882
    %v5884 = vpop.f32.mrf.mxu0
    %5885 = vdwg.mxu0
    %5886 = vmatpush.bf16.msra.mxu0 %v5005
    %5887 = vmatpush.bf16.msra.mxu0 %v4998
    %5888 = vmatpush.bf16.msra.mxu0 %v4991
    %5889 = vmatpush.bf16.msra.mxu0 %v4984
    %5890 = vmatpush.bf16.msra.mxu0 %v4977
    %5891 = vmatpush.bf16.msra.mxu0 %v4970
    %5892 = vmatpush.bf16.msra.mxu0 %v4963
    %5893 = vmatpush.bf16.msra.mxu0 %v4956
    %5894 = vmatmul.bf16.gmra.mxu0 %v2790
    %v5895 = vpop.f32.mrf.mxu0
    %v5896 = vadd.f32 %v5883, %v5895
    %v5897 = vpop.f32.mrf.mxu0
    %5898 = vdwg.mxu0
    %5899 = vmatpush.bf16.msra.mxu0 %v5061
    %5900 = vmatpush.bf16.msra.mxu0 %v5054
    %5901 = vmatpush.bf16.msra.mxu0 %v5047
    %5902 = vmatpush.bf16.msra.mxu0 %v5040
    %5903 = vmatpush.bf16.msra.mxu0 %v5033
    %5904 = vmatpush.bf16.msra.mxu0 %v5026
    %5905 = vmatpush.bf16.msra.mxu0 %v5019
    %5906 = vmatpush.bf16.msra.mxu0 %v5012
    %5907 = vmatmul.bf16.gmra.mxu0 %v2791
    %v5908 = vpop.f32.mrf.mxu0
    %v5909 = vadd.f32 %v5896, %v5908
    %v5910 = vpop.f32.mrf.mxu0
    %5911 = vdwg.mxu0
    %5912 = vmatpush.bf16.msra.mxu0 %v5117
    %5913 = vmatpush.bf16.msra.mxu0 %v5110
    %5914 = vmatpush.bf16.msra.mxu0 %v5103
    %5915 = vmatpush.bf16.msra.mxu0 %v5096
    %5916 = vmatpush.bf16.msra.mxu0 %v5089
    %5917 = vmatpush.bf16.msra.mxu0 %v5082
    %5918 = vmatpush.bf16.msra.mxu0 %v5075
    %5919 = vmatpush.bf16.msra.mxu0 %v5068
    %5920 = vmatmul.bf16.gmra.mxu0 %v2792
    %v5921 = vpop.f32.mrf.mxu0
    %v5922 = vadd.f32 %v5909, %v5921
    %v5923 = vpop.f32.mrf.mxu0
    %5924 = vdwg.mxu0
    %5925 = vmatpush.bf16.msra.mxu0 %v5173
    %5926 = vmatpush.bf16.msra.mxu0 %v5166
    %5927 = vmatpush.bf16.msra.mxu0 %v5159
    %5928 = vmatpush.bf16.msra.mxu0 %v5152
    %5929 = vmatpush.bf16.msra.mxu0 %v5145
    %5930 = vmatpush.bf16.msra.mxu0 %v5138
    %5931 = vmatpush.bf16.msra.mxu0 %v5131
    %5932 = vmatpush.bf16.msra.mxu0 %v5124
    %5933 = vmatmul.bf16.gmra.mxu0 %v2793
    %v5934 = vpop.f32.mrf.mxu0
    %v5935 = vadd.f32 %v5922, %v5934
    %v5936 = vpop.f32.mrf.mxu0
    %5937 = vdwg.mxu0
    %5938 = vmatpush.bf16.msra.mxu0 %v4782
    %5939 = vmatpush.bf16.msra.mxu0 %v4775
    %5940 = vmatpush.bf16.msra.mxu0 %v4768
    %5941 = vmatpush.bf16.msra.mxu0 %v4761
    %5942 = vmatpush.bf16.msra.mxu0 %v4754
    %5943 = vmatpush.bf16.msra.mxu0 %v4747
    %5944 = vmatpush.bf16.msra.mxu0 %v4740
    %5945 = vmatpush.bf16.msra.mxu0 %v4733
    %5946 = vmatmul.bf16.gmra.mxu0 %v2786
    %v5947 = vpop.f32.mrf.mxu0
    %v5948 = vadd.f32 %v3311, %v5947
    %v5949 = vpop.f32.mrf.mxu0
    %5950 = vdwg.mxu0
    %5951 = vmatpush.bf16.msra.mxu0 %v4838
    %5952 = vmatpush.bf16.msra.mxu0 %v4831
    %5953 = vmatpush.bf16.msra.mxu0 %v4824
    %5954 = vmatpush.bf16.msra.mxu0 %v4817
    %5955 = vmatpush.bf16.msra.mxu0 %v4810
    %5956 = vmatpush.bf16.msra.mxu0 %v4803
    %5957 = vmatpush.bf16.msra.mxu0 %v4796
    %5958 = vmatpush.bf16.msra.mxu0 %v4789
    %5959 = vmatmul.bf16.gmra.mxu0 %v2787
    %v5960 = vpop.f32.mrf.mxu0
    %v5961 = vadd.f32 %v5948, %v5960
    %v5962 = vpop.f32.mrf.mxu0
    %5963 = vdwg.mxu0
    %5964 = vmatpush.bf16.msra.mxu0 %v4894
    %5965 = vmatpush.bf16.msra.mxu0 %v4887
    %5966 = vmatpush.bf16.msra.mxu0 %v4880
    %5967 = vmatpush.bf16.msra.mxu0 %v4873
    %5968 = vmatpush.bf16.msra.mxu0 %v4866
    %5969 = vmatpush.bf16.msra.mxu0 %v4859
    %5970 = vmatpush.bf16.msra.mxu0 %v4852
    %5971 = vmatpush.bf16.msra.mxu0 %v4845
    %5972 = vmatmul.bf16.gmra.mxu0 %v2788
    %v5973 = vpop.f32.mrf.mxu0
    %v5974 = vadd.f32 %v5961, %v5973
    %v5975 = vpop.f32.mrf.mxu0
    %5976 = vdwg.mxu0
    %5977 = vmatpush.bf16.msra.mxu0 %v4950
    %5978 = vmatpush.bf16.msra.mxu0 %v4943
    %5979 = vmatpush.bf16.msra.mxu0 %v4936
    %5980 = vmatpush.bf16.msra.mxu0 %v4929
    %5981 = vmatpush.bf16.msra.mxu0 %v4922
    %5982 = vmatpush.bf16.msra.mxu0 %v4915
    %5983 = vmatpush.bf16.msra.mxu0 %v4908
    %5984 = vmatpush.bf16.msra.mxu0 %v4901
    %5985 = vmatmul.bf16.gmra.mxu0 %v2789
    %v5986 = vpop.f32.mrf.mxu0
    %v5987 = vadd.f32 %v5974, %v5986
    %v5988 = vpop.f32.mrf.mxu0
    %5989 = vdwg.mxu0
    %5990 = vmatpush.bf16.msra.mxu0 %v5006
    %5991 = vmatpush.bf16.msra.mxu0 %v4999
    %5992 = vmatpush.bf16.msra.mxu0 %v4992
    %5993 = vmatpush.bf16.msra.mxu0 %v4985
    %5994 = vmatpush.bf16.msra.mxu0 %v4978
    %5995 = vmatpush.bf16.msra.mxu0 %v4971
    %5996 = vmatpush.bf16.msra.mxu0 %v4964
    %5997 = vmatpush.bf16.msra.mxu0 %v4957
    %5998 = vmatmul.bf16.gmra.mxu0 %v2790
    %v5999 = vpop.f32.mrf.mxu0
    %v6000 = vadd.f32 %v5987, %v5999
    %v6001 = vpop.f32.mrf.mxu0
    %6002 = vdwg.mxu0
    %6003 = vmatpush.bf16.msra.mxu0 %v5062
    %6004 = vmatpush.bf16.msra.mxu0 %v5055
    %6005 = vmatpush.bf16.msra.mxu0 %v5048
    %6006 = vmatpush.bf16.msra.mxu0 %v5041
    %6007 = vmatpush.bf16.msra.mxu0 %v5034
    %6008 = vmatpush.bf16.msra.mxu0 %v5027
    %6009 = vmatpush.bf16.msra.mxu0 %v5020
    %6010 = vmatpush.bf16.msra.mxu0 %v5013
    %6011 = vmatmul.bf16.gmra.mxu0 %v2791
    %v6012 = vpop.f32.mrf.mxu0
    %v6013 = vadd.f32 %v6000, %v6012
    %v6014 = vpop.f32.mrf.mxu0
    %6015 = vdwg.mxu0
    %6016 = vmatpush.bf16.msra.mxu0 %v5118
    %6017 = vmatpush.bf16.msra.mxu0 %v5111
    %6018 = vmatpush.bf16.msra.mxu0 %v5104
    %6019 = vmatpush.bf16.msra.mxu0 %v5097
    %6020 = vmatpush.bf16.msra.mxu0 %v5090
    %6021 = vmatpush.bf16.msra.mxu0 %v5083
    %6022 = vmatpush.bf16.msra.mxu0 %v5076
    %6023 = vmatpush.bf16.msra.mxu0 %v5069
    %6024 = vmatmul.bf16.gmra.mxu0 %v2792
    %v6025 = vpop.f32.mrf.mxu0
    %v6026 = vadd.f32 %v6013, %v6025
    %v6027 = vpop.f32.mrf.mxu0
    %6028 = vdwg.mxu0
    %6029 = vmatpush.bf16.msra.mxu0 %v5174
    %6030 = vmatpush.bf16.msra.mxu0 %v5167
    %6031 = vmatpush.bf16.msra.mxu0 %v5160
    %6032 = vmatpush.bf16.msra.mxu0 %v5153
    %6033 = vmatpush.bf16.msra.mxu0 %v5146
    %6034 = vmatpush.bf16.msra.mxu0 %v5139
    %6035 = vmatpush.bf16.msra.mxu0 %v5132
    %6036 = vmatpush.bf16.msra.mxu0 %v5125
    %6037 = vmatmul.bf16.gmra.mxu0 %v2793
    %v6038 = vpop.f32.mrf.mxu0
    %v6039 = vadd.f32 %v6026, %v6038
    %v6040 = vpop.f32.mrf.mxu0
    %6041 = vdwg.mxu0
    %6042 = vmatpush.bf16.msra.mxu0 %v4783
    %6043 = vmatpush.bf16.msra.mxu0 %v4776
    %6044 = vmatpush.bf16.msra.mxu0 %v4769
    %6045 = vmatpush.bf16.msra.mxu0 %v4762
    %6046 = vmatpush.bf16.msra.mxu0 %v4755
    %6047 = vmatpush.bf16.msra.mxu0 %v4748
    %6048 = vmatpush.bf16.msra.mxu0 %v4741
    %6049 = vmatpush.bf16.msra.mxu0 %v4734
    %6050 = vmatmul.bf16.gmra.mxu0 %v2786
    %v6051 = vpop.f32.mrf.mxu0
    %v6052 = vadd.f32 %v3312, %v6051
    %v6053 = vpop.f32.mrf.mxu0
    %6054 = vdwg.mxu0
    %6055 = vmatpush.bf16.msra.mxu0 %v4839
    %6056 = vmatpush.bf16.msra.mxu0 %v4832
    %6057 = vmatpush.bf16.msra.mxu0 %v4825
    %6058 = vmatpush.bf16.msra.mxu0 %v4818
    %6059 = vmatpush.bf16.msra.mxu0 %v4811
    %6060 = vmatpush.bf16.msra.mxu0 %v4804
    %6061 = vmatpush.bf16.msra.mxu0 %v4797
    %6062 = vmatpush.bf16.msra.mxu0 %v4790
    %6063 = vmatmul.bf16.gmra.mxu0 %v2787
    %v6064 = vpop.f32.mrf.mxu0
    %v6065 = vadd.f32 %v6052, %v6064
    %v6066 = vpop.f32.mrf.mxu0
    %6067 = vdwg.mxu0
    %6068 = vmatpush.bf16.msra.mxu0 %v4895
    %6069 = vmatpush.bf16.msra.mxu0 %v4888
    %6070 = vmatpush.bf16.msra.mxu0 %v4881
    %6071 = vmatpush.bf16.msra.mxu0 %v4874
    %6072 = vmatpush.bf16.msra.mxu0 %v4867
    %6073 = vmatpush.bf16.msra.mxu0 %v4860
    %6074 = vmatpush.bf16.msra.mxu0 %v4853
    %6075 = vmatpush.bf16.msra.mxu0 %v4846
    %6076 = vmatmul.bf16.gmra.mxu0 %v2788
    %v6077 = vpop.f32.mrf.mxu0
    %v6078 = vadd.f32 %v6065, %v6077
    %v6079 = vpop.f32.mrf.mxu0
    %6080 = vdwg.mxu0
    %6081 = vmatpush.bf16.msra.mxu0 %v4951
    %6082 = vmatpush.bf16.msra.mxu0 %v4944
    %6083 = vmatpush.bf16.msra.mxu0 %v4937
    %6084 = vmatpush.bf16.msra.mxu0 %v4930
    %6085 = vmatpush.bf16.msra.mxu0 %v4923
    %6086 = vmatpush.bf16.msra.mxu0 %v4916
    %6087 = vmatpush.bf16.msra.mxu0 %v4909
    %6088 = vmatpush.bf16.msra.mxu0 %v4902
    %6089 = vmatmul.bf16.gmra.mxu0 %v2789
    %v6090 = vpop.f32.mrf.mxu0
    %v6091 = vadd.f32 %v6078, %v6090
    %v6092 = vpop.f32.mrf.mxu0
    %6093 = vdwg.mxu0
    %6094 = vmatpush.bf16.msra.mxu0 %v5007
    %6095 = vmatpush.bf16.msra.mxu0 %v5000
    %6096 = vmatpush.bf16.msra.mxu0 %v4993
    %6097 = vmatpush.bf16.msra.mxu0 %v4986
    %6098 = vmatpush.bf16.msra.mxu0 %v4979
    %6099 = vmatpush.bf16.msra.mxu0 %v4972
    %6100 = vmatpush.bf16.msra.mxu0 %v4965
    %6101 = vmatpush.bf16.msra.mxu0 %v4958
    %6102 = vmatmul.bf16.gmra.mxu0 %v2790
    %v6103 = vpop.f32.mrf.mxu0
    %v6104 = vadd.f32 %v6091, %v6103
    %v6105 = vpop.f32.mrf.mxu0
    %6106 = vdwg.mxu0
    %6107 = vmatpush.bf16.msra.mxu0 %v5063
    %6108 = vmatpush.bf16.msra.mxu0 %v5056
    %6109 = vmatpush.bf16.msra.mxu0 %v5049
    %6110 = vmatpush.bf16.msra.mxu0 %v5042
    %6111 = vmatpush.bf16.msra.mxu0 %v5035
    %6112 = vmatpush.bf16.msra.mxu0 %v5028
    %6113 = vmatpush.bf16.msra.mxu0 %v5021
    %6114 = vmatpush.bf16.msra.mxu0 %v5014
    %6115 = vmatmul.bf16.gmra.mxu0 %v2791
    %v6116 = vpop.f32.mrf.mxu0
    %v6117 = vadd.f32 %v6104, %v6116
    %v6118 = vpop.f32.mrf.mxu0
    %6119 = vdwg.mxu0
    %6120 = vmatpush.bf16.msra.mxu0 %v5119
    %6121 = vmatpush.bf16.msra.mxu0 %v5112
    %6122 = vmatpush.bf16.msra.mxu0 %v5105
    %6123 = vmatpush.bf16.msra.mxu0 %v5098
    %6124 = vmatpush.bf16.msra.mxu0 %v5091
    %6125 = vmatpush.bf16.msra.mxu0 %v5084
    %6126 = vmatpush.bf16.msra.mxu0 %v5077
    %6127 = vmatpush.bf16.msra.mxu0 %v5070
    %6128 = vmatmul.bf16.gmra.mxu0 %v2792
    %v6129 = vpop.f32.mrf.mxu0
    %v6130 = vadd.f32 %v6117, %v6129
    %v6131 = vpop.f32.mrf.mxu0
    %6132 = vdwg.mxu0
    %6133 = vmatpush.bf16.msra.mxu0 %v5175
    %6134 = vmatpush.bf16.msra.mxu0 %v5168
    %6135 = vmatpush.bf16.msra.mxu0 %v5161
    %6136 = vmatpush.bf16.msra.mxu0 %v5154
    %6137 = vmatpush.bf16.msra.mxu0 %v5147
    %6138 = vmatpush.bf16.msra.mxu0 %v5140
    %6139 = vmatpush.bf16.msra.mxu0 %v5133
    %6140 = vmatpush.bf16.msra.mxu0 %v5126
    %6141 = vmatmul.bf16.gmra.mxu0 %v2793
    %v6142 = vpop.f32.mrf.mxu0
    %v6143 = vadd.f32 %v6130, %v6142
    %v6144 = vpop.f32.mrf.mxu0
    %6145 = vdwg.mxu0
    %6146 = vmatpush.bf16.msra.mxu0 %v4784
    %6147 = vmatpush.bf16.msra.mxu0 %v4777
    %6148 = vmatpush.bf16.msra.mxu0 %v4770
    %6149 = vmatpush.bf16.msra.mxu0 %v4763
    %6150 = vmatpush.bf16.msra.mxu0 %v4756
    %6151 = vmatpush.bf16.msra.mxu0 %v4749
    %6152 = vmatpush.bf16.msra.mxu0 %v4742
    %6153 = vmatpush.bf16.msra.mxu0 %v4735
    %6154 = vmatmul.bf16.gmra.mxu0 %v2786
    %v6155 = vpop.f32.mrf.mxu0
    %v6156 = vadd.f32 %v3313, %v6155
    %v6157 = vpop.f32.mrf.mxu0
    %6158 = vdwg.mxu0
    %6159 = vmatpush.bf16.msra.mxu0 %v4840
    %6160 = vmatpush.bf16.msra.mxu0 %v4833
    %6161 = vmatpush.bf16.msra.mxu0 %v4826
    %6162 = vmatpush.bf16.msra.mxu0 %v4819
    %6163 = vmatpush.bf16.msra.mxu0 %v4812
    %6164 = vmatpush.bf16.msra.mxu0 %v4805
    %6165 = vmatpush.bf16.msra.mxu0 %v4798
    %6166 = vmatpush.bf16.msra.mxu0 %v4791
    %6167 = vmatmul.bf16.gmra.mxu0 %v2787
    %v6168 = vpop.f32.mrf.mxu0
    %v6169 = vadd.f32 %v6156, %v6168
    %v6170 = vpop.f32.mrf.mxu0
    %6171 = vdwg.mxu0
    %6172 = vmatpush.bf16.msra.mxu0 %v4896
    %6173 = vmatpush.bf16.msra.mxu0 %v4889
    %6174 = vmatpush.bf16.msra.mxu0 %v4882
    %6175 = vmatpush.bf16.msra.mxu0 %v4875
    %6176 = vmatpush.bf16.msra.mxu0 %v4868
    %6177 = vmatpush.bf16.msra.mxu0 %v4861
    %6178 = vmatpush.bf16.msra.mxu0 %v4854
    %6179 = vmatpush.bf16.msra.mxu0 %v4847
    %6180 = vmatmul.bf16.gmra.mxu0 %v2788
    %v6181 = vpop.f32.mrf.mxu0
    %v6182 = vadd.f32 %v6169, %v6181
    %v6183 = vpop.f32.mrf.mxu0
    %6184 = vdwg.mxu0
    %6185 = vmatpush.bf16.msra.mxu0 %v4952
    %6186 = vmatpush.bf16.msra.mxu0 %v4945
    %6187 = vmatpush.bf16.msra.mxu0 %v4938
    %6188 = vmatpush.bf16.msra.mxu0 %v4931
    %6189 = vmatpush.bf16.msra.mxu0 %v4924
    %6190 = vmatpush.bf16.msra.mxu0 %v4917
    %6191 = vmatpush.bf16.msra.mxu0 %v4910
    %6192 = vmatpush.bf16.msra.mxu0 %v4903
    %6193 = vmatmul.bf16.gmra.mxu0 %v2789
    %v6194 = vpop.f32.mrf.mxu0
    %v6195 = vadd.f32 %v6182, %v6194
    %v6196 = vpop.f32.mrf.mxu0
    %6197 = vdwg.mxu0
    %6198 = vmatpush.bf16.msra.mxu0 %v5008
    %6199 = vmatpush.bf16.msra.mxu0 %v5001
    %6200 = vmatpush.bf16.msra.mxu0 %v4994
    %6201 = vmatpush.bf16.msra.mxu0 %v4987
    %6202 = vmatpush.bf16.msra.mxu0 %v4980
    %6203 = vmatpush.bf16.msra.mxu0 %v4973
    %6204 = vmatpush.bf16.msra.mxu0 %v4966
    %6205 = vmatpush.bf16.msra.mxu0 %v4959
    %6206 = vmatmul.bf16.gmra.mxu0 %v2790
    %v6207 = vpop.f32.mrf.mxu0
    %v6208 = vadd.f32 %v6195, %v6207
    %v6209 = vpop.f32.mrf.mxu0
    %6210 = vdwg.mxu0
    %6211 = vmatpush.bf16.msra.mxu0 %v5064
    %6212 = vmatpush.bf16.msra.mxu0 %v5057
    %6213 = vmatpush.bf16.msra.mxu0 %v5050
    %6214 = vmatpush.bf16.msra.mxu0 %v5043
    %6215 = vmatpush.bf16.msra.mxu0 %v5036
    %6216 = vmatpush.bf16.msra.mxu0 %v5029
    %6217 = vmatpush.bf16.msra.mxu0 %v5022
    %6218 = vmatpush.bf16.msra.mxu0 %v5015
    %6219 = vmatmul.bf16.gmra.mxu0 %v2791
    %v6220 = vpop.f32.mrf.mxu0
    %v6221 = vadd.f32 %v6208, %v6220
    %v6222 = vpop.f32.mrf.mxu0
    %6223 = vdwg.mxu0
    %6224 = vmatpush.bf16.msra.mxu0 %v5120
    %6225 = vmatpush.bf16.msra.mxu0 %v5113
    %6226 = vmatpush.bf16.msra.mxu0 %v5106
    %6227 = vmatpush.bf16.msra.mxu0 %v5099
    %6228 = vmatpush.bf16.msra.mxu0 %v5092
    %6229 = vmatpush.bf16.msra.mxu0 %v5085
    %6230 = vmatpush.bf16.msra.mxu0 %v5078
    %6231 = vmatpush.bf16.msra.mxu0 %v5071
    %6232 = vmatmul.bf16.gmra.mxu0 %v2792
    %v6233 = vpop.f32.mrf.mxu0
    %v6234 = vadd.f32 %v6221, %v6233
    %v6235 = vpop.f32.mrf.mxu0
    %6236 = vdwg.mxu0
    %6237 = vmatpush.bf16.msra.mxu0 %v5176
    %6238 = vmatpush.bf16.msra.mxu0 %v5169
    %6239 = vmatpush.bf16.msra.mxu0 %v5162
    %6240 = vmatpush.bf16.msra.mxu0 %v5155
    %6241 = vmatpush.bf16.msra.mxu0 %v5148
    %6242 = vmatpush.bf16.msra.mxu0 %v5141
    %6243 = vmatpush.bf16.msra.mxu0 %v5134
    %6244 = vmatpush.bf16.msra.mxu0 %v5127
    %6245 = vmatmul.bf16.gmra.mxu0 %v2793
    %v6246 = vpop.f32.mrf.mxu0
    %v6247 = vadd.f32 %v6234, %v6246
    %v6248 = vpop.f32.mrf.mxu0
    %6249 = vdwg.mxu0
    %6250 = vmatpush.bf16.msra.mxu0 %v4785
    %6251 = vmatpush.bf16.msra.mxu0 %v4778
    %6252 = vmatpush.bf16.msra.mxu0 %v4771
    %6253 = vmatpush.bf16.msra.mxu0 %v4764
    %6254 = vmatpush.bf16.msra.mxu0 %v4757
    %6255 = vmatpush.bf16.msra.mxu0 %v4750
    %6256 = vmatpush.bf16.msra.mxu0 %v4743
    %6257 = vmatpush.bf16.msra.mxu0 %v4736
    %6258 = vmatmul.bf16.gmra.mxu0 %v2786
    %v6259 = vpop.f32.mrf.mxu0
    %v6260 = vadd.f32 %v3314, %v6259
    %v6261 = vpop.f32.mrf.mxu0
    %6262 = vdwg.mxu0
    %6263 = vmatpush.bf16.msra.mxu0 %v4841
    %6264 = vmatpush.bf16.msra.mxu0 %v4834
    %6265 = vmatpush.bf16.msra.mxu0 %v4827
    %6266 = vmatpush.bf16.msra.mxu0 %v4820
    %6267 = vmatpush.bf16.msra.mxu0 %v4813
    %6268 = vmatpush.bf16.msra.mxu0 %v4806
    %6269 = vmatpush.bf16.msra.mxu0 %v4799
    %6270 = vmatpush.bf16.msra.mxu0 %v4792
    %6271 = vmatmul.bf16.gmra.mxu0 %v2787
    %v6272 = vpop.f32.mrf.mxu0
    %v6273 = vadd.f32 %v6260, %v6272
    %v6274 = vpop.f32.mrf.mxu0
    %6275 = vdwg.mxu0
    %6276 = vmatpush.bf16.msra.mxu0 %v4897
    %6277 = vmatpush.bf16.msra.mxu0 %v4890
    %6278 = vmatpush.bf16.msra.mxu0 %v4883
    %6279 = vmatpush.bf16.msra.mxu0 %v4876
    %6280 = vmatpush.bf16.msra.mxu0 %v4869
    %6281 = vmatpush.bf16.msra.mxu0 %v4862
    %6282 = vmatpush.bf16.msra.mxu0 %v4855
    %6283 = vmatpush.bf16.msra.mxu0 %v4848
    %6284 = vmatmul.bf16.gmra.mxu0 %v2788
    %v6285 = vpop.f32.mrf.mxu0
    %v6286 = vadd.f32 %v6273, %v6285
    %v6287 = vpop.f32.mrf.mxu0
    %6288 = vdwg.mxu0
    %6289 = vmatpush.bf16.msra.mxu0 %v4953
    %6290 = vmatpush.bf16.msra.mxu0 %v4946
    %6291 = vmatpush.bf16.msra.mxu0 %v4939
    %6292 = vmatpush.bf16.msra.mxu0 %v4932
    %6293 = vmatpush.bf16.msra.mxu0 %v4925
    %6294 = vmatpush.bf16.msra.mxu0 %v4918
    %6295 = vmatpush.bf16.msra.mxu0 %v4911
    %6296 = vmatpush.bf16.msra.mxu0 %v4904
    %6297 = vmatmul.bf16.gmra.mxu0 %v2789
    %v6298 = vpop.f32.mrf.mxu0
    %v6299 = vadd.f32 %v6286, %v6298
    %v6300 = vpop.f32.mrf.mxu0
    %6301 = vdwg.mxu0
    %6302 = vmatpush.bf16.msra.mxu0 %v5009
    %6303 = vmatpush.bf16.msra.mxu0 %v5002
    %6304 = vmatpush.bf16.msra.mxu0 %v4995
    %6305 = vmatpush.bf16.msra.mxu0 %v4988
    %6306 = vmatpush.bf16.msra.mxu0 %v4981
    %6307 = vmatpush.bf16.msra.mxu0 %v4974
    %6308 = vmatpush.bf16.msra.mxu0 %v4967
    %6309 = vmatpush.bf16.msra.mxu0 %v4960
    %6310 = vmatmul.bf16.gmra.mxu0 %v2790
    %v6311 = vpop.f32.mrf.mxu0
    %v6312 = vadd.f32 %v6299, %v6311
    %v6313 = vpop.f32.mrf.mxu0
    %6314 = vdwg.mxu0
    %6315 = vmatpush.bf16.msra.mxu0 %v5065
    %6316 = vmatpush.bf16.msra.mxu0 %v5058
    %6317 = vmatpush.bf16.msra.mxu0 %v5051
    %6318 = vmatpush.bf16.msra.mxu0 %v5044
    %6319 = vmatpush.bf16.msra.mxu0 %v5037
    %6320 = vmatpush.bf16.msra.mxu0 %v5030
    %6321 = vmatpush.bf16.msra.mxu0 %v5023
    %6322 = vmatpush.bf16.msra.mxu0 %v5016
    %6323 = vmatmul.bf16.gmra.mxu0 %v2791
    %v6324 = vpop.f32.mrf.mxu0
    %v6325 = vadd.f32 %v6312, %v6324
    %v6326 = vpop.f32.mrf.mxu0
    %6327 = vdwg.mxu0
    %6328 = vmatpush.bf16.msra.mxu0 %v5121
    %6329 = vmatpush.bf16.msra.mxu0 %v5114
    %6330 = vmatpush.bf16.msra.mxu0 %v5107
    %6331 = vmatpush.bf16.msra.mxu0 %v5100
    %6332 = vmatpush.bf16.msra.mxu0 %v5093
    %6333 = vmatpush.bf16.msra.mxu0 %v5086
    %6334 = vmatpush.bf16.msra.mxu0 %v5079
    %6335 = vmatpush.bf16.msra.mxu0 %v5072
    %6336 = vmatmul.bf16.gmra.mxu0 %v2792
    %v6337 = vpop.f32.mrf.mxu0
    %v6338 = vadd.f32 %v6325, %v6337
    %v6339 = vpop.f32.mrf.mxu0
    %6340 = vdwg.mxu0
    %6341 = vmatpush.bf16.msra.mxu0 %v5177
    %6342 = vmatpush.bf16.msra.mxu0 %v5170
    %6343 = vmatpush.bf16.msra.mxu0 %v5163
    %6344 = vmatpush.bf16.msra.mxu0 %v5156
    %6345 = vmatpush.bf16.msra.mxu0 %v5149
    %6346 = vmatpush.bf16.msra.mxu0 %v5142
    %6347 = vmatpush.bf16.msra.mxu0 %v5135
    %6348 = vmatpush.bf16.msra.mxu0 %v5128
    %6349 = vmatmul.bf16.gmra.mxu0 %v2793
    %v6350 = vpop.f32.mrf.mxu0
    %v6351 = vadd.f32 %v6338, %v6350
    %v6352 = vpop.f32.mrf.mxu0
    %6353 = vdwg.mxu0
    %v6354 = vtanh.pop %v5727
    %v6355 = vtanh.pop %v5831
    %v6356 = vtanh.pop %v5935
    %v6357 = vtanh.pop %v6039
    %v6358 = vtanh.pop %v6143
    %v6359 = vtanh.pop %v6247
    %v6360 = vtanh.pop %v6351
    %6361 = vst [vmem:[#allocation16] sm:$0xff] %v6354
    %6362 = vst [vmem:[#allocation16 + $0x8] sm:$0xff] %v6355
    %6363 = vst [vmem:[#allocation16 + $0x10] sm:$0xff] %v6356
    %6364 = vst [vmem:[#allocation16 + $0x18] sm:$0xff] %v6357
    %6365 = vst [vmem:[#allocation16 + $0x20] sm:$0xff] %v6358
    %6366 = vst [vmem:[#allocation16 + $0x28] sm:$0xff] %v6359
    %6367 = vst [vmem:[#allocation16 + $0x30] sm:$0xff] %v6360
    // Predicated region
    $region70: #{generator_forward.1} parent=1 // pred_check
      _
    $region71: #{generator_forward.1} parent=1 // pred_check_branch
      %6369 = sbr.rel (0) target = $region73
    $region72: #{generator_forward.1} parent=1 // pred_region
      %6371 = vsyncadd [#allocation4], 0
      %s6373 = sshll.u32 [#allocation16], 4
      %s6374 = int_to_ptr.vmem [resolvable:$true] %s6373
      %s6375 = sshll.u32 %s9, 4
      %s6376 = int_to_ptr.hbm [resolvable:$true] %s6375
      %6378 = dma.vmem_to_hbm [thread:$0]  %s6374, 896, %s6376, [#allocation4]
    $region73: #{generator_forward.1} parent=1 // pred_fallthru
      _
    // Predicated region
    $region74: #{generator_forward.1} parent=1 // pred_check
      _
    $region75: #{generator_forward.1} parent=1 // pred_check_branch
      %6380 = sbr.rel (0) target = $region77
    $region76: #{generator_forward.1} parent=1 // pred_region
      %6382 = dma.done [#allocation4], 896
    $region77: #{generator_forward.1} parent=1 // pred_fallthru
      _
    %6383 = vsyncpa [#allocation3], 1
    %6384 = vsyncpa [#allocation6], 1
    %6385 = vsyncpa [#allocation9], 1
    %6386 = vsyncpa [#allocation12], 1
    %6387 = vsyncpa [#allocation15], 1
    %6388 = vsyncpa [#allocation4], 1

</llo_original>
